<compile_context>
chip_gen: v5e
topology: v5e:2x2
jax: 0.10.0
libtpu: 0.0.40
codegen_flags: <defaults>
</compile_context>

<pallas_src>
import jax
import jax.numpy as jnp
import numpy as np
from jax.experimental import pallas as pl
from jax.experimental.pallas import tpu as pltpu

# ---- small synthetic CLIP text-transformer config -------------------------
B, L, D = 2, 8, 32          # batch, context length, transformer width
H = 4                       # attention heads
DH = D // H
MLP = 4 * D
E = 16                      # text_projection output dim
LAYERS = 2
LN_EPS = 1e-5


def _layer_norm(x, g, b):
    mu = jnp.mean(x, axis=-1, keepdims=True)
    var = jnp.mean((x - mu) ** 2, axis=-1, keepdims=True)
    return (x - mu) * jax.lax.rsqrt(var + LN_EPS) * g + b


# ---------------------------------------------------------------------------
# Single fused kernel: embed + LAYERS residual blocks + ln_final/gather/proj
# ---------------------------------------------------------------------------
def encoder_kernel(eot_ref,                       # SMEM scalar prefetch: (B,) int32
                   prompts_ref, pos_ref,
                   ln1_g_ref, ln1_b_ref, qkv_w_ref, qkv_b_ref,
                   proj_w_ref, proj_b_ref, ln2_g_ref, ln2_b_ref,
                   fc_w_ref, fc_b_ref, fc2_w_ref, fc2_b_ref,
                   lnf_g_ref, lnf_b_ref, tproj_ref,
                   o_ref,
                   x_scratch):
    f32 = jnp.float32

    # ---- prompts + positional embedding (folded in, no separate kernel) ----
    x3 = prompts_ref[...] + pos_ref[...][None, :, :]            # (B, L, D)
    x = x3.reshape(B * L, D)                                    # 2D working set

    # ---- causal mask built in-kernel (two iota compares) ----
    row = jax.lax.broadcasted_iota(jnp.int32, (1, L, L), 1)
    col = jax.lax.broadcasted_iota(jnp.int32, (1, L, L), 2)
    mask = jnp.where(col <= row, 0.0, -1e9).astype(f32)         # (1, L, L)

    scale = 1.0 / (DH ** 0.5)

    for l in range(LAYERS):                                     # static unroll
        # -------- multi-head self attention (causal) --------
        xn = _layer_norm(x, ln1_g_ref[l], ln1_b_ref[l])         # (B*L, D)
        qkv = jnp.dot(xn, qkv_w_ref[l],
                      preferred_element_type=f32) + qkv_b_ref[l]  # (B*L, 3D)
        q = qkv[:, 0 * D:1 * D].reshape(B, L, D)
        k = qkv[:, 1 * D:2 * D].reshape(B, L, D)
        v = qkv[:, 2 * D:3 * D].reshape(B, L, D)
        proj_w_l = proj_w_ref[l]                                # (D, D)

        attn = jnp.zeros((B * L, D), f32)
        for h in range(H):                                      # static unroll, no concat / no .T
            sl = slice(h * DH, (h + 1) * DH)
            s = jnp.einsum('bld,bmd->blm', q[..., sl], k[..., sl],
                           preferred_element_type=f32) * scale + mask
            s = s - jnp.max(s, axis=-1, keepdims=True)
            p = jnp.exp(s)
            p = p * pl.reciprocal(jnp.sum(p, axis=-1, keepdims=True), approx=True)
            oh = jnp.einsum('blm,bmd->bld', p, v[..., sl],
                            preferred_element_type=f32)         # (B, L, DH)
            # accumulate the output projection per head instead of lane-concat
            attn = attn + jnp.dot(oh.reshape(B * L, DH), proj_w_l[sl, :],
                                  preferred_element_type=f32)
        x = x + attn + proj_b_ref[l]

        # -------- MLP with QuickGELU (as in CLIP) --------
        xn2 = _layer_norm(x, ln2_g_ref[l], ln2_b_ref[l])
        hid = jnp.dot(xn2, fc_w_ref[l],
                      preferred_element_type=f32) + fc_b_ref[l]   # (B*L, MLP)
        hid = hid * jax.nn.sigmoid(1.702 * hid)
        x = x + jnp.dot(hid, fc2_w_ref[l],
                        preferred_element_type=f32) + fc2_b_ref[l]

    # ---- gather EOT rows FIRST, then ln_final + text_projection ----
    x_scratch[...] = x
    rows = [x_scratch[pl.ds(b * L + eot_ref[b], 1), :] for b in range(B)]  # (1, D) each
    rows = jnp.concatenate(rows, axis=0)                         # (B, D)
    rows = _layer_norm(rows, lnf_g_ref[...], lnf_b_ref[...])
    o_ref[...] = jnp.dot(rows, tproj_ref[...], preferred_element_type=f32)  # (B, E)


def text_encoder(prompts, tokenized_prompts, params):
    # argmax over token ids (EOT position) — scalar-per-batch glue in plain JAX,
    # fed to the kernel via scalar prefetch (SMEM).
    eot_idx = jnp.argmax(tokenized_prompts, axis=-1).astype(jnp.int32)

    def fs(shape):
        return pl.BlockSpec(shape, lambda i, eot: (0,) * len(shape))

    in_specs = [
        fs((B, L, D)),                                   # prompts
        fs((L, D)),                                      # positional embedding
        fs((LAYERS, 1, D)), fs((LAYERS, 1, D)),          # ln1 gamma/beta
        fs((LAYERS, D, 3 * D)), fs((LAYERS, 1, 3 * D)),  # qkv w/b
        fs((LAYERS, D, D)), fs((LAYERS, 1, D)),          # out proj w/b
        fs((LAYERS, 1, D)), fs((LAYERS, 1, D)),          # ln2 gamma/beta
        fs((LAYERS, D, MLP)), fs((LAYERS, 1, MLP)),      # mlp fc w/b
        fs((LAYERS, MLP, D)), fs((LAYERS, 1, D)),        # mlp proj w/b
        fs((1, D)), fs((1, D)),                          # ln_final gamma/beta
        fs((D, E)),                                      # text_projection
    ]
    gs = pltpu.PrefetchScalarGridSpec(
        num_scalar_prefetch=1,
        grid=(1,),
        in_specs=in_specs,
        out_specs=pl.BlockSpec((B, E), lambda i, eot: (0, 0)),
        scratch_shapes=[pltpu.VMEM((B * L, D), jnp.float32)],
    )
    return pl.pallas_call(
        encoder_kernel,
        out_shape=jax.ShapeDtypeStruct((B, E), jnp.float32),
        grid_spec=gs,
        compiler_params=pltpu.CompilerParams(dimension_semantics=("arbitrary",)),
    )(eot_idx, prompts, params["pos"],
      params["ln1_g"], params["ln1_b"], params["qkv_w"], params["qkv_b"],
      params["proj_w"], params["proj_b"], params["ln2_g"], params["ln2_b"],
      params["fc_w"], params["fc_b"], params["fc2_w"], params["fc2_b"],
      params["lnf_g"], params["lnf_b"], params["text_projection"])


# ---------------------------------------------------------------------------
# Parameter construction (deterministic, synthetic); per-layer params stacked
# ---------------------------------------------------------------------------
def make_params(key):
    keys = iter(jax.random.split(key, 64))

    def w(shape, scale=0.05):
        return scale * jax.random.normal(next(keys), shape, jnp.float32)

    return dict(
        pos=w((L, D)),
        ln1_g=jnp.ones((LAYERS, 1, D), jnp.float32),
        ln1_b=jnp.zeros((LAYERS, 1, D), jnp.float32),
        qkv_w=w((LAYERS, D, 3 * D)),
        qkv_b=jnp.zeros((LAYERS, 1, 3 * D), jnp.float32),
        proj_w=w((LAYERS, D, D)),
        proj_b=jnp.zeros((LAYERS, 1, D), jnp.float32),
        ln2_g=jnp.ones((LAYERS, 1, D), jnp.float32),
        ln2_b=jnp.zeros((LAYERS, 1, D), jnp.float32),
        fc_w=w((LAYERS, D, MLP)),
        fc_b=jnp.zeros((LAYERS, 1, MLP), jnp.float32),
        fc2_w=w((LAYERS, MLP, D)),
        fc2_b=jnp.zeros((LAYERS, 1, D), jnp.float32),
        lnf_g=jnp.ones((1, D), jnp.float32),
        lnf_b=jnp.zeros((1, D), jnp.float32),
        text_projection=w((D, E)),
    )


# ---------------------------------------------------------------------------
# Pure-JAX reference (mirrors the PyTorch forward) for a correctness check
# ---------------------------------------------------------------------------
def text_encoder_ref(prompts, tokenized_prompts, params):
    x = prompts + params["pos"][None]
    i = jnp.arange(L)[:, None]
    j = jnp.arange(L)[None, :]
    mask = jnp.where(j <= i, 0.0, -1e9).astype(jnp.float32)
    for l in range(LAYERS):
        xn = _layer_norm(x, params["ln1_g"][l], params["ln1_b"][l])
        qkv = xn @ params["qkv_w"][l] + params["qkv_b"][l]
        q, k, v = qkv[..., :D], qkv[..., D:2 * D], qkv[..., 2 * D:]
        q = q.reshape(B, L, H, DH).transpose(0, 2, 1, 3)
        k = k.reshape(B, L, H, DH).transpose(0, 2, 1, 3)
        v = v.reshape(B, L, H, DH).transpose(0, 2, 1, 3)
        s = jnp.einsum("bhld,bhmd->bhlm", q, k) / (DH ** 0.5) + mask
        p = jax.nn.softmax(s, axis=-1)
        a = jnp.einsum("bhlm,bhmd->bhld", p, v).transpose(0, 2, 1, 3).reshape(B, L, D)
        x = x + a @ params["proj_w"][l] + params["proj_b"][l]
        xn2 = _layer_norm(x, params["ln2_g"][l], params["ln2_b"][l])
        hid = xn2 @ params["fc_w"][l] + params["fc_b"][l]
        hid = hid * jax.nn.sigmoid(1.702 * hid)
        x = x + hid @ params["fc2_w"][l] + params["fc2_b"][l]
    x = _layer_norm(x, params["lnf_g"], params["lnf_b"])
    eot = jnp.argmax(tokenized_prompts, axis=-1)
    return x[jnp.arange(B), eot] @ params["text_projection"]


if __name__ == "__main__":
    key = jax.random.PRNGKey(0)
    k_p, k_w = jax.random.split(key)
    prompts = 0.1 * jax.random.normal(k_p, (B, L, D), jnp.float32)
    tokenized_prompts = jnp.array(
        [[1, 2, 3, 49407, 0, 0, 0, 0],
         [1, 2, 3, 4, 5, 49407, 0, 0]], dtype=jnp.int32)
    params = make_params(k_w)

    out = text_encoder(prompts, tokenized_prompts, params)
    out = jax.block_until_ready(out)

    ref = text_encoder_ref(prompts, tokenized_prompts, params)
    np.testing.assert_allclose(np.asarray(out), np.asarray(ref),
                               rtol=1e-2, atol=1e-2)
    assert out.shape == (B, E) and np.all(np.isfinite(np.asarray(out)))
    print("KERNEL_OK")
</pallas_src>

<mosaic_0001>
module attributes {stable_mosaic.version = 11 : i64} {
  func.func @encoder_kernel(%arg0: i32, %arg1: memref<2xi32, #tpu.memory_space<smem>>, %arg2: memref<2x8x32xf32, #tpu.memory_space<vmem>>, %arg3: memref<8x32xf32, #tpu.memory_space<vmem>>, %arg4: memref<2x1x32xf32, #tpu.memory_space<vmem>>, %arg5: memref<2x1x32xf32, #tpu.memory_space<vmem>>, %arg6: memref<2x32x96xf32, #tpu.memory_space<vmem>>, %arg7: memref<2x1x96xf32, #tpu.memory_space<vmem>>, %arg8: memref<2x32x32xf32, #tpu.memory_space<vmem>>, %arg9: memref<2x1x32xf32, #tpu.memory_space<vmem>>, %arg10: memref<2x1x32xf32, #tpu.memory_space<vmem>>, %arg11: memref<2x1x32xf32, #tpu.memory_space<vmem>>, %arg12: memref<2x32x128xf32, #tpu.memory_space<vmem>>, %arg13: memref<2x1x128xf32, #tpu.memory_space<vmem>>, %arg14: memref<2x128x32xf32, #tpu.memory_space<vmem>>, %arg15: memref<2x1x32xf32, #tpu.memory_space<vmem>>, %arg16: memref<1x32xf32, #tpu.memory_space<vmem>>, %arg17: memref<1x32xf32, #tpu.memory_space<vmem>>, %arg18: memref<32x16xf32, #tpu.memory_space<vmem>>, %arg19: memref<2x16xf32, #tpu.memory_space<vmem>>, %arg20: memref<16x32xf32, #tpu.memory_space<vmem>>) attributes {dimension_semantics = [#tpu.dimension_semantics<arbitrary>], iteration_bounds = array<i64: 1>, scalar_prefetch = 1 : i64, scratch_operands = 1 : i64, tpu.core_type = #tpu.core_type<tc>, window_params = [{pipeline_mode = #tpu.pipeline_mode<synchronous>, transform_indices = @transform_0, window_bounds = array<i64: 2, 8, 32>}, {pipeline_mode = #tpu.pipeline_mode<synchronous>, transform_indices = @transform_1, window_bounds = array<i64: 8, 32>}, {pipeline_mode = #tpu.pipeline_mode<synchronous>, transform_indices = @transform_2, window_bounds = array<i64: 2, 1, 32>}, {pipeline_mode = #tpu.pipeline_mode<synchronous>, transform_indices = @transform_3, window_bounds = array<i64: 2, 1, 32>}, {pipeline_mode = #tpu.pipeline_mode<synchronous>, transform_indices = @transform_4, window_bounds = array<i64: 2, 32, 96>}, {pipeline_mode = #tpu.pipeline_mode<synchronous>, transform_indices = @transform_5, window_bounds = array<i64: 2, 1, 96>}, {pipeline_mode = #tpu.pipeline_mode<synchronous>, transform_indices = @transform_6, window_bounds = array<i64: 2, 32, 32>}, {pipeline_mode = #tpu.pipeline_mode<synchronous>, transform_indices = @transform_7, window_bounds = array<i64: 2, 1, 32>}, {pipeline_mode = #tpu.pipeline_mode<synchronous>, transform_indices = @transform_8, window_bounds = array<i64: 2, 1, 32>}, {pipeline_mode = #tpu.pipeline_mode<synchronous>, transform_indices = @transform_9, window_bounds = array<i64: 2, 1, 32>}, {pipeline_mode = #tpu.pipeline_mode<synchronous>, transform_indices = @transform_10, window_bounds = array<i64: 2, 32, 128>}, {pipeline_mode = #tpu.pipeline_mode<synchronous>, transform_indices = @transform_11, window_bounds = array<i64: 2, 1, 128>}, {pipeline_mode = #tpu.pipeline_mode<synchronous>, transform_indices = @transform_12, window_bounds = array<i64: 2, 128, 32>}, {pipeline_mode = #tpu.pipeline_mode<synchronous>, transform_indices = @transform_13, window_bounds = array<i64: 2, 1, 32>}, {pipeline_mode = #tpu.pipeline_mode<synchronous>, transform_indices = @transform_14, window_bounds = array<i64: 1, 32>}, {pipeline_mode = #tpu.pipeline_mode<synchronous>, transform_indices = @transform_15, window_bounds = array<i64: 1, 32>}, {pipeline_mode = #tpu.pipeline_mode<synchronous>, transform_indices = @transform_16, window_bounds = array<i64: 32, 16>}, {pipeline_mode = #tpu.pipeline_mode<synchronous>, transform_indices = @transform_17, window_bounds = array<i64: 2, 16>}]} {
    %c0 = arith.constant 0 : index
    %c0_0 = arith.constant 0 : index
    %c0_1 = arith.constant 0 : index
    %0 = vector.load %arg2[%c0, %c0_0, %c0_1] : memref<2x8x32xf32, #tpu.memory_space<vmem>>, vector<2x8x32xf32>
    %c0_2 = arith.constant 0 : index
    %c0_3 = arith.constant 0 : index
    %1 = vector.load %arg3[%c0_2, %c0_3] : memref<8x32xf32, #tpu.memory_space<vmem>>, vector<8x32xf32>
    %2 = vector.shape_cast %1 : vector<8x32xf32> to vector<1x8x32xf32>
    %3 = vector.broadcast %2 : vector<1x8x32xf32> to vector<2x8x32xf32>
    %4 = arith.addf %0, %3 : vector<2x8x32xf32>
    %5 = vector.shape_cast %4 : vector<2x8x32xf32> to vector<16x32xf32>
    %6 = tpu.iota {dimensions = array<i32: 1>} : vector<1x8x8xi32>
    %7 = tpu.iota {dimensions = array<i32: 2>} : vector<1x8x8xi32>
    %8 = arith.cmpi sle, %7, %6 : vector<1x8x8xi32>
    %cst = arith.constant 0.000000e+00 : f32
    %cst_4 = arith.constant -1.000000e+09 : f32
    %9 = vector.broadcast %cst : f32 to vector<1x8x8xf32>
    %10 = vector.broadcast %cst_4 : f32 to vector<1x8x8xf32>
    %11 = arith.select %8, %9, %10 : vector<1x8x8xi1>, vector<1x8x8xf32>
    %c0_5 = arith.constant 0 : index
    %c0_6 = arith.constant 0 : index
    %c0_7 = arith.constant 0 : index
    %12 = vector.load %arg4[%c0_5, %c0_6, %c0_7] : memref<2x1x32xf32, #tpu.memory_space<vmem>>, vector<1x1x32xf32>
    %13 = vector.shape_cast %12 : vector<1x1x32xf32> to vector<1x32xf32>
    %c0_8 = arith.constant 0 : index
    %c0_9 = arith.constant 0 : index
    %c0_10 = arith.constant 0 : index
    %14 = vector.load %arg5[%c0_8, %c0_9, %c0_10] : memref<2x1x32xf32, #tpu.memory_space<vmem>>, vector<1x1x32xf32>
    %15 = vector.shape_cast %14 : vector<1x1x32xf32> to vector<1x32xf32>
    %cst_11 = arith.constant dense<0.000000e+00> : vector<16xf32>
    %16 = vector.multi_reduction <add>, %5, %cst_11 [1] : vector<16x32xf32> to vector<16xf32>
    %17 = vector.shape_cast %16 : vector<16xf32> to vector<16x1xf32>
    %cst_12 = arith.constant 3.200000e+01 : f32
    %18 = vector.broadcast %cst_12 : f32 to vector<16x1xf32>
    %19 = arith.divf %17, %18 : vector<16x1xf32>
    %20 = vector.broadcast %19 : vector<16x1xf32> to vector<16x32xf32>
    %21 = arith.subf %5, %20 : vector<16x32xf32>
    %22 = arith.mulf %21, %21 : vector<16x32xf32>
    %cst_13 = arith.constant dense<0.000000e+00> : vector<16xf32>
    %23 = vector.multi_reduction <add>, %22, %cst_13 [1] : vector<16x32xf32> to vector<16xf32>
    %24 = vector.shape_cast %23 : vector<16xf32> to vector<16x1xf32>
    %cst_14 = arith.constant 3.200000e+01 : f32
    %25 = vector.broadcast %cst_14 : f32 to vector<16x1xf32>
    %26 = arith.divf %24, %25 : vector<16x1xf32>
    %27 = vector.broadcast %19 : vector<16x1xf32> to vector<16x32xf32>
    %28 = arith.subf %5, %27 : vector<16x32xf32>
    %cst_15 = arith.constant 9.99999974E-6 : f32
    %29 = vector.broadcast %cst_15 : f32 to vector<16x1xf32>
    %30 = arith.addf %26, %29 : vector<16x1xf32>
    %31 = math.rsqrt %30 : vector<16x1xf32>
    %32 = vector.broadcast %31 : vector<16x1xf32> to vector<16x32xf32>
    %33 = arith.mulf %28, %32 : vector<16x32xf32>
    %34 = vector.broadcast %13 : vector<1x32xf32> to vector<16x32xf32>
    %35 = arith.mulf %33, %34 : vector<16x32xf32>
    %36 = vector.broadcast %15 : vector<1x32xf32> to vector<16x32xf32>
    %37 = arith.addf %35, %36 : vector<16x32xf32>
    %c0_16 = arith.constant 0 : index
    %c0_17 = arith.constant 0 : index
    %c0_18 = arith.constant 0 : index
    %38 = vector.load %arg6[%c0_16, %c0_17, %c0_18] : memref<2x32x96xf32, #tpu.memory_space<vmem>>, vector<1x32x96xf32>
    %39 = vector.shape_cast %38 : vector<1x32x96xf32> to vector<32x96xf32>
    %cst_19 = arith.constant dense<0.000000e+00> : vector<16x96xf32>
    %40 = tpu.matmul %37, %39, %cst_19 {dimension_numbers = #tpu.dot_dimension_numbers<[1], [0], [0], [1], [0, 0, 1, 1], [], []>} : vector<16x32xf32>, vector<32x96xf32>, vector<16x96xf32> -> vector<16x96xf32>
    %c0_20 = arith.constant 0 : index
    %c0_21 = arith.constant 0 : index
    %c0_22 = arith.constant 0 : index
    %41 = vector.load %arg7[%c0_20, %c0_21, %c0_22] : memref<2x1x96xf32, #tpu.memory_space<vmem>>, vector<1x1x96xf32>
    %42 = vector.shape_cast %41 : vector<1x1x96xf32> to vector<1x96xf32>
    %43 = vector.broadcast %42 : vector<1x96xf32> to vector<16x96xf32>
    %44 = arith.addf %40, %43 : vector<16x96xf32>
    %45 = vector.extract_strided_slice %44 {offsets = [0, 0], sizes = [16, 32], strides = [1, 1]} : vector<16x96xf32> to vector<16x32xf32>
    %46 = vector.shape_cast %45 : vector<16x32xf32> to vector<2x8x32xf32>
    %47 = vector.extract_strided_slice %44 {offsets = [0, 32], sizes = [16, 32], strides = [1, 1]} : vector<16x96xf32> to vector<16x32xf32>
    %48 = vector.shape_cast %47 : vector<16x32xf32> to vector<2x8x32xf32>
    %49 = vector.extract_strided_slice %44 {offsets = [0, 64], sizes = [16, 32], strides = [1, 1]} : vector<16x96xf32> to vector<16x32xf32>
    %50 = vector.shape_cast %49 : vector<16x32xf32> to vector<2x8x32xf32>
    %c0_23 = arith.constant 0 : index
    %c0_24 = arith.constant 0 : index
    %c0_25 = arith.constant 0 : index
    %51 = vector.load %arg8[%c0_23, %c0_24, %c0_25] : memref<2x32x32xf32, #tpu.memory_space<vmem>>, vector<1x32x32xf32>
    %52 = vector.shape_cast %51 : vector<1x32x32xf32> to vector<32x32xf32>
    %cst_26 = arith.constant 0.000000e+00 : f32
    %53 = vector.broadcast %cst_26 : f32 to vector<16x32xf32>
    %54 = vector.extract_strided_slice %46 {offsets = [0, 0, 0], sizes = [2, 8, 8], strides = [1, 1, 1]} : vector<2x8x32xf32> to vector<2x8x8xf32>
    %55 = vector.extract_strided_slice %48 {offsets = [0, 0, 0], sizes = [2, 8, 8], strides = [1, 1, 1]} : vector<2x8x32xf32> to vector<2x8x8xf32>
    "tpu.trace_start"() <{level = 10 : i32, message = "bld,bmd->blm"}> : () -> ()
    %cst_27 = arith.constant dense<0.000000e+00> : vector<2x8x8xf32>
    %56 = tpu.matmul %54, %55, %cst_27 {dimension_numbers = #tpu.dot_dimension_numbers<[2], [2], [1], [1], [0, 0, 0, 1, 1, 1], [0], [0]>} : vector<2x8x8xf32>, vector<2x8x8xf32>, vector<2x8x8xf32> -> vector<2x8x8xf32>
    "tpu.trace_stop"() : () -> ()
    %cst_28 = arith.constant 0.353553385 : f32
    %57 = vector.broadcast %cst_28 : f32 to vector<2x8x8xf32>
    %58 = arith.mulf %56, %57 : vector<2x8x8xf32>
    %59 = vector.broadcast %11 : vector<1x8x8xf32> to vector<2x8x8xf32>
    %60 = arith.addf %58, %59 : vector<2x8x8xf32>
    %cst_29 = arith.constant dense<0xFF800000> : vector<2x8xf32>
    %61 = vector.multi_reduction <maximumf>, %60, %cst_29 [2] : vector<2x8x8xf32> to vector<2x8xf32>
    %62 = vector.shape_cast %61 : vector<2x8xf32> to vector<2x8x1xf32>
    %63 = vector.broadcast %62 : vector<2x8x1xf32> to vector<2x8x8xf32>
    %64 = arith.subf %60, %63 : vector<2x8x8xf32>
    %65 = math.exp %64 : vector<2x8x8xf32>
    %cst_30 = arith.constant dense<0.000000e+00> : vector<2x8xf32>
    %66 = vector.multi_reduction <add>, %65, %cst_30 [2] : vector<2x8x8xf32> to vector<2x8xf32>
    %67 = vector.shape_cast %66 : vector<2x8xf32> to vector<2x8x1xf32>
    %68 = tpu.reciprocal %67 {approx = true} : vector<2x8x1xf32> -> vector<2x8x1xf32>
    %69 = vector.broadcast %68 : vector<2x8x1xf32> to vector<2x8x8xf32>
    %70 = arith.mulf %65, %69 : vector<2x8x8xf32>
    %71 = vector.extract_strided_slice %50 {offsets = [0, 0, 0], sizes = [2, 8, 8], strides = [1, 1, 1]} : vector<2x8x32xf32> to vector<2x8x8xf32>
    "tpu.trace_start"() <{level = 10 : i32, message = "blm,bmd->bld"}> : () -> ()
    %cst_31 = arith.constant dense<0.000000e+00> : vector<2x8x8xf32>
    %72 = tpu.matmul %70, %71, %cst_31 {dimension_numbers = #tpu.dot_dimension_numbers<[2], [1], [1], [2], [0, 0, 0, 1, 1, 2], [0], [0]>} : vector<2x8x8xf32>, vector<2x8x8xf32>, vector<2x8x8xf32> -> vector<2x8x8xf32>
    "tpu.trace_stop"() : () -> ()
    %73 = vector.shape_cast %72 : vector<2x8x8xf32> to vector<16x8xf32>
    %74 = vector.extract_strided_slice %52 {offsets = [0, 0], sizes = [8, 32], strides = [1, 1]} : vector<32x32xf32> to vector<8x32xf32>
    %cst_32 = arith.constant dense<0.000000e+00> : vector<16x32xf32>
    %75 = tpu.matmul %73, %74, %cst_32 {dimension_numbers = #tpu.dot_dimension_numbers<[1], [0], [0], [1], [0, 0, 1, 1], [], []>} : vector<16x8xf32>, vector<8x32xf32>, vector<16x32xf32> -> vector<16x32xf32>
    %76 = arith.addf %53, %75 : vector<16x32xf32>
    %77 = vector.extract_strided_slice %46 {offsets = [0, 0, 8], sizes = [2, 8, 8], strides = [1, 1, 1]} : vector<2x8x32xf32> to vector<2x8x8xf32>
    %78 = vector.extract_strided_slice %48 {offsets = [0, 0, 8], sizes = [2, 8, 8], strides = [1, 1, 1]} : vector<2x8x32xf32> to vector<2x8x8xf32>
    "tpu.trace_start"() <{level = 10 : i32, message = "bld,bmd->blm"}> : () -> ()
    %cst_33 = arith.constant dense<0.000000e+00> : vector<2x8x8xf32>
    %79 = tpu.matmul %77, %78, %cst_33 {dimension_numbers = #tpu.dot_dimension_numbers<[2], [2], [1], [1], [0, 0, 0, 1, 1, 1], [0], [0]>} : vector<2x8x8xf32>, vector<2x8x8xf32>, vector<2x8x8xf32> -> vector<2x8x8xf32>
    "tpu.trace_stop"() : () -> ()
    %cst_34 = arith.constant 0.353553385 : f32
    %80 = vector.broadcast %cst_34 : f32 to vector<2x8x8xf32>
    %81 = arith.mulf %79, %80 : vector<2x8x8xf32>
    %82 = vector.broadcast %11 : vector<1x8x8xf32> to vector<2x8x8xf32>
    %83 = arith.addf %81, %82 : vector<2x8x8xf32>
    %cst_35 = arith.constant dense<0xFF800000> : vector<2x8xf32>
    %84 = vector.multi_reduction <maximumf>, %83, %cst_35 [2] : vector<2x8x8xf32> to vector<2x8xf32>
    %85 = vector.shape_cast %84 : vector<2x8xf32> to vector<2x8x1xf32>
    %86 = vector.broadcast %85 : vector<2x8x1xf32> to vector<2x8x8xf32>
    %87 = arith.subf %83, %86 : vector<2x8x8xf32>
    %88 = math.exp %87 : vector<2x8x8xf32>
    %cst_36 = arith.constant dense<0.000000e+00> : vector<2x8xf32>
    %89 = vector.multi_reduction <add>, %88, %cst_36 [2] : vector<2x8x8xf32> to vector<2x8xf32>
    %90 = vector.shape_cast %89 : vector<2x8xf32> to vector<2x8x1xf32>
    %91 = tpu.reciprocal %90 {approx = true} : vector<2x8x1xf32> -> vector<2x8x1xf32>
    %92 = vector.broadcast %91 : vector<2x8x1xf32> to vector<2x8x8xf32>
    %93 = arith.mulf %88, %92 : vector<2x8x8xf32>
    %94 = vector.extract_strided_slice %50 {offsets = [0, 0, 8], sizes = [2, 8, 8], strides = [1, 1, 1]} : vector<2x8x32xf32> to vector<2x8x8xf32>
    "tpu.trace_start"() <{level = 10 : i32, message = "blm,bmd->bld"}> : () -> ()
    %cst_37 = arith.constant dense<0.000000e+00> : vector<2x8x8xf32>
    %95 = tpu.matmul %93, %94, %cst_37 {dimension_numbers = #tpu.dot_dimension_numbers<[2], [1], [1], [2], [0, 0, 0, 1, 1, 2], [0], [0]>} : vector<2x8x8xf32>, vector<2x8x8xf32>, vector<2x8x8xf32> -> vector<2x8x8xf32>
    "tpu.trace_stop"() : () -> ()
    %96 = vector.shape_cast %95 : vector<2x8x8xf32> to vector<16x8xf32>
    %97 = vector.extract_strided_slice %52 {offsets = [8, 0], sizes = [8, 32], strides = [1, 1]} : vector<32x32xf32> to vector<8x32xf32>
    %cst_38 = arith.constant dense<0.000000e+00> : vector<16x32xf32>
    %98 = tpu.matmul %96, %97, %cst_38 {dimension_numbers = #tpu.dot_dimension_numbers<[1], [0], [0], [1], [0, 0, 1, 1], [], []>} : vector<16x8xf32>, vector<8x32xf32>, vector<16x32xf32> -> vector<16x32xf32>
    %99 = arith.addf %76, %98 : vector<16x32xf32>
    %100 = vector.extract_strided_slice %46 {offsets = [0, 0, 16], sizes = [2, 8, 8], strides = [1, 1, 1]} : vector<2x8x32xf32> to vector<2x8x8xf32>
    %101 = vector.extract_strided_slice %48 {offsets = [0, 0, 16], sizes = [2, 8, 8], strides = [1, 1, 1]} : vector<2x8x32xf32> to vector<2x8x8xf32>
    "tpu.trace_start"() <{level = 10 : i32, message = "bld,bmd->blm"}> : () -> ()
    %cst_39 = arith.constant dense<0.000000e+00> : vector<2x8x8xf32>
    %102 = tpu.matmul %100, %101, %cst_39 {dimension_numbers = #tpu.dot_dimension_numbers<[2], [2], [1], [1], [0, 0, 0, 1, 1, 1], [0], [0]>} : vector<2x8x8xf32>, vector<2x8x8xf32>, vector<2x8x8xf32> -> vector<2x8x8xf32>
    "tpu.trace_stop"() : () -> ()
    %cst_40 = arith.constant 0.353553385 : f32
    %103 = vector.broadcast %cst_40 : f32 to vector<2x8x8xf32>
    %104 = arith.mulf %102, %103 : vector<2x8x8xf32>
    %105 = vector.broadcast %11 : vector<1x8x8xf32> to vector<2x8x8xf32>
    %106 = arith.addf %104, %105 : vector<2x8x8xf32>
    %cst_41 = arith.constant dense<0xFF800000> : vector<2x8xf32>
    %107 = vector.multi_reduction <maximumf>, %106, %cst_41 [2] : vector<2x8x8xf32> to vector<2x8xf32>
    %108 = vector.shape_cast %107 : vector<2x8xf32> to vector<2x8x1xf32>
    %109 = vector.broadcast %108 : vector<2x8x1xf32> to vector<2x8x8xf32>
    %110 = arith.subf %106, %109 : vector<2x8x8xf32>
    %111 = math.exp %110 : vector<2x8x8xf32>
    %cst_42 = arith.constant dense<0.000000e+00> : vector<2x8xf32>
    %112 = vector.multi_reduction <add>, %111, %cst_42 [2] : vector<2x8x8xf32> to vector<2x8xf32>
    %113 = vector.shape_cast %112 : vector<2x8xf32> to vector<2x8x1xf32>
    %114 = tpu.reciprocal %113 {approx = true} : vector<2x8x1xf32> -> vector<2x8x1xf32>
    %115 = vector.broadcast %114 : vector<2x8x1xf32> to vector<2x8x8xf32>
    %116 = arith.mulf %111, %115 : vector<2x8x8xf32>
    %117 = vector.extract_strided_slice %50 {offsets = [0, 0, 16], sizes = [2, 8, 8], strides = [1, 1, 1]} : vector<2x8x32xf32> to vector<2x8x8xf32>
    "tpu.trace_start"() <{level = 10 : i32, message = "blm,bmd->bld"}> : () -> ()
    %cst_43 = arith.constant dense<0.000000e+00> : vector<2x8x8xf32>
    %118 = tpu.matmul %116, %117, %cst_43 {dimension_numbers = #tpu.dot_dimension_numbers<[2], [1], [1], [2], [0, 0, 0, 1, 1, 2], [0], [0]>} : vector<2x8x8xf32>, vector<2x8x8xf32>, vector<2x8x8xf32> -> vector<2x8x8xf32>
    "tpu.trace_stop"() : () -> ()
    %119 = vector.shape_cast %118 : vector<2x8x8xf32> to vector<16x8xf32>
    %120 = vector.extract_strided_slice %52 {offsets = [16, 0], sizes = [8, 32], strides = [1, 1]} : vector<32x32xf32> to vector<8x32xf32>
    %cst_44 = arith.constant dense<0.000000e+00> : vector<16x32xf32>
    %121 = tpu.matmul %119, %120, %cst_44 {dimension_numbers = #tpu.dot_dimension_numbers<[1], [0], [0], [1], [0, 0, 1, 1], [], []>} : vector<16x8xf32>, vector<8x32xf32>, vector<16x32xf32> -> vector<16x32xf32>
    %122 = arith.addf %99, %121 : vector<16x32xf32>
    %123 = vector.extract_strided_slice %46 {offsets = [0, 0, 24], sizes = [2, 8, 8], strides = [1, 1, 1]} : vector<2x8x32xf32> to vector<2x8x8xf32>
    %124 = vector.extract_strided_slice %48 {offsets = [0, 0, 24], sizes = [2, 8, 8], strides = [1, 1, 1]} : vector<2x8x32xf32> to vector<2x8x8xf32>
    "tpu.trace_start"() <{level = 10 : i32, message = "bld,bmd->blm"}> : () -> ()
    %cst_45 = arith.constant dense<0.000000e+00> : vector<2x8x8xf32>
    %125 = tpu.matmul %123, %124, %cst_45 {dimension_numbers = #tpu.dot_dimension_numbers<[2], [2], [1], [1], [0, 0, 0, 1, 1, 1], [0], [0]>} : vector<2x8x8xf32>, vector<2x8x8xf32>, vector<2x8x8xf32> -> vector<2x8x8xf32>
    "tpu.trace_stop"() : () -> ()
    %cst_46 = arith.constant 0.353553385 : f32
    %126 = vector.broadcast %cst_46 : f32 to vector<2x8x8xf32>
    %127 = arith.mulf %125, %126 : vector<2x8x8xf32>
    %128 = vector.broadcast %11 : vector<1x8x8xf32> to vector<2x8x8xf32>
    %129 = arith.addf %127, %128 : vector<2x8x8xf32>
    %cst_47 = arith.constant dense<0xFF800000> : vector<2x8xf32>
    %130 = vector.multi_reduction <maximumf>, %129, %cst_47 [2] : vector<2x8x8xf32> to vector<2x8xf32>
    %131 = vector.shape_cast %130 : vector<2x8xf32> to vector<2x8x1xf32>
    %132 = vector.broadcast %131 : vector<2x8x1xf32> to vector<2x8x8xf32>
    %133 = arith.subf %129, %132 : vector<2x8x8xf32>
    %134 = math.exp %133 : vector<2x8x8xf32>
    %cst_48 = arith.constant dense<0.000000e+00> : vector<2x8xf32>
    %135 = vector.multi_reduction <add>, %134, %cst_48 [2] : vector<2x8x8xf32> to vector<2x8xf32>
    %136 = vector.shape_cast %135 : vector<2x8xf32> to vector<2x8x1xf32>
    %137 = tpu.reciprocal %136 {approx = true} : vector<2x8x1xf32> -> vector<2x8x1xf32>
    %138 = vector.broadcast %137 : vector<2x8x1xf32> to vector<2x8x8xf32>
    %139 = arith.mulf %134, %138 : vector<2x8x8xf32>
    %140 = vector.extract_strided_slice %50 {offsets = [0, 0, 24], sizes = [2, 8, 8], strides = [1, 1, 1]} : vector<2x8x32xf32> to vector<2x8x8xf32>
    "tpu.trace_start"() <{level = 10 : i32, message = "blm,bmd->bld"}> : () -> ()
    %cst_49 = arith.constant dense<0.000000e+00> : vector<2x8x8xf32>
    %141 = tpu.matmul %139, %140, %cst_49 {dimension_numbers = #tpu.dot_dimension_numbers<[2], [1], [1], [2], [0, 0, 0, 1, 1, 2], [0], [0]>} : vector<2x8x8xf32>, vector<2x8x8xf32>, vector<2x8x8xf32> -> vector<2x8x8xf32>
    "tpu.trace_stop"() : () -> ()
    %142 = vector.shape_cast %141 : vector<2x8x8xf32> to vector<16x8xf32>
    %143 = vector.extract_strided_slice %52 {offsets = [24, 0], sizes = [8, 32], strides = [1, 1]} : vector<32x32xf32> to vector<8x32xf32>
    %cst_50 = arith.constant dense<0.000000e+00> : vector<16x32xf32>
    %144 = tpu.matmul %142, %143, %cst_50 {dimension_numbers = #tpu.dot_dimension_numbers<[1], [0], [0], [1], [0, 0, 1, 1], [], []>} : vector<16x8xf32>, vector<8x32xf32>, vector<16x32xf32> -> vector<16x32xf32>
    %145 = arith.addf %122, %144 : vector<16x32xf32>
    %146 = arith.addf %5, %145 : vector<16x32xf32>
    %c0_51 = arith.constant 0 : index
    %c0_52 = arith.constant 0 : index
    %c0_53 = arith.constant 0 : index
    %147 = vector.load %arg9[%c0_51, %c0_52, %c0_53] : memref<2x1x32xf32, #tpu.memory_space<vmem>>, vector<1x1x32xf32>
    %148 = vector.shape_cast %147 : vector<1x1x32xf32> to vector<1x32xf32>
    %149 = vector.broadcast %148 : vector<1x32xf32> to vector<16x32xf32>
    %150 = arith.addf %146, %149 : vector<16x32xf32>
    %c0_54 = arith.constant 0 : index
    %c0_55 = arith.constant 0 : index
    %c0_56 = arith.constant 0 : index
    %151 = vector.load %arg10[%c0_54, %c0_55, %c0_56] : memref<2x1x32xf32, #tpu.memory_space<vmem>>, vector<1x1x32xf32>
    %152 = vector.shape_cast %151 : vector<1x1x32xf32> to vector<1x32xf32>
    %c0_57 = arith.constant 0 : index
    %c0_58 = arith.constant 0 : index
    %c0_59 = arith.constant 0 : index
    %153 = vector.load %arg11[%c0_57, %c0_58, %c0_59] : memref<2x1x32xf32, #tpu.memory_space<vmem>>, vector<1x1x32xf32>
    %154 = vector.shape_cast %153 : vector<1x1x32xf32> to vector<1x32xf32>
    %cst_60 = arith.constant dense<0.000000e+00> : vector<16xf32>
    %155 = vector.multi_reduction <add>, %150, %cst_60 [1] : vector<16x32xf32> to vector<16xf32>
    %156 = vector.shape_cast %155 : vector<16xf32> to vector<16x1xf32>
    %cst_61 = arith.constant 3.200000e+01 : f32
    %157 = vector.broadcast %cst_61 : f32 to vector<16x1xf32>
    %158 = arith.divf %156, %157 : vector<16x1xf32>
    %159 = vector.broadcast %158 : vector<16x1xf32> to vector<16x32xf32>
    %160 = arith.subf %150, %159 : vector<16x32xf32>
    %161 = arith.mulf %160, %160 : vector<16x32xf32>
    %cst_62 = arith.constant dense<0.000000e+00> : vector<16xf32>
    %162 = vector.multi_reduction <add>, %161, %cst_62 [1] : vector<16x32xf32> to vector<16xf32>
    %163 = vector.shape_cast %162 : vector<16xf32> to vector<16x1xf32>
    %cst_63 = arith.constant 3.200000e+01 : f32
    %164 = vector.broadcast %cst_63 : f32 to vector<16x1xf32>
    %165 = arith.divf %163, %164 : vector<16x1xf32>
    %166 = vector.broadcast %158 : vector<16x1xf32> to vector<16x32xf32>
    %167 = arith.subf %150, %166 : vector<16x32xf32>
    %cst_64 = arith.constant 9.99999974E-6 : f32
    %168 = vector.broadcast %cst_64 : f32 to vector<16x1xf32>
    %169 = arith.addf %165, %168 : vector<16x1xf32>
    %170 = math.rsqrt %169 : vector<16x1xf32>
    %171 = vector.broadcast %170 : vector<16x1xf32> to vector<16x32xf32>
    %172 = arith.mulf %167, %171 : vector<16x32xf32>
    %173 = vector.broadcast %152 : vector<1x32xf32> to vector<16x32xf32>
    %174 = arith.mulf %172, %173 : vector<16x32xf32>
    %175 = vector.broadcast %154 : vector<1x32xf32> to vector<16x32xf32>
    %176 = arith.addf %174, %175 : vector<16x32xf32>
    %c0_65 = arith.constant 0 : index
    %c0_66 = arith.constant 0 : index
    %c0_67 = arith.constant 0 : index
    %177 = vector.load %arg12[%c0_65, %c0_66, %c0_67] : memref<2x32x128xf32, #tpu.memory_space<vmem>>, vector<1x32x128xf32>
    %178 = vector.shape_cast %177 : vector<1x32x128xf32> to vector<32x128xf32>
    %cst_68 = arith.constant dense<0.000000e+00> : vector<16x128xf32>
    %179 = tpu.matmul %176, %178, %cst_68 {dimension_numbers = #tpu.dot_dimension_numbers<[1], [0], [0], [1], [0, 0, 1, 1], [], []>} : vector<16x32xf32>, vector<32x128xf32>, vector<16x128xf32> -> vector<16x128xf32>
    %c0_69 = arith.constant 0 : index
    %c0_70 = arith.constant 0 : index
    %c0_71 = arith.constant 0 : index
    %180 = vector.load %arg13[%c0_69, %c0_70, %c0_71] : memref<2x1x128xf32, #tpu.memory_space<vmem>>, vector<1x1x128xf32>
    %181 = vector.shape_cast %180 : vector<1x1x128xf32> to vector<1x128xf32>
    %182 = vector.broadcast %181 : vector<1x128xf32> to vector<16x128xf32>
    %183 = arith.addf %179, %182 : vector<16x128xf32>
    %cst_72 = arith.constant 1.702000e+00 : f32
    %184 = vector.broadcast %cst_72 : f32 to vector<16x128xf32>
    %185 = arith.mulf %184, %183 : vector<16x128xf32>
    %186 = arith.negf %185 : vector<16x128xf32>
    %187 = math.exp %186 : vector<16x128xf32>
    %cst_73 = arith.constant 1.000000e+00 : f32
    %188 = vector.broadcast %cst_73 : f32 to vector<16x128xf32>
    %189 = arith.addf %188, %187 : vector<16x128xf32>
    %190 = arith.divf %188, %189 : vector<16x128xf32>
    %191 = arith.mulf %183, %190 : vector<16x128xf32>
    %c0_74 = arith.constant 0 : index
    %c0_75 = arith.constant 0 : index
    %c0_76 = arith.constant 0 : index
    %192 = vector.load %arg14[%c0_74, %c0_75, %c0_76] : memref<2x128x32xf32, #tpu.memory_space<vmem>>, vector<1x128x32xf32>
    %193 = vector.shape_cast %192 : vector<1x128x32xf32> to vector<128x32xf32>
    %cst_77 = arith.constant dense<0.000000e+00> : vector<16x32xf32>
    %194 = tpu.matmul %191, %193, %cst_77 {dimension_numbers = #tpu.dot_dimension_numbers<[1], [0], [0], [1], [0, 0, 1, 1], [], []>} : vector<16x128xf32>, vector<128x32xf32>, vector<16x32xf32> -> vector<16x32xf32>
    %195 = arith.addf %150, %194 : vector<16x32xf32>
    %c0_78 = arith.constant 0 : index
    %c0_79 = arith.constant 0 : index
    %c0_80 = arith.constant 0 : index
    %196 = vector.load %arg15[%c0_78, %c0_79, %c0_80] : memref<2x1x32xf32, #tpu.memory_space<vmem>>, vector<1x1x32xf32>
    %197 = vector.shape_cast %196 : vector<1x1x32xf32> to vector<1x32xf32>
    %198 = vector.broadcast %197 : vector<1x32xf32> to vector<16x32xf32>
    %199 = arith.addf %195, %198 : vector<16x32xf32>
    %c1 = arith.constant 1 : index
    %c0_81 = arith.constant 0 : index
    %c0_82 = arith.constant 0 : index
    %200 = vector.load %arg4[%c1, %c0_81, %c0_82] : memref<2x1x32xf32, #tpu.memory_space<vmem>>, vector<1x1x32xf32>
    %201 = vector.shape_cast %200 : vector<1x1x32xf32> to vector<1x32xf32>
    %c1_83 = arith.constant 1 : index
    %c0_84 = arith.constant 0 : index
    %c0_85 = arith.constant 0 : index
    %202 = vector.load %arg5[%c1_83, %c0_84, %c0_85] : memref<2x1x32xf32, #tpu.memory_space<vmem>>, vector<1x1x32xf32>
    %203 = vector.shape_cast %202 : vector<1x1x32xf32> to vector<1x32xf32>
    %cst_86 = arith.constant dense<0.000000e+00> : vector<16xf32>
    %204 = vector.multi_reduction <add>, %199, %cst_86 [1] : vector<16x32xf32> to vector<16xf32>
    %205 = vector.shape_cast %204 : vector<16xf32> to vector<16x1xf32>
    %cst_87 = arith.constant 3.200000e+01 : f32
    %206 = vector.broadcast %cst_87 : f32 to vector<16x1xf32>
    %207 = arith.divf %205, %206 : vector<16x1xf32>
    %208 = vector.broadcast %207 : vector<16x1xf32> to vector<16x32xf32>
    %209 = arith.subf %199, %208 : vector<16x32xf32>
    %210 = arith.mulf %209, %209 : vector<16x32xf32>
    %cst_88 = arith.constant dense<0.000000e+00> : vector<16xf32>
    %211 = vector.multi_reduction <add>, %210, %cst_88 [1] : vector<16x32xf32> to vector<16xf32>
    %212 = vector.shape_cast %211 : vector<16xf32> to vector<16x1xf32>
    %cst_89 = arith.constant 3.200000e+01 : f32
    %213 = vector.broadcast %cst_89 : f32 to vector<16x1xf32>
    %214 = arith.divf %212, %213 : vector<16x1xf32>
    %215 = vector.broadcast %207 : vector<16x1xf32> to vector<16x32xf32>
    %216 = arith.subf %199, %215 : vector<16x32xf32>
    %cst_90 = arith.constant 9.99999974E-6 : f32
    %217 = vector.broadcast %cst_90 : f32 to vector<16x1xf32>
    %218 = arith.addf %214, %217 : vector<16x1xf32>
    %219 = math.rsqrt %218 : vector<16x1xf32>
    %220 = vector.broadcast %219 : vector<16x1xf32> to vector<16x32xf32>
    %221 = arith.mulf %216, %220 : vector<16x32xf32>
    %222 = vector.broadcast %201 : vector<1x32xf32> to vector<16x32xf32>
    %223 = arith.mulf %221, %222 : vector<16x32xf32>
    %224 = vector.broadcast %203 : vector<1x32xf32> to vector<16x32xf32>
    %225 = arith.addf %223, %224 : vector<16x32xf32>
    %c1_91 = arith.constant 1 : index
    %c0_92 = arith.constant 0 : index
    %c0_93 = arith.constant 0 : index
    %226 = vector.load %arg6[%c1_91, %c0_92, %c0_93] : memref<2x32x96xf32, #tpu.memory_space<vmem>>, vector<1x32x96xf32>
    %227 = vector.shape_cast %226 : vector<1x32x96xf32> to vector<32x96xf32>
    %cst_94 = arith.constant dense<0.000000e+00> : vector<16x96xf32>
    %228 = tpu.matmul %225, %227, %cst_94 {dimension_numbers = #tpu.dot_dimension_numbers<[1], [0], [0], [1], [0, 0, 1, 1], [], []>} : vector<16x32xf32>, vector<32x96xf32>, vector<16x96xf32> -> vector<16x96xf32>
    %c1_95 = arith.constant 1 : index
    %c0_96 = arith.constant 0 : index
    %c0_97 = arith.constant 0 : index
    %229 = vector.load %arg7[%c1_95, %c0_96, %c0_97] : memref<2x1x96xf32, #tpu.memory_space<vmem>>, vector<1x1x96xf32>
    %230 = vector.shape_cast %229 : vector<1x1x96xf32> to vector<1x96xf32>
    %231 = vector.broadcast %230 : vector<1x96xf32> to vector<16x96xf32>
    %232 = arith.addf %228, %231 : vector<16x96xf32>
    %233 = vector.extract_strided_slice %232 {offsets = [0, 0], sizes = [16, 32], strides = [1, 1]} : vector<16x96xf32> to vector<16x32xf32>
    %234 = vector.shape_cast %233 : vector<16x32xf32> to vector<2x8x32xf32>
    %235 = vector.extract_strided_slice %232 {offsets = [0, 32], sizes = [16, 32], strides = [1, 1]} : vector<16x96xf32> to vector<16x32xf32>
    %236 = vector.shape_cast %235 : vector<16x32xf32> to vector<2x8x32xf32>
    %237 = vector.extract_strided_slice %232 {offsets = [0, 64], sizes = [16, 32], strides = [1, 1]} : vector<16x96xf32> to vector<16x32xf32>
    %238 = vector.shape_cast %237 : vector<16x32xf32> to vector<2x8x32xf32>
    %c1_98 = arith.constant 1 : index
    %c0_99 = arith.constant 0 : index
    %c0_100 = arith.constant 0 : index
    %239 = vector.load %arg8[%c1_98, %c0_99, %c0_100] : memref<2x32x32xf32, #tpu.memory_space<vmem>>, vector<1x32x32xf32>
    %240 = vector.shape_cast %239 : vector<1x32x32xf32> to vector<32x32xf32>
    %cst_101 = arith.constant 0.000000e+00 : f32
    %241 = vector.broadcast %cst_101 : f32 to vector<16x32xf32>
    %242 = vector.extract_strided_slice %234 {offsets = [0, 0, 0], sizes = [2, 8, 8], strides = [1, 1, 1]} : vector<2x8x32xf32> to vector<2x8x8xf32>
    %243 = vector.extract_strided_slice %236 {offsets = [0, 0, 0], sizes = [2, 8, 8], strides = [1, 1, 1]} : vector<2x8x32xf32> to vector<2x8x8xf32>
    "tpu.trace_start"() <{level = 10 : i32, message = "bld,bmd->blm"}> : () -> ()
    %cst_102 = arith.constant dense<0.000000e+00> : vector<2x8x8xf32>
    %244 = tpu.matmul %242, %243, %cst_102 {dimension_numbers = #tpu.dot_dimension_numbers<[2], [2], [1], [1], [0, 0, 0, 1, 1, 1], [0], [0]>} : vector<2x8x8xf32>, vector<2x8x8xf32>, vector<2x8x8xf32> -> vector<2x8x8xf32>
    "tpu.trace_stop"() : () -> ()
    %cst_103 = arith.constant 0.353553385 : f32
    %245 = vector.broadcast %cst_103 : f32 to vector<2x8x8xf32>
    %246 = arith.mulf %244, %245 : vector<2x8x8xf32>
    %247 = vector.broadcast %11 : vector<1x8x8xf32> to vector<2x8x8xf32>
    %248 = arith.addf %246, %247 : vector<2x8x8xf32>
    %cst_104 = arith.constant dense<0xFF800000> : vector<2x8xf32>
    %249 = vector.multi_reduction <maximumf>, %248, %cst_104 [2] : vector<2x8x8xf32> to vector<2x8xf32>
    %250 = vector.shape_cast %249 : vector<2x8xf32> to vector<2x8x1xf32>
    %251 = vector.broadcast %250 : vector<2x8x1xf32> to vector<2x8x8xf32>
    %252 = arith.subf %248, %251 : vector<2x8x8xf32>
    %253 = math.exp %252 : vector<2x8x8xf32>
    %cst_105 = arith.constant dense<0.000000e+00> : vector<2x8xf32>
    %254 = vector.multi_reduction <add>, %253, %cst_105 [2] : vector<2x8x8xf32> to vector<2x8xf32>
    %255 = vector.shape_cast %254 : vector<2x8xf32> to vector<2x8x1xf32>
    %256 = tpu.reciprocal %255 {approx = true} : vector<2x8x1xf32> -> vector<2x8x1xf32>
    %257 = vector.broadcast %256 : vector<2x8x1xf32> to vector<2x8x8xf32>
    %258 = arith.mulf %253, %257 : vector<2x8x8xf32>
    %259 = vector.extract_strided_slice %238 {offsets = [0, 0, 0], sizes = [2, 8, 8], strides = [1, 1, 1]} : vector<2x8x32xf32> to vector<2x8x8xf32>
    "tpu.trace_start"() <{level = 10 : i32, message = "blm,bmd->bld"}> : () -> ()
    %cst_106 = arith.constant dense<0.000000e+00> : vector<2x8x8xf32>
    %260 = tpu.matmul %258, %259, %cst_106 {dimension_numbers = #tpu.dot_dimension_numbers<[2], [1], [1], [2], [0, 0, 0, 1, 1, 2], [0], [0]>} : vector<2x8x8xf32>, vector<2x8x8xf32>, vector<2x8x8xf32> -> vector<2x8x8xf32>
    "tpu.trace_stop"() : () -> ()
    %261 = vector.shape_cast %260 : vector<2x8x8xf32> to vector<16x8xf32>
    %262 = vector.extract_strided_slice %240 {offsets = [0, 0], sizes = [8, 32], strides = [1, 1]} : vector<32x32xf32> to vector<8x32xf32>
    %cst_107 = arith.constant dense<0.000000e+00> : vector<16x32xf32>
    %263 = tpu.matmul %261, %262, %cst_107 {dimension_numbers = #tpu.dot_dimension_numbers<[1], [0], [0], [1], [0, 0, 1, 1], [], []>} : vector<16x8xf32>, vector<8x32xf32>, vector<16x32xf32> -> vector<16x32xf32>
    %264 = arith.addf %241, %263 : vector<16x32xf32>
    %265 = vector.extract_strided_slice %234 {offsets = [0, 0, 8], sizes = [2, 8, 8], strides = [1, 1, 1]} : vector<2x8x32xf32> to vector<2x8x8xf32>
    %266 = vector.extract_strided_slice %236 {offsets = [0, 0, 8], sizes = [2, 8, 8], strides = [1, 1, 1]} : vector<2x8x32xf32> to vector<2x8x8xf32>
    "tpu.trace_start"() <{level = 10 : i32, message = "bld,bmd->blm"}> : () -> ()
    %cst_108 = arith.constant dense<0.000000e+00> : vector<2x8x8xf32>
    %267 = tpu.matmul %265, %266, %cst_108 {dimension_numbers = #tpu.dot_dimension_numbers<[2], [2], [1], [1], [0, 0, 0, 1, 1, 1], [0], [0]>} : vector<2x8x8xf32>, vector<2x8x8xf32>, vector<2x8x8xf32> -> vector<2x8x8xf32>
    "tpu.trace_stop"() : () -> ()
    %cst_109 = arith.constant 0.353553385 : f32
    %268 = vector.broadcast %cst_109 : f32 to vector<2x8x8xf32>
    %269 = arith.mulf %267, %268 : vector<2x8x8xf32>
    %270 = vector.broadcast %11 : vector<1x8x8xf32> to vector<2x8x8xf32>
    %271 = arith.addf %269, %270 : vector<2x8x8xf32>
    %cst_110 = arith.constant dense<0xFF800000> : vector<2x8xf32>
    %272 = vector.multi_reduction <maximumf>, %271, %cst_110 [2] : vector<2x8x8xf32> to vector<2x8xf32>
    %273 = vector.shape_cast %272 : vector<2x8xf32> to vector<2x8x1xf32>
    %274 = vector.broadcast %273 : vector<2x8x1xf32> to vector<2x8x8xf32>
    %275 = arith.subf %271, %274 : vector<2x8x8xf32>
    %276 = math.exp %275 : vector<2x8x8xf32>
    %cst_111 = arith.constant dense<0.000000e+00> : vector<2x8xf32>
    %277 = vector.multi_reduction <add>, %276, %cst_111 [2] : vector<2x8x8xf32> to vector<2x8xf32>
    %278 = vector.shape_cast %277 : vector<2x8xf32> to vector<2x8x1xf32>
    %279 = tpu.reciprocal %278 {approx = true} : vector<2x8x1xf32> -> vector<2x8x1xf32>
    %280 = vector.broadcast %279 : vector<2x8x1xf32> to vector<2x8x8xf32>
    %281 = arith.mulf %276, %280 : vector<2x8x8xf32>
    %282 = vector.extract_strided_slice %238 {offsets = [0, 0, 8], sizes = [2, 8, 8], strides = [1, 1, 1]} : vector<2x8x32xf32> to vector<2x8x8xf32>
    "tpu.trace_start"() <{level = 10 : i32, message = "blm,bmd->bld"}> : () -> ()
    %cst_112 = arith.constant dense<0.000000e+00> : vector<2x8x8xf32>
    %283 = tpu.matmul %281, %282, %cst_112 {dimension_numbers = #tpu.dot_dimension_numbers<[2], [1], [1], [2], [0, 0, 0, 1, 1, 2], [0], [0]>} : vector<2x8x8xf32>, vector<2x8x8xf32>, vector<2x8x8xf32> -> vector<2x8x8xf32>
    "tpu.trace_stop"() : () -> ()
    %284 = vector.shape_cast %283 : vector<2x8x8xf32> to vector<16x8xf32>
    %285 = vector.extract_strided_slice %240 {offsets = [8, 0], sizes = [8, 32], strides = [1, 1]} : vector<32x32xf32> to vector<8x32xf32>
    %cst_113 = arith.constant dense<0.000000e+00> : vector<16x32xf32>
    %286 = tpu.matmul %284, %285, %cst_113 {dimension_numbers = #tpu.dot_dimension_numbers<[1], [0], [0], [1], [0, 0, 1, 1], [], []>} : vector<16x8xf32>, vector<8x32xf32>, vector<16x32xf32> -> vector<16x32xf32>
    %287 = arith.addf %264, %286 : vector<16x32xf32>
    %288 = vector.extract_strided_slice %234 {offsets = [0, 0, 16], sizes = [2, 8, 8], strides = [1, 1, 1]} : vector<2x8x32xf32> to vector<2x8x8xf32>
    %289 = vector.extract_strided_slice %236 {offsets = [0, 0, 16], sizes = [2, 8, 8], strides = [1, 1, 1]} : vector<2x8x32xf32> to vector<2x8x8xf32>
    "tpu.trace_start"() <{level = 10 : i32, message = "bld,bmd->blm"}> : () -> ()
    %cst_114 = arith.constant dense<0.000000e+00> : vector<2x8x8xf32>
    %290 = tpu.matmul %288, %289, %cst_114 {dimension_numbers = #tpu.dot_dimension_numbers<[2], [2], [1], [1], [0, 0, 0, 1, 1, 1], [0], [0]>} : vector<2x8x8xf32>, vector<2x8x8xf32>, vector<2x8x8xf32> -> vector<2x8x8xf32>
    "tpu.trace_stop"() : () -> ()
    %cst_115 = arith.constant 0.353553385 : f32
    %291 = vector.broadcast %cst_115 : f32 to vector<2x8x8xf32>
    %292 = arith.mulf %290, %291 : vector<2x8x8xf32>
    %293 = vector.broadcast %11 : vector<1x8x8xf32> to vector<2x8x8xf32>
    %294 = arith.addf %292, %293 : vector<2x8x8xf32>
    %cst_116 = arith.constant dense<0xFF800000> : vector<2x8xf32>
    %295 = vector.multi_reduction <maximumf>, %294, %cst_116 [2] : vector<2x8x8xf32> to vector<2x8xf32>
    %296 = vector.shape_cast %295 : vector<2x8xf32> to vector<2x8x1xf32>
    %297 = vector.broadcast %296 : vector<2x8x1xf32> to vector<2x8x8xf32>
    %298 = arith.subf %294, %297 : vector<2x8x8xf32>
    %299 = math.exp %298 : vector<2x8x8xf32>
    %cst_117 = arith.constant dense<0.000000e+00> : vector<2x8xf32>
    %300 = vector.multi_reduction <add>, %299, %cst_117 [2] : vector<2x8x8xf32> to vector<2x8xf32>
    %301 = vector.shape_cast %300 : vector<2x8xf32> to vector<2x8x1xf32>
    %302 = tpu.reciprocal %301 {approx = true} : vector<2x8x1xf32> -> vector<2x8x1xf32>
    %303 = vector.broadcast %302 : vector<2x8x1xf32> to vector<2x8x8xf32>
    %304 = arith.mulf %299, %303 : vector<2x8x8xf32>
    %305 = vector.extract_strided_slice %238 {offsets = [0, 0, 16], sizes = [2, 8, 8], strides = [1, 1, 1]} : vector<2x8x32xf32> to vector<2x8x8xf32>
    "tpu.trace_start"() <{level = 10 : i32, message = "blm,bmd->bld"}> : () -> ()
    %cst_118 = arith.constant dense<0.000000e+00> : vector<2x8x8xf32>
    %306 = tpu.matmul %304, %305, %cst_118 {dimension_numbers = #tpu.dot_dimension_numbers<[2], [1], [1], [2], [0, 0, 0, 1, 1, 2], [0], [0]>} : vector<2x8x8xf32>, vector<2x8x8xf32>, vector<2x8x8xf32> -> vector<2x8x8xf32>
    "tpu.trace_stop"() : () -> ()
    %307 = vector.shape_cast %306 : vector<2x8x8xf32> to vector<16x8xf32>
    %308 = vector.extract_strided_slice %240 {offsets = [16, 0], sizes = [8, 32], strides = [1, 1]} : vector<32x32xf32> to vector<8x32xf32>
    %cst_119 = arith.constant dense<0.000000e+00> : vector<16x32xf32>
    %309 = tpu.matmul %307, %308, %cst_119 {dimension_numbers = #tpu.dot_dimension_numbers<[1], [0], [0], [1], [0, 0, 1, 1], [], []>} : vector<16x8xf32>, vector<8x32xf32>, vector<16x32xf32> -> vector<16x32xf32>
    %310 = arith.addf %287, %309 : vector<16x32xf32>
    %311 = vector.extract_strided_slice %234 {offsets = [0, 0, 24], sizes = [2, 8, 8], strides = [1, 1, 1]} : vector<2x8x32xf32> to vector<2x8x8xf32>
    %312 = vector.extract_strided_slice %236 {offsets = [0, 0, 24], sizes = [2, 8, 8], strides = [1, 1, 1]} : vector<2x8x32xf32> to vector<2x8x8xf32>
    "tpu.trace_start"() <{level = 10 : i32, message = "bld,bmd->blm"}> : () -> ()
    %cst_120 = arith.constant dense<0.000000e+00> : vector<2x8x8xf32>
    %313 = tpu.matmul %311, %312, %cst_120 {dimension_numbers = #tpu.dot_dimension_numbers<[2], [2], [1], [1], [0, 0, 0, 1, 1, 1], [0], [0]>} : vector<2x8x8xf32>, vector<2x8x8xf32>, vector<2x8x8xf32> -> vector<2x8x8xf32>
    "tpu.trace_stop"() : () -> ()
    %cst_121 = arith.constant 0.353553385 : f32
    %314 = vector.broadcast %cst_121 : f32 to vector<2x8x8xf32>
    %315 = arith.mulf %313, %314 : vector<2x8x8xf32>
    %316 = vector.broadcast %11 : vector<1x8x8xf32> to vector<2x8x8xf32>
    %317 = arith.addf %315, %316 : vector<2x8x8xf32>
    %cst_122 = arith.constant dense<0xFF800000> : vector<2x8xf32>
    %318 = vector.multi_reduction <maximumf>, %317, %cst_122 [2] : vector<2x8x8xf32> to vector<2x8xf32>
    %319 = vector.shape_cast %318 : vector<2x8xf32> to vector<2x8x1xf32>
    %320 = vector.broadcast %319 : vector<2x8x1xf32> to vector<2x8x8xf32>
    %321 = arith.subf %317, %320 : vector<2x8x8xf32>
    %322 = math.exp %321 : vector<2x8x8xf32>
    %cst_123 = arith.constant dense<0.000000e+00> : vector<2x8xf32>
    %323 = vector.multi_reduction <add>, %322, %cst_123 [2] : vector<2x8x8xf32> to vector<2x8xf32>
    %324 = vector.shape_cast %323 : vector<2x8xf32> to vector<2x8x1xf32>
    %325 = tpu.reciprocal %324 {approx = true} : vector<2x8x1xf32> -> vector<2x8x1xf32>
    %326 = vector.broadcast %325 : vector<2x8x1xf32> to vector<2x8x8xf32>
    %327 = arith.mulf %322, %326 : vector<2x8x8xf32>
    %328 = vector.extract_strided_slice %238 {offsets = [0, 0, 24], sizes = [2, 8, 8], strides = [1, 1, 1]} : vector<2x8x32xf32> to vector<2x8x8xf32>
    "tpu.trace_start"() <{level = 10 : i32, message = "blm,bmd->bld"}> : () -> ()
    %cst_124 = arith.constant dense<0.000000e+00> : vector<2x8x8xf32>
    %329 = tpu.matmul %327, %328, %cst_124 {dimension_numbers = #tpu.dot_dimension_numbers<[2], [1], [1], [2], [0, 0, 0, 1, 1, 2], [0], [0]>} : vector<2x8x8xf32>, vector<2x8x8xf32>, vector<2x8x8xf32> -> vector<2x8x8xf32>
    "tpu.trace_stop"() : () -> ()
    %330 = vector.shape_cast %329 : vector<2x8x8xf32> to vector<16x8xf32>
    %331 = vector.extract_strided_slice %240 {offsets = [24, 0], sizes = [8, 32], strides = [1, 1]} : vector<32x32xf32> to vector<8x32xf32>
    %cst_125 = arith.constant dense<0.000000e+00> : vector<16x32xf32>
    %332 = tpu.matmul %330, %331, %cst_125 {dimension_numbers = #tpu.dot_dimension_numbers<[1], [0], [0], [1], [0, 0, 1, 1], [], []>} : vector<16x8xf32>, vector<8x32xf32>, vector<16x32xf32> -> vector<16x32xf32>
    %333 = arith.addf %310, %332 : vector<16x32xf32>
    %334 = arith.addf %199, %333 : vector<16x32xf32>
    %c1_126 = arith.constant 1 : index
    %c0_127 = arith.constant 0 : index
    %c0_128 = arith.constant 0 : index
    %335 = vector.load %arg9[%c1_126, %c0_127, %c0_128] : memref<2x1x32xf32, #tpu.memory_space<vmem>>, vector<1x1x32xf32>
    %336 = vector.shape_cast %335 : vector<1x1x32xf32> to vector<1x32xf32>
    %337 = vector.broadcast %336 : vector<1x32xf32> to vector<16x32xf32>
    %338 = arith.addf %334, %337 : vector<16x32xf32>
    %c1_129 = arith.constant 1 : index
    %c0_130 = arith.constant 0 : index
    %c0_131 = arith.constant 0 : index
    %339 = vector.load %arg10[%c1_129, %c0_130, %c0_131] : memref<2x1x32xf32, #tpu.memory_space<vmem>>, vector<1x1x32xf32>
    %340 = vector.shape_cast %339 : vector<1x1x32xf32> to vector<1x32xf32>
    %c1_132 = arith.constant 1 : index
    %c0_133 = arith.constant 0 : index
    %c0_134 = arith.constant 0 : index
    %341 = vector.load %arg11[%c1_132, %c0_133, %c0_134] : memref<2x1x32xf32, #tpu.memory_space<vmem>>, vector<1x1x32xf32>
    %342 = vector.shape_cast %341 : vector<1x1x32xf32> to vector<1x32xf32>
    %cst_135 = arith.constant dense<0.000000e+00> : vector<16xf32>
    %343 = vector.multi_reduction <add>, %338, %cst_135 [1] : vector<16x32xf32> to vector<16xf32>
    %344 = vector.shape_cast %343 : vector<16xf32> to vector<16x1xf32>
    %cst_136 = arith.constant 3.200000e+01 : f32
    %345 = vector.broadcast %cst_136 : f32 to vector<16x1xf32>
    %346 = arith.divf %344, %345 : vector<16x1xf32>
    %347 = vector.broadcast %346 : vector<16x1xf32> to vector<16x32xf32>
    %348 = arith.subf %338, %347 : vector<16x32xf32>
    %349 = arith.mulf %348, %348 : vector<16x32xf32>
    %cst_137 = arith.constant dense<0.000000e+00> : vector<16xf32>
    %350 = vector.multi_reduction <add>, %349, %cst_137 [1] : vector<16x32xf32> to vector<16xf32>
    %351 = vector.shape_cast %350 : vector<16xf32> to vector<16x1xf32>
    %cst_138 = arith.constant 3.200000e+01 : f32
    %352 = vector.broadcast %cst_138 : f32 to vector<16x1xf32>
    %353 = arith.divf %351, %352 : vector<16x1xf32>
    %354 = vector.broadcast %346 : vector<16x1xf32> to vector<16x32xf32>
    %355 = arith.subf %338, %354 : vector<16x32xf32>
    %cst_139 = arith.constant 9.99999974E-6 : f32
    %356 = vector.broadcast %cst_139 : f32 to vector<16x1xf32>
    %357 = arith.addf %353, %356 : vector<16x1xf32>
    %358 = math.rsqrt %357 : vector<16x1xf32>
    %359 = vector.broadcast %358 : vector<16x1xf32> to vector<16x32xf32>
    %360 = arith.mulf %355, %359 : vector<16x32xf32>
    %361 = vector.broadcast %340 : vector<1x32xf32> to vector<16x32xf32>
    %362 = arith.mulf %360, %361 : vector<16x32xf32>
    %363 = vector.broadcast %342 : vector<1x32xf32> to vector<16x32xf32>
    %364 = arith.addf %362, %363 : vector<16x32xf32>
    %c1_140 = arith.constant 1 : index
    %c0_141 = arith.constant 0 : index
    %c0_142 = arith.constant 0 : index
    %365 = vector.load %arg12[%c1_140, %c0_141, %c0_142] : memref<2x32x128xf32, #tpu.memory_space<vmem>>, vector<1x32x128xf32>
    %366 = vector.shape_cast %365 : vector<1x32x128xf32> to vector<32x128xf32>
    %cst_143 = arith.constant dense<0.000000e+00> : vector<16x128xf32>
    %367 = tpu.matmul %364, %366, %cst_143 {dimension_numbers = #tpu.dot_dimension_numbers<[1], [0], [0], [1], [0, 0, 1, 1], [], []>} : vector<16x32xf32>, vector<32x128xf32>, vector<16x128xf32> -> vector<16x128xf32>
    %c1_144 = arith.constant 1 : index
    %c0_145 = arith.constant 0 : index
    %c0_146 = arith.constant 0 : index
    %368 = vector.load %arg13[%c1_144, %c0_145, %c0_146] : memref<2x1x128xf32, #tpu.memory_space<vmem>>, vector<1x1x128xf32>
    %369 = vector.shape_cast %368 : vector<1x1x128xf32> to vector<1x128xf32>
    %370 = vector.broadcast %369 : vector<1x128xf32> to vector<16x128xf32>
    %371 = arith.addf %367, %370 : vector<16x128xf32>
    %cst_147 = arith.constant 1.702000e+00 : f32
    %372 = vector.broadcast %cst_147 : f32 to vector<16x128xf32>
    %373 = arith.mulf %372, %371 : vector<16x128xf32>
    %374 = arith.negf %373 : vector<16x128xf32>
    %375 = math.exp %374 : vector<16x128xf32>
    %cst_148 = arith.constant 1.000000e+00 : f32
    %376 = vector.broadcast %cst_148 : f32 to vector<16x128xf32>
    %377 = arith.addf %376, %375 : vector<16x128xf32>
    %378 = arith.divf %376, %377 : vector<16x128xf32>
    %379 = arith.mulf %371, %378 : vector<16x128xf32>
    %c1_149 = arith.constant 1 : index
    %c0_150 = arith.constant 0 : index
    %c0_151 = arith.constant 0 : index
    %380 = vector.load %arg14[%c1_149, %c0_150, %c0_151] : memref<2x128x32xf32, #tpu.memory_space<vmem>>, vector<1x128x32xf32>
    %381 = vector.shape_cast %380 : vector<1x128x32xf32> to vector<128x32xf32>
    %cst_152 = arith.constant dense<0.000000e+00> : vector<16x32xf32>
    %382 = tpu.matmul %379, %381, %cst_152 {dimension_numbers = #tpu.dot_dimension_numbers<[1], [0], [0], [1], [0, 0, 1, 1], [], []>} : vector<16x128xf32>, vector<128x32xf32>, vector<16x32xf32> -> vector<16x32xf32>
    %383 = arith.addf %338, %382 : vector<16x32xf32>
    %c1_153 = arith.constant 1 : index
    %c0_154 = arith.constant 0 : index
    %c0_155 = arith.constant 0 : index
    %384 = vector.load %arg15[%c1_153, %c0_154, %c0_155] : memref<2x1x32xf32, #tpu.memory_space<vmem>>, vector<1x1x32xf32>
    %385 = vector.shape_cast %384 : vector<1x1x32xf32> to vector<1x32xf32>
    %386 = vector.broadcast %385 : vector<1x32xf32> to vector<16x32xf32>
    %387 = arith.addf %383, %386 : vector<16x32xf32>
    %c0_156 = arith.constant 0 : index
    %c0_157 = arith.constant 0 : index
    %388 = vector.load %arg20[%c0_156, %c0_157] : memref<16x32xf32, #tpu.memory_space<vmem>>, vector<16x32xf32>
    tpu.vector_store %arg20[%c0_156, %c0_157], %387 {strides = array<i32>} : memref<16x32xf32, #tpu.memory_space<vmem>>, vector<16x32xf32>,
    %c0_158 = arith.constant 0 : index
    %389 = memref.load %arg1[%c0_158] : memref<2xi32, #tpu.memory_space<smem>>
    %c0_i32 = arith.constant 0 : i32
    %390 = arith.addi %c0_i32, %389 : i32
    %391 = arith.index_cast %390 : i32 to index
    %c0_159 = arith.constant 0 : index
    %392 = vector.load %arg20[%391, %c0_159] : memref<16x32xf32, #tpu.memory_space<vmem>>, vector<1x32xf32>
    %c1_160 = arith.constant 1 : index
    %393 = memref.load %arg1[%c1_160] : memref<2xi32, #tpu.memory_space<smem>>
    %c8_i32 = arith.constant 8 : i32
    %394 = arith.addi %c8_i32, %393 : i32
    %395 = arith.index_cast %394 : i32 to index
    %c0_161 = arith.constant 0 : index
    %396 = vector.load %arg20[%395, %c0_161] : memref<16x32xf32, #tpu.memory_space<vmem>>, vector<1x32xf32>
    %397 = tpu.concatenate %392, %396 in 0 : vector<1x32xf32>, vector<1x32xf32> -> vector<2x32xf32>
    %c0_162 = arith.constant 0 : index
    %c0_163 = arith.constant 0 : index
    %398 = vector.load %arg16[%c0_162, %c0_163] : memref<1x32xf32, #tpu.memory_space<vmem>>, vector<1x32xf32>
    %c0_164 = arith.constant 0 : index
    %c0_165 = arith.constant 0 : index
    %399 = vector.load %arg17[%c0_164, %c0_165] : memref<1x32xf32, #tpu.memory_space<vmem>>, vector<1x32xf32>
    %cst_166 = arith.constant dense<0.000000e+00> : vector<2xf32>
    %400 = vector.multi_reduction <add>, %397, %cst_166 [1] : vector<2x32xf32> to vector<2xf32>
    %401 = vector.shape_cast %400 : vector<2xf32> to vector<2x1xf32>
    %cst_167 = arith.constant 3.200000e+01 : f32
    %402 = vector.broadcast %cst_167 : f32 to vector<2x1xf32>
    %403 = arith.divf %401, %402 : vector<2x1xf32>
    %404 = vector.broadcast %403 : vector<2x1xf32> to vector<2x32xf32>
    %405 = arith.subf %397, %404 : vector<2x32xf32>
    %406 = arith.mulf %405, %405 : vector<2x32xf32>
    %cst_168 = arith.constant dense<0.000000e+00> : vector<2xf32>
    %407 = vector.multi_reduction <add>, %406, %cst_168 [1] : vector<2x32xf32> to vector<2xf32>
    %408 = vector.shape_cast %407 : vector<2xf32> to vector<2x1xf32>
    %cst_169 = arith.constant 3.200000e+01 : f32
    %409 = vector.broadcast %cst_169 : f32 to vector<2x1xf32>
    %410 = arith.divf %408, %409 : vector<2x1xf32>
    %411 = vector.broadcast %403 : vector<2x1xf32> to vector<2x32xf32>
    %412 = arith.subf %397, %411 : vector<2x32xf32>
    %cst_170 = arith.constant 9.99999974E-6 : f32
    %413 = vector.broadcast %cst_170 : f32 to vector<2x1xf32>
    %414 = arith.addf %410, %413 : vector<2x1xf32>
    %415 = math.rsqrt %414 : vector<2x1xf32>
    %416 = vector.broadcast %415 : vector<2x1xf32> to vector<2x32xf32>
    %417 = arith.mulf %412, %416 : vector<2x32xf32>
    %418 = vector.broadcast %398 : vector<1x32xf32> to vector<2x32xf32>
    %419 = arith.mulf %417, %418 : vector<2x32xf32>
    %420 = vector.broadcast %399 : vector<1x32xf32> to vector<2x32xf32>
    %421 = arith.addf %419, %420 : vector<2x32xf32>
    %c0_171 = arith.constant 0 : index
    %c0_172 = arith.constant 0 : index
    %422 = vector.load %arg18[%c0_171, %c0_172] : memref<32x16xf32, #tpu.memory_space<vmem>>, vector<32x16xf32>
    %cst_173 = arith.constant dense<0.000000e+00> : vector<2x16xf32>
    %423 = tpu.matmul %421, %422, %cst_173 {dimension_numbers = #tpu.dot_dimension_numbers<[1], [0], [0], [1], [0, 0, 1, 1], [], []>} : vector<2x32xf32>, vector<32x16xf32>, vector<2x16xf32> -> vector<2x16xf32>
    %c0_174 = arith.constant 0 : index
    %c0_175 = arith.constant 0 : index
    %424 = vector.load %arg19[%c0_174, %c0_175] : memref<2x16xf32, #tpu.memory_space<vmem>>, vector<2x16xf32>
    tpu.vector_store %arg19[%c0_174, %c0_175], %423 {strides = array<i32>} : memref<2x16xf32, #tpu.memory_space<vmem>>, vector<2x16xf32>,
    return
  }
  func.func @transform_0(%arg0: i32, %arg1: memref<2xi32, #tpu.memory_space<smem>>) -> (i32, i32, i32) {
    %c0_i32 = arith.constant 0 : i32
    %c0_i32_0 = arith.constant 0 : i32
    %c0_i32_1 = arith.constant 0 : i32
    %c0_i32_2 = arith.constant 0 : i32
    return %c0_i32, %c0_i32_0, %c0_i32_1 : i32, i32, i32
  }
  func.func @transform_1(%arg0: i32, %arg1: memref<2xi32, #tpu.memory_space<smem>>) -> (i32, i32) {
    %c0_i32 = arith.constant 0 : i32
    %c0_i32_0 = arith.constant 0 : i32
    %c0_i32_1 = arith.constant 0 : i32
    return %c0_i32, %c0_i32_0 : i32, i32
  }
  func.func @transform_2(%arg0: i32, %arg1: memref<2xi32, #tpu.memory_space<smem>>) -> (i32, i32, i32) {
    %c0_i32 = arith.constant 0 : i32
    %c0_i32_0 = arith.constant 0 : i32
    %c0_i32_1 = arith.constant 0 : i32
    %c0_i32_2 = arith.constant 0 : i32
    return %c0_i32, %c0_i32_0, %c0_i32_1 : i32, i32, i32
  }
  func.func @transform_3(%arg0: i32, %arg1: memref<2xi32, #tpu.memory_space<smem>>) -> (i32, i32, i32) {
    %c0_i32 = arith.constant 0 : i32
    %c0_i32_0 = arith.constant 0 : i32
    %c0_i32_1 = arith.constant 0 : i32
    %c0_i32_2 = arith.constant 0 : i32
    return %c0_i32, %c0_i32_0, %c0_i32_1 : i32, i32, i32
  }
  func.func @transform_4(%arg0: i32, %arg1: memref<2xi32, #tpu.memory_space<smem>>) -> (i32, i32, i32) {
    %c0_i32 = arith.constant 0 : i32
    %c0_i32_0 = arith.constant 0 : i32
    %c0_i32_1 = arith.constant 0 : i32
    %c0_i32_2 = arith.constant 0 : i32
    return %c0_i32, %c0_i32_0, %c0_i32_1 : i32, i32, i32
  }
  func.func @transform_5(%arg0: i32, %arg1: memref<2xi32, #tpu.memory_space<smem>>) -> (i32, i32, i32) {
    %c0_i32 = arith.constant 0 : i32
    %c0_i32_0 = arith.constant 0 : i32
    %c0_i32_1 = arith.constant 0 : i32
    %c0_i32_2 = arith.constant 0 : i32
    return %c0_i32, %c0_i32_0, %c0_i32_1 : i32, i32, i32
  }
  func.func @transform_6(%arg0: i32, %arg1: memref<2xi32, #tpu.memory_space<smem>>) -> (i32, i32, i32) {
    %c0_i32 = arith.constant 0 : i32
    %c0_i32_0 = arith.constant 0 : i32
    %c0_i32_1 = arith.constant 0 : i32
    %c0_i32_2 = arith.constant 0 : i32
    return %c0_i32, %c0_i32_0, %c0_i32_1 : i32, i32, i32
  }
  func.func @transform_7(%arg0: i32, %arg1: memref<2xi32, #tpu.memory_space<smem>>) -> (i32, i32, i32) {
    %c0_i32 = arith.constant 0 : i32
    %c0_i32_0 = arith.constant 0 : i32
    %c0_i32_1 = arith.constant 0 : i32
    %c0_i32_2 = arith.constant 0 : i32
    return %c0_i32, %c0_i32_0, %c0_i32_1 : i32, i32, i32
  }
  func.func @transform_8(%arg0: i32, %arg1: memref<2xi32, #tpu.memory_space<smem>>) -> (i32, i32, i32) {
    %c0_i32 = arith.constant 0 : i32
    %c0_i32_0 = arith.constant 0 : i32
    %c0_i32_1 = arith.constant 0 : i32
    %c0_i32_2 = arith.constant 0 : i32
    return %c0_i32, %c0_i32_0, %c0_i32_1 : i32, i32, i32
  }
  func.func @transform_9(%arg0: i32, %arg1: memref<2xi32, #tpu.memory_space<smem>>) -> (i32, i32, i32) {
    %c0_i32 = arith.constant 0 : i32
    %c0_i32_0 = arith.constant 0 : i32
    %c0_i32_1 = arith.constant 0 : i32
    %c0_i32_2 = arith.constant 0 : i32
    return %c0_i32, %c0_i32_0, %c0_i32_1 : i32, i32, i32
  }
  func.func @transform_10(%arg0: i32, %arg1: memref<2xi32, #tpu.memory_space<smem>>) -> (i32, i32, i32) {
    %c0_i32 = arith.constant 0 : i32
    %c0_i32_0 = arith.constant 0 : i32
    %c0_i32_1 = arith.constant 0 : i32
    %c0_i32_2 = arith.constant 0 : i32
    return %c0_i32, %c0_i32_0, %c0_i32_1 : i32, i32, i32
  }
  func.func @transform_11(%arg0: i32, %arg1: memref<2xi32, #tpu.memory_space<smem>>) -> (i32, i32, i32) {
    %c0_i32 = arith.constant 0 : i32
    %c0_i32_0 = arith.constant 0 : i32
    %c0_i32_1 = arith.constant 0 : i32
    %c0_i32_2 = arith.constant 0 : i32
    return %c0_i32, %c0_i32_0, %c0_i32_1 : i32, i32, i32
  }
  func.func @transform_12(%arg0: i32, %arg1: memref<2xi32, #tpu.memory_space<smem>>) -> (i32, i32, i32) {
    %c0_i32 = arith.constant 0 : i32
    %c0_i32_0 = arith.constant 0 : i32
    %c0_i32_1 = arith.constant 0 : i32
    %c0_i32_2 = arith.constant 0 : i32
    return %c0_i32, %c0_i32_0, %c0_i32_1 : i32, i32, i32
  }
  func.func @transform_13(%arg0: i32, %arg1: memref<2xi32, #tpu.memory_space<smem>>) -> (i32, i32, i32) {
    %c0_i32 = arith.constant 0 : i32
    %c0_i32_0 = arith.constant 0 : i32
    %c0_i32_1 = arith.constant 0 : i32
    %c0_i32_2 = arith.constant 0 : i32
    return %c0_i32, %c0_i32_0, %c0_i32_1 : i32, i32, i32
  }
  func.func @transform_14(%arg0: i32, %arg1: memref<2xi32, #tpu.memory_space<smem>>) -> (i32, i32) {
    %c0_i32 = arith.constant 0 : i32
    %c0_i32_0 = arith.constant 0 : i32
    %c0_i32_1 = arith.constant 0 : i32
    return %c0_i32, %c0_i32_0 : i32, i32
  }
  func.func @transform_15(%arg0: i32, %arg1: memref<2xi32, #tpu.memory_space<smem>>) -> (i32, i32) {
    %c0_i32 = arith.constant 0 : i32
    %c0_i32_0 = arith.constant 0 : i32
    %c0_i32_1 = arith.constant 0 : i32
    return %c0_i32, %c0_i32_0 : i32, i32
  }
  func.func @transform_16(%arg0: i32, %arg1: memref<2xi32, #tpu.memory_space<smem>>) -> (i32, i32) {
    %c0_i32 = arith.constant 0 : i32
    %c0_i32_0 = arith.constant 0 : i32
    %c0_i32_1 = arith.constant 0 : i32
    return %c0_i32, %c0_i32_0 : i32, i32
  }
  func.func @transform_17(%arg0: i32, %arg1: memref<2xi32, #tpu.memory_space<smem>>) -> (i32, i32) {
    %c0_i32 = arith.constant 0 : i32
    %c0_i32_0 = arith.constant 0 : i32
    %c0_i32_1 = arith.constant 0 : i32
    return %c0_i32, %c0_i32_0 : i32, i32
  }
}

</mosaic_0001>

<llo_original>
// kernel: tpu_custom_call.1
$region0: #{tpu_custom_call.1}
  #allocation0 [shape = 'u32[]', space=smem, size = 0x4, offset = 0x4, fixed_abs, tag = 'smem constant byte address 0x4 - core index']
  #allocation1 [shape = 'u32[72,128]{1,0:T(1,128)}', space=vmem, size = 0x9000, scoped, tag = 'internal scratch']
  #allocation2 [shape = 'f32[16,32]{1,0:T(8,128)}', space=vmem, size = 0x2000, scoped, tag = 'scratch operand']
  #allocation3 [shape = 's32[1]{0}', space=sflag, size = 0x4, scoped, tag = 'scoped memory for tpu_custom_call.1']
  #allocation4 [shape = 'u8[512]{0}', space=smem, size = 0x200, scoped, tag = 'prefetched SMEM operand 0']
  %s0 = inlined_call_operand.vmem [shape: s32[2], index: 0, kind: input, shape index: {}]
  %s1 = inlined_call_operand.vmem [shape: f32[2,8,32], index: 1, kind: input, shape index: {}]
  %s2 = inlined_call_operand.vmem [shape: f32[8,32], index: 2, kind: input, shape index: {}]
  %s3 = inlined_call_operand.vmem [shape: f32[2,1,32], index: 3, kind: input, shape index: {}]
  %s4 = inlined_call_operand.vmem [shape: f32[2,1,32], index: 4, kind: input, shape index: {}]
  %s5 = inlined_call_operand.vmem [shape: f32[2,32,96], index: 5, kind: input, shape index: {}]
  %s6 = inlined_call_operand.vmem [shape: f32[2,1,96], index: 6, kind: input, shape index: {}]
  %s7 = inlined_call_operand.vmem [shape: f32[2,32,32], index: 7, kind: input, shape index: {}]
  %s8 = inlined_call_operand.vmem [shape: f32[2,1,32], index: 8, kind: input, shape index: {}]
  %s9 = inlined_call_operand.vmem [shape: f32[2,1,32], index: 9, kind: input, shape index: {}]
  %s10 = inlined_call_operand.vmem [shape: f32[2,1,32], index: 10, kind: input, shape index: {}]
  %s11 = inlined_call_operand.vmem [shape: f32[2,32,128], index: 11, kind: input, shape index: {}]
  %s12 = inlined_call_operand.vmem [shape: f32[2,1,128], index: 12, kind: input, shape index: {}]
  %s13 = inlined_call_operand.vmem [shape: f32[2,128,32], index: 13, kind: input, shape index: {}]
  %s14 = inlined_call_operand.vmem [shape: f32[2,1,32], index: 14, kind: input, shape index: {}]
  %s15 = inlined_call_operand.vmem [shape: f32[1,32], index: 15, kind: input, shape index: {}]
  %s16 = inlined_call_operand.vmem [shape: f32[1,32], index: 16, kind: input, shape index: {}]
  %s17 = inlined_call_operand.vmem [shape: f32[32,16], index: 17, kind: input, shape index: {}]
  %s18 = inlined_call_operand.hbm [shape: f32[2,16], index: 18, kind: output, shape index: {}]
  %s19 = sld [smem:[#allocation0]]
  $region78: #{tpu_custom_call.1} parent=0
    _
  %s21 = ssub.s32 1, %s19
  %s22 = scalar_select 0, %s21, %s19
  %s24 = sshll.u32 %s0, 4
  %s25 = int_to_ptr.vmem [resolvable:$true] %s24
  %27 = dma.vmem_to_smem %s25, 16, [#allocation4], [#allocation3]
  %29 = dma.done [#allocation3], 16
  %30 = sfence
  $region1: #{tpu_custom_call.1} parent=0
    #allocation5 [shape = 'u8[1024]{0}', space=vmem, size = 0x400, scoped, tag = 'output window, operand 0, single buffered']
    #allocation6 [shape = 's32[1]{0}', space=sflag, size = 0x4, scoped, tag = 'scoped memory for tpu_custom_call.1']
    %31 = vsyncpa [#allocation6], 0
    // Predicated region
    $region2: #{tpu_custom_call.1} parent=1 // pred_check
      _
    $region3: #{tpu_custom_call.1} parent=1 // pred_check_branch
      %33 = sbr.rel (0) target = $region5
    $region4: #{tpu_custom_call.1} parent=1 // pred_region
      _
    $region5: #{tpu_custom_call.1} parent=1 // pred_fallthru
      _
    // Predicated region
    $region6: #{tpu_custom_call.1} parent=1 // pred_check
      _
    $region7: #{tpu_custom_call.1} parent=1 // pred_check_branch
      %35 = sbr.rel (0) target = $region9
    $region8: #{tpu_custom_call.1} parent=1 // pred_region
      _
    $region9: #{tpu_custom_call.1} parent=1 // pred_fallthru
      _
    // Predicated region
    $region10: #{tpu_custom_call.1} parent=1 // pred_check
      _
    $region11: #{tpu_custom_call.1} parent=1 // pred_check_branch
      %37 = sbr.rel (0) target = $region13
    $region12: #{tpu_custom_call.1} parent=1 // pred_region
      _
    $region13: #{tpu_custom_call.1} parent=1 // pred_fallthru
      _
    // Predicated region
    $region14: #{tpu_custom_call.1} parent=1 // pred_check
      _
    $region15: #{tpu_custom_call.1} parent=1 // pred_check_branch
      %39 = sbr.rel (0) target = $region17
    $region16: #{tpu_custom_call.1} parent=1 // pred_region
      _
    $region17: #{tpu_custom_call.1} parent=1 // pred_fallthru
      _
    // Predicated region
    $region18: #{tpu_custom_call.1} parent=1 // pred_check
      _
    $region19: #{tpu_custom_call.1} parent=1 // pred_check_branch
      %41 = sbr.rel (0) target = $region21
    $region20: #{tpu_custom_call.1} parent=1 // pred_region
      _
    $region21: #{tpu_custom_call.1} parent=1 // pred_fallthru
      _
    // Predicated region
    $region22: #{tpu_custom_call.1} parent=1 // pred_check
      _
    $region23: #{tpu_custom_call.1} parent=1 // pred_check_branch
      %43 = sbr.rel (0) target = $region25
    $region24: #{tpu_custom_call.1} parent=1 // pred_region
      _
    $region25: #{tpu_custom_call.1} parent=1 // pred_fallthru
      _
    // Predicated region
    $region26: #{tpu_custom_call.1} parent=1 // pred_check
      _
    $region27: #{tpu_custom_call.1} parent=1 // pred_check_branch
      %45 = sbr.rel (0) target = $region29
    $region28: #{tpu_custom_call.1} parent=1 // pred_region
      _
    $region29: #{tpu_custom_call.1} parent=1 // pred_fallthru
      _
    // Predicated region
    $region30: #{tpu_custom_call.1} parent=1 // pred_check
      _
    $region31: #{tpu_custom_call.1} parent=1 // pred_check_branch
      %47 = sbr.rel (0) target = $region33
    $region32: #{tpu_custom_call.1} parent=1 // pred_region
      _
    $region33: #{tpu_custom_call.1} parent=1 // pred_fallthru
      _
    // Predicated region
    $region34: #{tpu_custom_call.1} parent=1 // pred_check
      _
    $region35: #{tpu_custom_call.1} parent=1 // pred_check_branch
      %49 = sbr.rel (0) target = $region37
    $region36: #{tpu_custom_call.1} parent=1 // pred_region
      _
    $region37: #{tpu_custom_call.1} parent=1 // pred_fallthru
      _
    // Predicated region
    $region38: #{tpu_custom_call.1} parent=1 // pred_check
      _
    $region39: #{tpu_custom_call.1} parent=1 // pred_check_branch
      %51 = sbr.rel (0) target = $region41
    $region40: #{tpu_custom_call.1} parent=1 // pred_region
      _
    $region41: #{tpu_custom_call.1} parent=1 // pred_fallthru
      _
    // Predicated region
    $region42: #{tpu_custom_call.1} parent=1 // pred_check
      _
    $region43: #{tpu_custom_call.1} parent=1 // pred_check_branch
      %53 = sbr.rel (0) target = $region45
    $region44: #{tpu_custom_call.1} parent=1 // pred_region
      _
    $region45: #{tpu_custom_call.1} parent=1 // pred_fallthru
      _
    // Predicated region
    $region46: #{tpu_custom_call.1} parent=1 // pred_check
      _
    $region47: #{tpu_custom_call.1} parent=1 // pred_check_branch
      %55 = sbr.rel (0) target = $region49
    $region48: #{tpu_custom_call.1} parent=1 // pred_region
      _
    $region49: #{tpu_custom_call.1} parent=1 // pred_fallthru
      _
    // Predicated region
    $region50: #{tpu_custom_call.1} parent=1 // pred_check
      _
    $region51: #{tpu_custom_call.1} parent=1 // pred_check_branch
      %57 = sbr.rel (0) target = $region53
    $region52: #{tpu_custom_call.1} parent=1 // pred_region
      _
    $region53: #{tpu_custom_call.1} parent=1 // pred_fallthru
      _
    // Predicated region
    $region54: #{tpu_custom_call.1} parent=1 // pred_check
      _
    $region55: #{tpu_custom_call.1} parent=1 // pred_check_branch
      %59 = sbr.rel (0) target = $region57
    $region56: #{tpu_custom_call.1} parent=1 // pred_region
      _
    $region57: #{tpu_custom_call.1} parent=1 // pred_fallthru
      _
    // Predicated region
    $region58: #{tpu_custom_call.1} parent=1 // pred_check
      _
    $region59: #{tpu_custom_call.1} parent=1 // pred_check_branch
      %61 = sbr.rel (0) target = $region61
    $region60: #{tpu_custom_call.1} parent=1 // pred_region
      _
    $region61: #{tpu_custom_call.1} parent=1 // pred_fallthru
      _
    // Predicated region
    $region62: #{tpu_custom_call.1} parent=1 // pred_check
      _
    $region63: #{tpu_custom_call.1} parent=1 // pred_check_branch
      %63 = sbr.rel (0) target = $region65
    $region64: #{tpu_custom_call.1} parent=1 // pred_region
      _
    $region65: #{tpu_custom_call.1} parent=1 // pred_fallthru
      _
    // Predicated region
    $region66: #{tpu_custom_call.1} parent=1 // pred_check
      _
    $region67: #{tpu_custom_call.1} parent=1 // pred_check_branch
      %65 = sbr.rel (0) target = $region69
    $region68: #{tpu_custom_call.1} parent=1 // pred_region
      _
    $region69: #{tpu_custom_call.1} parent=1 // pred_fallthru
      _
    %v66 = vld [vmem:[%s1] sm:$0xff]
    %v67 = vld [vmem:[%s1 + $0x8] sm:$0xff]
    %v68 = vld [vmem:[%s2] sm:$0xff]
    %v69 = vadd.f32 %v66, %v68
    %v70 = vadd.f32 %v67, %v68
    %v71 = vlaneseq
    %v72 = vshrl.u32 %v71, 7
    %v73 = vlaneseq
    %v74 = vand.u32 %v73, 127
    %vm75 = vcmp.le.s32.totalorder %v74, %v72
    %v76 = vsel %vm75, 0.0, -1e+09
    %v77 = vld [vmem:[%s3] sm:$0x1]
    %v78 = vld [vmem:[%s4] sm:$0x1]
    %vm79 = vcmask 261120
    %v80 = vsel %vm79, %v69, 0.0
    %81 = vadd.xlane.f32.xlu0 %v80
    %v82 = vpop.xlane.xlu0 %81
    %v83 = vsel %vm79, %v70, 0.0
    %84 = vadd.xlane.f32.xlu0 %v83
    %v85 = vpop.xlane.xlu0 %84
    %v86 = vrcp.pop 32.0
    %v87 = vmul.f32 32.0, %v86
    %v88 = vsub.f32 1.0, %v87
    %v89 = vmul.f32 %v86, %v88
    %v90 = vadd.f32 %v86, %v89
    %vm91 = vweird.f32 %v86
    %v92 = vsel %vm91, %v86, %v90
    %v93 = vmul.f32 %v82, %v92
    %v94 = vmul.f32 %v85, %v92
    %v95 = vsub.f32 %v69, %v93
    %v96 = vsub.f32 %v70, %v94
    %v97 = vmul.f32 %v95, %v95
    %v98 = vmul.f32 %v96, %v96
    %v99 = vsel %vm79, %v97, 0.0
    %100 = vadd.xlane.f32.xlu0 %v99
    %v101 = vpop.xlane.xlu0 %100
    %v102 = vsel %vm79, %v98, 0.0
    %103 = vadd.xlane.f32.xlu0 %v102
    %v104 = vpop.xlane.xlu0 %103
    %v105 = vmul.f32 %v101, %v92
    %v106 = vmul.f32 %v104, %v92
    %v107 = vadd.f32 %v105, 1e-05
    %v108 = vadd.f32 %v106, 1e-05
    %v109 = vrsqrt.pop %v107
    %v110 = vmul.f32 %v109, %v107
    %v111 = vmul.f32 %v110, %v109
    %v112 = vmul.f32 0.5, %v111
    %v113 = vsub.f32 1.5, %v112
    %v114 = vmul.f32 %v109, %v113
    %vm115 = vweird.f32 %v107
    %vm116 = vweird.f32 %v109
    %vm117 = vmor %vm115, %vm116
    %v118 = vsel %vm117, %v109, %v114
    %v119 = vrsqrt.pop %v108
    %v120 = vmul.f32 %v119, %v108
    %v121 = vmul.f32 %v120, %v119
    %v122 = vmul.f32 0.5, %v121
    %v123 = vsub.f32 1.5, %v122
    %v124 = vmul.f32 %v119, %v123
    %vm125 = vweird.f32 %v108
    %vm126 = vweird.f32 %v119
    %vm127 = vmor %vm125, %vm126
    %v128 = vsel %vm127, %v119, %v124
    %v129 = vmul.f32 %v95, %v118
    %v130 = vmul.f32 %v96, %v128
    %v132 = vperm.slane %v77, 0
    %v134 = vmul.f32 %v129, %v132
    %v135 = vmul.f32 %v130, %v132
    %v137 = vperm.slane %v78, 0
    %v139 = vadd.f32 %v134, %v137
    %v140 = vadd.f32 %v135, %v137
    %v141 = vld [vmem:[%s5] sm:$0xff]
    %v142 = vld [vmem:[%s5 + $0x8] sm:$0xff]
    %v143 = vld [vmem:[%s5 + $0x10] sm:$0xff]
    %v144 = vld [vmem:[%s5 + $0x18] sm:$0xff]
    %v145 = vld [vmem:[%s6] sm:$0x1]
    %v147 = vperm.slane %v145, 0
    %v150 = vsel %vm79, %v139, 0
    %v153 = vsel %vm79, %v140, 0
    %155 = vmatpush.msra.mxu0 0.0
    %156 = vmatpush.msra.mxu0 0.0
    %157 = vmatpush.msra.mxu0 0.0
    %158 = vmatpush.msra.mxu0 0.0
    %159 = vmatpush.msra.mxu0 0.0
    %160 = vmatpush.msra.mxu0 0.0
    %161 = vmatpush.msra.mxu0 0.0
    %162 = vmatpush.msra.mxu0 0.0
    %163 = vmatpush.msra.mxu0 0.0
    %164 = vmatpush.msra.mxu0 0.0
    %165 = vmatpush.msra.mxu0 0.0
    %166 = vmatpush.msra.mxu0 0.0
    %167 = vmatpush.msra.mxu0 %v144
    %168 = vmatpush.msra.mxu0 %v143
    %169 = vmatpush.msra.mxu0 %v142
    %170 = vmatpush.msra.mxu0 %v141
    %171 = vmatmul.f32.gmra.mxu0 %v150
    %v172 = vpop.f32.mrf.mxu0
    %v173 = vadd.f32 %v147, %v172
    %174 = vmatmul.f32.gmra.mxu0 %v153
    %v175 = vpop.f32.mrf.mxu0
    %v176 = vadd.f32 %v147, %v175
    %177 = vdwg.mxu0
    %v178 = vld [vmem:[%s7] sm:$0xff]
    %v179 = vld [vmem:[%s7 + $0x8] sm:$0xff]
    %v180 = vld [vmem:[%s7 + $0x10] sm:$0xff]
    %v181 = vld [vmem:[%s7 + $0x18] sm:$0xff]
    %183 = vrot.lane.b32.xlu0 %v173, 96
    %v184 = vpop.permute.xlu0 %183
    %vm185 = vcmask 64512
    %v186 = vsel %vm185, %v173, 0
    %v188 = vsel %vm185, %v184, 0
    %190 = vmatpush.xpose.msra.mxu0 0.0
    %191 = vmatpush.xpose.msra.mxu0 0.0
    %192 = vmatpush.xpose.msra.mxu0 0.0
    %193 = vmatpush.xpose.msra.mxu0 0.0
    %194 = vmatpush.xpose.msra.mxu0 0.0
    %195 = vmatpush.xpose.msra.mxu0 0.0
    %196 = vmatpush.xpose.msra.mxu0 0.0
    %197 = vmatpush.xpose.msra.mxu0 0.0
    %198 = vmatpush.xpose.msra.mxu0 0.0
    %199 = vmatpush.xpose.msra.mxu0 0.0
    %200 = vmatpush.xpose.msra.mxu0 0.0
    %201 = vmatpush.xpose.msra.mxu0 0.0
    %202 = vmatpush.xpose.msra.mxu0 0.0
    %203 = vmatpush.xpose.msra.mxu0 0.0
    %204 = vmatpush.xpose.msra.mxu0 0.0
    %205 = vmatpush.xpose.msra.mxu0 %v188
    %206 = vmatmul.f32.gmra.mxu0 %v186
    %v207 = vpop.f32.mrf.mxu0
    %v208 = vadd.f32 0.0, %v207
    %209 = vdwg.mxu0
    %211 = vrot.lane.b32.xlu0 %v176, 96
    %v212 = vpop.permute.xlu0 %211
    %v213 = vsel %vm185, %v176, 0
    %v215 = vsel %vm185, %v212, 0
    %217 = vmatpush.xpose.msra.mxu0 0.0
    %218 = vmatpush.xpose.msra.mxu0 0.0
    %219 = vmatpush.xpose.msra.mxu0 0.0
    %220 = vmatpush.xpose.msra.mxu0 0.0
    %221 = vmatpush.xpose.msra.mxu0 0.0
    %222 = vmatpush.xpose.msra.mxu0 0.0
    %223 = vmatpush.xpose.msra.mxu0 0.0
    %224 = vmatpush.xpose.msra.mxu0 0.0
    %225 = vmatpush.xpose.msra.mxu0 0.0
    %226 = vmatpush.xpose.msra.mxu0 0.0
    %227 = vmatpush.xpose.msra.mxu0 0.0
    %228 = vmatpush.xpose.msra.mxu0 0.0
    %229 = vmatpush.xpose.msra.mxu0 0.0
    %230 = vmatpush.xpose.msra.mxu0 0.0
    %231 = vmatpush.xpose.msra.mxu0 0.0
    %232 = vmatpush.xpose.msra.mxu0 %v215
    %233 = vmatmul.f32.gmra.mxu0 %v213
    %v234 = vpop.f32.mrf.mxu0
    %v235 = vadd.f32 0.0, %v234
    %236 = vdwg.mxu0
    %v237 = vmul.f32 %v208, 0.35355338
    %v238 = vmul.f32 %v235, 0.35355338
    %v239 = vadd.f32 %v237, %v76
    %v240 = vadd.f32 %v238, %v76
    %v241 = vsel %vm185, %v239, -inf
    %242 = vmax.xlane.f32.xlu0 %v241
    %v243 = vpop.xlane.xlu0 %242
    %v244 = vsel %vm185, %v240, -inf
    %245 = vmax.xlane.f32.xlu0 %v244
    %v246 = vpop.xlane.xlu0 %245
    %v247 = vsub.f32 %v239, %v243
    %v248 = vsub.f32 %v240, %v246
    %v249 = vmul.f32 %v247, 1.442695
    %v250 = vpow.pop %v249
    %v251 = vmul.f32 %v248, 1.442695
    %v252 = vpow.pop %v251
    %v253 = vsel %vm185, %v250, 0.0
    %254 = vadd.xlane.f32.xlu0 %v253
    %v255 = vpop.xlane.xlu0 %254
    %v256 = vsel %vm185, %v252, 0.0
    %257 = vadd.xlane.f32.xlu0 %v256
    %v258 = vpop.xlane.xlu0 %257
    %v259 = vrcp.pop %v255
    %v260 = vrcp.pop %v258
    %v261 = vmul.f32 %v250, %v259
    %v262 = vmul.f32 %v252, %v260
    %263 = vrot.lane.b32.xlu0 %v173, 64
    %v264 = vpop.permute.xlu0 %263
    %v267 = vsel %vm185, %v261, 0
    %269 = vmatpush.msra.mxu0 0.0
    %270 = vmatpush.msra.mxu0 0.0
    %271 = vmatpush.msra.mxu0 0.0
    %272 = vmatpush.msra.mxu0 0.0
    %273 = vmatpush.msra.mxu0 0.0
    %274 = vmatpush.msra.mxu0 0.0
    %275 = vmatpush.msra.mxu0 0.0
    %276 = vmatpush.msra.mxu0 0.0
    %277 = vmatpush.msra.mxu0 0.0
    %278 = vmatpush.msra.mxu0 0.0
    %279 = vmatpush.msra.mxu0 0.0
    %280 = vmatpush.msra.mxu0 0.0
    %281 = vmatpush.msra.mxu0 0.0
    %282 = vmatpush.msra.mxu0 0.0
    %283 = vmatpush.msra.mxu0 0.0
    %284 = vmatpush.msra.mxu0 %v264
    %285 = vmatmul.f32.gmra.mxu0 %v267
    %v286 = vpop.f32.mrf.mxu0
    %v287 = vadd.f32 0.0, %v286
    %288 = vdwg.mxu0
    %289 = vrot.lane.b32.xlu0 %v176, 64
    %v290 = vpop.permute.xlu0 %289
    %v293 = vsel %vm185, %v262, 0
    %295 = vmatpush.msra.mxu0 0.0
    %296 = vmatpush.msra.mxu0 0.0
    %297 = vmatpush.msra.mxu0 0.0
    %298 = vmatpush.msra.mxu0 0.0
    %299 = vmatpush.msra.mxu0 0.0
    %300 = vmatpush.msra.mxu0 0.0
    %301 = vmatpush.msra.mxu0 0.0
    %302 = vmatpush.msra.mxu0 0.0
    %303 = vmatpush.msra.mxu0 0.0
    %304 = vmatpush.msra.mxu0 0.0
    %305 = vmatpush.msra.mxu0 0.0
    %306 = vmatpush.msra.mxu0 0.0
    %307 = vmatpush.msra.mxu0 0.0
    %308 = vmatpush.msra.mxu0 0.0
    %309 = vmatpush.msra.mxu0 0.0
    %310 = vmatpush.msra.mxu0 %v290
    %311 = vmatmul.f32.gmra.mxu0 %v293
    %v312 = vpop.f32.mrf.mxu0
    %v313 = vadd.f32 0.0, %v312
    %314 = vdwg.mxu0
    %315 = vrot.lane.b32.xlu0 %v173, 120
    %v316 = vpop.permute.xlu0 %315
    %317 = vrot.lane.b32.xlu0 %v173, 88
    %v318 = vpop.permute.xlu0 %317
    %v319 = vsel %vm185, %v316, 0
    %v321 = vsel %vm185, %v318, 0
    %323 = vmatpush.xpose.msra.mxu0 0.0
    %324 = vmatpush.xpose.msra.mxu0 0.0
    %325 = vmatpush.xpose.msra.mxu0 0.0
    %326 = vmatpush.xpose.msra.mxu0 0.0
    %327 = vmatpush.xpose.msra.mxu0 0.0
    %328 = vmatpush.xpose.msra.mxu0 0.0
    %329 = vmatpush.xpose.msra.mxu0 0.0
    %330 = vmatpush.xpose.msra.mxu0 0.0
    %331 = vmatpush.xpose.msra.mxu0 0.0
    %332 = vmatpush.xpose.msra.mxu0 0.0
    %333 = vmatpush.xpose.msra.mxu0 0.0
    %334 = vmatpush.xpose.msra.mxu0 0.0
    %335 = vmatpush.xpose.msra.mxu0 0.0
    %336 = vmatpush.xpose.msra.mxu0 0.0
    %337 = vmatpush.xpose.msra.mxu0 0.0
    %338 = vmatpush.xpose.msra.mxu0 %v321
    %339 = vmatmul.f32.gmra.mxu0 %v319
    %v340 = vpop.f32.mrf.mxu0
    %v341 = vadd.f32 0.0, %v340
    %342 = vdwg.mxu0
    %343 = vrot.lane.b32.xlu0 %v176, 120
    %v344 = vpop.permute.xlu0 %343
    %345 = vrot.lane.b32.xlu0 %v176, 88
    %v346 = vpop.permute.xlu0 %345
    %v347 = vsel %vm185, %v344, 0
    %v349 = vsel %vm185, %v346, 0
    %351 = vmatpush.xpose.msra.mxu0 0.0
    %352 = vmatpush.xpose.msra.mxu0 0.0
    %353 = vmatpush.xpose.msra.mxu0 0.0
    %354 = vmatpush.xpose.msra.mxu0 0.0
    %355 = vmatpush.xpose.msra.mxu0 0.0
    %356 = vmatpush.xpose.msra.mxu0 0.0
    %357 = vmatpush.xpose.msra.mxu0 0.0
    %358 = vmatpush.xpose.msra.mxu0 0.0
    %359 = vmatpush.xpose.msra.mxu0 0.0
    %360 = vmatpush.xpose.msra.mxu0 0.0
    %361 = vmatpush.xpose.msra.mxu0 0.0
    %362 = vmatpush.xpose.msra.mxu0 0.0
    %363 = vmatpush.xpose.msra.mxu0 0.0
    %364 = vmatpush.xpose.msra.mxu0 0.0
    %365 = vmatpush.xpose.msra.mxu0 0.0
    %366 = vmatpush.xpose.msra.mxu0 %v349
    %367 = vmatmul.f32.gmra.mxu0 %v347
    %v368 = vpop.f32.mrf.mxu0
    %v369 = vadd.f32 0.0, %v368
    %370 = vdwg.mxu0
    %v371 = vmul.f32 %v341, 0.35355338
    %v372 = vmul.f32 %v369, 0.35355338
    %v373 = vadd.f32 %v371, %v76
    %v374 = vadd.f32 %v372, %v76
    %v375 = vsel %vm185, %v373, -inf
    %376 = vmax.xlane.f32.xlu0 %v375
    %v377 = vpop.xlane.xlu0 %376
    %v378 = vsel %vm185, %v374, -inf
    %379 = vmax.xlane.f32.xlu0 %v378
    %v380 = vpop.xlane.xlu0 %379
    %v381 = vsub.f32 %v373, %v377
    %v382 = vsub.f32 %v374, %v380
    %v383 = vmul.f32 %v381, 1.442695
    %v384 = vpow.pop %v383
    %v385 = vmul.f32 %v382, 1.442695
    %v386 = vpow.pop %v385
    %v387 = vsel %vm185, %v384, 0.0
    %388 = vadd.xlane.f32.xlu0 %v387
    %v389 = vpop.xlane.xlu0 %388
    %v390 = vsel %vm185, %v386, 0.0
    %391 = vadd.xlane.f32.xlu0 %v390
    %v392 = vpop.xlane.xlu0 %391
    %v393 = vrcp.pop %v389
    %v394 = vrcp.pop %v392
    %v395 = vmul.f32 %v384, %v393
    %v396 = vmul.f32 %v386, %v394
    %397 = vrot.lane.b32.xlu0 %v173, 56
    %v398 = vpop.permute.xlu0 %397
    %v401 = vsel %vm185, %v395, 0
    %403 = vmatpush.msra.mxu0 0.0
    %404 = vmatpush.msra.mxu0 0.0
    %405 = vmatpush.msra.mxu0 0.0
    %406 = vmatpush.msra.mxu0 0.0
    %407 = vmatpush.msra.mxu0 0.0
    %408 = vmatpush.msra.mxu0 0.0
    %409 = vmatpush.msra.mxu0 0.0
    %410 = vmatpush.msra.mxu0 0.0
    %411 = vmatpush.msra.mxu0 0.0
    %412 = vmatpush.msra.mxu0 0.0
    %413 = vmatpush.msra.mxu0 0.0
    %414 = vmatpush.msra.mxu0 0.0
    %415 = vmatpush.msra.mxu0 0.0
    %416 = vmatpush.msra.mxu0 0.0
    %417 = vmatpush.msra.mxu0 0.0
    %418 = vmatpush.msra.mxu0 %v398
    %419 = vmatmul.f32.gmra.mxu0 %v401
    %v420 = vpop.f32.mrf.mxu0
    %v421 = vadd.f32 0.0, %v420
    %422 = vdwg.mxu0
    %423 = vrot.lane.b32.xlu0 %v176, 56
    %v424 = vpop.permute.xlu0 %423
    %v427 = vsel %vm185, %v396, 0
    %429 = vmatpush.msra.mxu0 0.0
    %430 = vmatpush.msra.mxu0 0.0
    %431 = vmatpush.msra.mxu0 0.0
    %432 = vmatpush.msra.mxu0 0.0
    %433 = vmatpush.msra.mxu0 0.0
    %434 = vmatpush.msra.mxu0 0.0
    %435 = vmatpush.msra.mxu0 0.0
    %436 = vmatpush.msra.mxu0 0.0
    %437 = vmatpush.msra.mxu0 0.0
    %438 = vmatpush.msra.mxu0 0.0
    %439 = vmatpush.msra.mxu0 0.0
    %440 = vmatpush.msra.mxu0 0.0
    %441 = vmatpush.msra.mxu0 0.0
    %442 = vmatpush.msra.mxu0 0.0
    %443 = vmatpush.msra.mxu0 0.0
    %444 = vmatpush.msra.mxu0 %v424
    %445 = vmatmul.f32.gmra.mxu0 %v427
    %v446 = vpop.f32.mrf.mxu0
    %v447 = vadd.f32 0.0, %v446
    %448 = vdwg.mxu0
    %v450 = vsel %vm185, %v421, 0
    %v453 = vsel %vm185, %v447, 0
    %455 = vmatpush.msra.mxu0 0.0
    %456 = vmatpush.msra.mxu0 0.0
    %457 = vmatpush.msra.mxu0 0.0
    %458 = vmatpush.msra.mxu0 0.0
    %459 = vmatpush.msra.mxu0 0.0
    %460 = vmatpush.msra.mxu0 0.0
    %461 = vmatpush.msra.mxu0 0.0
    %462 = vmatpush.msra.mxu0 0.0
    %463 = vmatpush.msra.mxu0 0.0
    %464 = vmatpush.msra.mxu0 0.0
    %465 = vmatpush.msra.mxu0 0.0
    %466 = vmatpush.msra.mxu0 0.0
    %467 = vmatpush.msra.mxu0 0.0
    %468 = vmatpush.msra.mxu0 0.0
    %469 = vmatpush.msra.mxu0 0.0
    %470 = vmatpush.msra.mxu0 %v179
    %471 = vmatmul.f32.gmra.mxu0 %v450
    %v472 = vpop.f32.mrf.mxu0
    %v473 = vadd.f32 0.0, %v472
    %474 = vmatmul.f32.gmra.mxu0 %v453
    %v475 = vpop.f32.mrf.mxu0
    %v476 = vadd.f32 0.0, %v475
    %477 = vdwg.mxu0
    %v479 = vsel %vm185, %v287, 0
    %v482 = vsel %vm185, %v313, 0
    %484 = vmatpush.msra.mxu0 0.0
    %485 = vmatpush.msra.mxu0 0.0
    %486 = vmatpush.msra.mxu0 0.0
    %487 = vmatpush.msra.mxu0 0.0
    %488 = vmatpush.msra.mxu0 0.0
    %489 = vmatpush.msra.mxu0 0.0
    %490 = vmatpush.msra.mxu0 0.0
    %491 = vmatpush.msra.mxu0 0.0
    %492 = vmatpush.msra.mxu0 0.0
    %493 = vmatpush.msra.mxu0 0.0
    %494 = vmatpush.msra.mxu0 0.0
    %495 = vmatpush.msra.mxu0 0.0
    %496 = vmatpush.msra.mxu0 0.0
    %497 = vmatpush.msra.mxu0 0.0
    %498 = vmatpush.msra.mxu0 0.0
    %499 = vmatpush.msra.mxu0 %v178
    %500 = vmatmul.f32.gmra.mxu0 %v479
    %v501 = vpop.f32.mrf.mxu0
    %v502 = vadd.f32 %v473, %v501
    %503 = vmatmul.f32.gmra.mxu0 %v482
    %v504 = vpop.f32.mrf.mxu0
    %v505 = vadd.f32 %v476, %v504
    %506 = vdwg.mxu0
    %507 = vrot.lane.b32.xlu0 %v173, 112
    %v508 = vpop.permute.xlu0 %507
    %509 = vrot.lane.b32.xlu0 %v173, 80
    %v510 = vpop.permute.xlu0 %509
    %v511 = vsel %vm185, %v508, 0
    %v513 = vsel %vm185, %v510, 0
    %515 = vmatpush.xpose.msra.mxu0 0.0
    %516 = vmatpush.xpose.msra.mxu0 0.0
    %517 = vmatpush.xpose.msra.mxu0 0.0
    %518 = vmatpush.xpose.msra.mxu0 0.0
    %519 = vmatpush.xpose.msra.mxu0 0.0
    %520 = vmatpush.xpose.msra.mxu0 0.0
    %521 = vmatpush.xpose.msra.mxu0 0.0
    %522 = vmatpush.xpose.msra.mxu0 0.0
    %523 = vmatpush.xpose.msra.mxu0 0.0
    %524 = vmatpush.xpose.msra.mxu0 0.0
    %525 = vmatpush.xpose.msra.mxu0 0.0
    %526 = vmatpush.xpose.msra.mxu0 0.0
    %527 = vmatpush.xpose.msra.mxu0 0.0
    %528 = vmatpush.xpose.msra.mxu0 0.0
    %529 = vmatpush.xpose.msra.mxu0 0.0
    %530 = vmatpush.xpose.msra.mxu0 %v513
    %531 = vmatmul.f32.gmra.mxu0 %v511
    %v532 = vpop.f32.mrf.mxu0
    %v533 = vadd.f32 0.0, %v532
    %534 = vdwg.mxu0
    %535 = vrot.lane.b32.xlu0 %v176, 112
    %v536 = vpop.permute.xlu0 %535
    %537 = vrot.lane.b32.xlu0 %v176, 80
    %v538 = vpop.permute.xlu0 %537
    %v539 = vsel %vm185, %v536, 0
    %v541 = vsel %vm185, %v538, 0
    %543 = vmatpush.xpose.msra.mxu0 0.0
    %544 = vmatpush.xpose.msra.mxu0 0.0
    %545 = vmatpush.xpose.msra.mxu0 0.0
    %546 = vmatpush.xpose.msra.mxu0 0.0
    %547 = vmatpush.xpose.msra.mxu0 0.0
    %548 = vmatpush.xpose.msra.mxu0 0.0
    %549 = vmatpush.xpose.msra.mxu0 0.0
    %550 = vmatpush.xpose.msra.mxu0 0.0
    %551 = vmatpush.xpose.msra.mxu0 0.0
    %552 = vmatpush.xpose.msra.mxu0 0.0
    %553 = vmatpush.xpose.msra.mxu0 0.0
    %554 = vmatpush.xpose.msra.mxu0 0.0
    %555 = vmatpush.xpose.msra.mxu0 0.0
    %556 = vmatpush.xpose.msra.mxu0 0.0
    %557 = vmatpush.xpose.msra.mxu0 0.0
    %558 = vmatpush.xpose.msra.mxu0 %v541
    %559 = vmatmul.f32.gmra.mxu0 %v539
    %v560 = vpop.f32.mrf.mxu0
    %v561 = vadd.f32 0.0, %v560
    %562 = vdwg.mxu0
    %v563 = vmul.f32 %v533, 0.35355338
    %v564 = vmul.f32 %v561, 0.35355338
    %v565 = vadd.f32 %v563, %v76
    %v566 = vadd.f32 %v564, %v76
    %v567 = vsel %vm185, %v565, -inf
    %568 = vmax.xlane.f32.xlu0 %v567
    %v569 = vpop.xlane.xlu0 %568
    %v570 = vsel %vm185, %v566, -inf
    %571 = vmax.xlane.f32.xlu0 %v570
    %v572 = vpop.xlane.xlu0 %571
    %v573 = vsub.f32 %v565, %v569
    %v574 = vsub.f32 %v566, %v572
    %v575 = vmul.f32 %v573, 1.442695
    %v576 = vpow.pop %v575
    %v577 = vmul.f32 %v574, 1.442695
    %v578 = vpow.pop %v577
    %v579 = vsel %vm185, %v576, 0.0
    %580 = vadd.xlane.f32.xlu0 %v579
    %v581 = vpop.xlane.xlu0 %580
    %v582 = vsel %vm185, %v578, 0.0
    %583 = vadd.xlane.f32.xlu0 %v582
    %v584 = vpop.xlane.xlu0 %583
    %v585 = vrcp.pop %v581
    %v586 = vrcp.pop %v584
    %v587 = vmul.f32 %v576, %v585
    %v588 = vmul.f32 %v578, %v586
    %589 = vrot.lane.b32.xlu0 %v173, 48
    %v590 = vpop.permute.xlu0 %589
    %v593 = vsel %vm185, %v587, 0
    %595 = vmatpush.msra.mxu0 0.0
    %596 = vmatpush.msra.mxu0 0.0
    %597 = vmatpush.msra.mxu0 0.0
    %598 = vmatpush.msra.mxu0 0.0
    %599 = vmatpush.msra.mxu0 0.0
    %600 = vmatpush.msra.mxu0 0.0
    %601 = vmatpush.msra.mxu0 0.0
    %602 = vmatpush.msra.mxu0 0.0
    %603 = vmatpush.msra.mxu0 0.0
    %604 = vmatpush.msra.mxu0 0.0
    %605 = vmatpush.msra.mxu0 0.0
    %606 = vmatpush.msra.mxu0 0.0
    %607 = vmatpush.msra.mxu0 0.0
    %608 = vmatpush.msra.mxu0 0.0
    %609 = vmatpush.msra.mxu0 0.0
    %610 = vmatpush.msra.mxu0 %v590
    %611 = vmatmul.f32.gmra.mxu0 %v593
    %v612 = vpop.f32.mrf.mxu0
    %v613 = vadd.f32 0.0, %v612
    %614 = vdwg.mxu0
    %615 = vrot.lane.b32.xlu0 %v176, 48
    %v616 = vpop.permute.xlu0 %615
    %v619 = vsel %vm185, %v588, 0
    %621 = vmatpush.msra.mxu0 0.0
    %622 = vmatpush.msra.mxu0 0.0
    %623 = vmatpush.msra.mxu0 0.0
    %624 = vmatpush.msra.mxu0 0.0
    %625 = vmatpush.msra.mxu0 0.0
    %626 = vmatpush.msra.mxu0 0.0
    %627 = vmatpush.msra.mxu0 0.0
    %628 = vmatpush.msra.mxu0 0.0
    %629 = vmatpush.msra.mxu0 0.0
    %630 = vmatpush.msra.mxu0 0.0
    %631 = vmatpush.msra.mxu0 0.0
    %632 = vmatpush.msra.mxu0 0.0
    %633 = vmatpush.msra.mxu0 0.0
    %634 = vmatpush.msra.mxu0 0.0
    %635 = vmatpush.msra.mxu0 0.0
    %636 = vmatpush.msra.mxu0 %v616
    %637 = vmatmul.f32.gmra.mxu0 %v619
    %v638 = vpop.f32.mrf.mxu0
    %v639 = vadd.f32 0.0, %v638
    %640 = vdwg.mxu0
    %v642 = vsel %vm185, %v613, 0
    %v645 = vsel %vm185, %v639, 0
    %647 = vmatpush.msra.mxu0 0.0
    %648 = vmatpush.msra.mxu0 0.0
    %649 = vmatpush.msra.mxu0 0.0
    %650 = vmatpush.msra.mxu0 0.0
    %651 = vmatpush.msra.mxu0 0.0
    %652 = vmatpush.msra.mxu0 0.0
    %653 = vmatpush.msra.mxu0 0.0
    %654 = vmatpush.msra.mxu0 0.0
    %655 = vmatpush.msra.mxu0 0.0
    %656 = vmatpush.msra.mxu0 0.0
    %657 = vmatpush.msra.mxu0 0.0
    %658 = vmatpush.msra.mxu0 0.0
    %659 = vmatpush.msra.mxu0 0.0
    %660 = vmatpush.msra.mxu0 0.0
    %661 = vmatpush.msra.mxu0 0.0
    %662 = vmatpush.msra.mxu0 %v180
    %663 = vmatmul.f32.gmra.mxu0 %v642
    %v664 = vpop.f32.mrf.mxu0
    %v665 = vadd.f32 0.0, %v664
    %666 = vmatmul.f32.gmra.mxu0 %v645
    %v667 = vpop.f32.mrf.mxu0
    %v668 = vadd.f32 0.0, %v667
    %669 = vdwg.mxu0
    %v670 = vadd.f32 %v502, %v665
    %v671 = vadd.f32 %v505, %v668
    %672 = vrot.lane.b32.xlu0 %v173, 104
    %v673 = vpop.permute.xlu0 %672
    %674 = vrot.lane.b32.xlu0 %v173, 72
    %v675 = vpop.permute.xlu0 %674
    %v676 = vsel %vm185, %v673, 0
    %v678 = vsel %vm185, %v675, 0
    %680 = vmatpush.xpose.msra.mxu0 0.0
    %681 = vmatpush.xpose.msra.mxu0 0.0
    %682 = vmatpush.xpose.msra.mxu0 0.0
    %683 = vmatpush.xpose.msra.mxu0 0.0
    %684 = vmatpush.xpose.msra.mxu0 0.0
    %685 = vmatpush.xpose.msra.mxu0 0.0
    %686 = vmatpush.xpose.msra.mxu0 0.0
    %687 = vmatpush.xpose.msra.mxu0 0.0
    %688 = vmatpush.xpose.msra.mxu0 0.0
    %689 = vmatpush.xpose.msra.mxu0 0.0
    %690 = vmatpush.xpose.msra.mxu0 0.0
    %691 = vmatpush.xpose.msra.mxu0 0.0
    %692 = vmatpush.xpose.msra.mxu0 0.0
    %693 = vmatpush.xpose.msra.mxu0 0.0
    %694 = vmatpush.xpose.msra.mxu0 0.0
    %695 = vmatpush.xpose.msra.mxu0 %v678
    %696 = vmatmul.f32.gmra.mxu0 %v676
    %v697 = vpop.f32.mrf.mxu0
    %v698 = vadd.f32 0.0, %v697
    %699 = vdwg.mxu0
    %700 = vrot.lane.b32.xlu0 %v176, 104
    %v701 = vpop.permute.xlu0 %700
    %702 = vrot.lane.b32.xlu0 %v176, 72
    %v703 = vpop.permute.xlu0 %702
    %v704 = vsel %vm185, %v701, 0
    %v706 = vsel %vm185, %v703, 0
    %708 = vmatpush.xpose.msra.mxu0 0.0
    %709 = vmatpush.xpose.msra.mxu0 0.0
    %710 = vmatpush.xpose.msra.mxu0 0.0
    %711 = vmatpush.xpose.msra.mxu0 0.0
    %712 = vmatpush.xpose.msra.mxu0 0.0
    %713 = vmatpush.xpose.msra.mxu0 0.0
    %714 = vmatpush.xpose.msra.mxu0 0.0
    %715 = vmatpush.xpose.msra.mxu0 0.0
    %716 = vmatpush.xpose.msra.mxu0 0.0
    %717 = vmatpush.xpose.msra.mxu0 0.0
    %718 = vmatpush.xpose.msra.mxu0 0.0
    %719 = vmatpush.xpose.msra.mxu0 0.0
    %720 = vmatpush.xpose.msra.mxu0 0.0
    %721 = vmatpush.xpose.msra.mxu0 0.0
    %722 = vmatpush.xpose.msra.mxu0 0.0
    %723 = vmatpush.xpose.msra.mxu0 %v706
    %724 = vmatmul.f32.gmra.mxu0 %v704
    %v725 = vpop.f32.mrf.mxu0
    %v726 = vadd.f32 0.0, %v725
    %727 = vdwg.mxu0
    %v728 = vmul.f32 %v698, 0.35355338
    %v729 = vmul.f32 %v726, 0.35355338
    %v730 = vadd.f32 %v728, %v76
    %v731 = vadd.f32 %v729, %v76
    %v732 = vsel %vm185, %v730, -inf
    %733 = vmax.xlane.f32.xlu0 %v732
    %v734 = vpop.xlane.xlu0 %733
    %v735 = vsel %vm185, %v731, -inf
    %736 = vmax.xlane.f32.xlu0 %v735
    %v737 = vpop.xlane.xlu0 %736
    %v738 = vsub.f32 %v730, %v734
    %v739 = vsub.f32 %v731, %v737
    %v740 = vmul.f32 %v738, 1.442695
    %v741 = vpow.pop %v740
    %v742 = vmul.f32 %v739, 1.442695
    %v743 = vpow.pop %v742
    %v744 = vsel %vm185, %v741, 0.0
    %745 = vadd.xlane.f32.xlu0 %v744
    %v746 = vpop.xlane.xlu0 %745
    %v747 = vsel %vm185, %v743, 0.0
    %748 = vadd.xlane.f32.xlu0 %v747
    %v749 = vpop.xlane.xlu0 %748
    %v750 = vrcp.pop %v746
    %v751 = vrcp.pop %v749
    %v752 = vmul.f32 %v741, %v750
    %v753 = vmul.f32 %v743, %v751
    %754 = vrot.lane.b32.xlu0 %v173, 40
    %v755 = vpop.permute.xlu0 %754
    %v758 = vsel %vm185, %v752, 0
    %760 = vmatpush.msra.mxu0 0.0
    %761 = vmatpush.msra.mxu0 0.0
    %762 = vmatpush.msra.mxu0 0.0
    %763 = vmatpush.msra.mxu0 0.0
    %764 = vmatpush.msra.mxu0 0.0
    %765 = vmatpush.msra.mxu0 0.0
    %766 = vmatpush.msra.mxu0 0.0
    %767 = vmatpush.msra.mxu0 0.0
    %768 = vmatpush.msra.mxu0 0.0
    %769 = vmatpush.msra.mxu0 0.0
    %770 = vmatpush.msra.mxu0 0.0
    %771 = vmatpush.msra.mxu0 0.0
    %772 = vmatpush.msra.mxu0 0.0
    %773 = vmatpush.msra.mxu0 0.0
    %774 = vmatpush.msra.mxu0 0.0
    %775 = vmatpush.msra.mxu0 %v755
    %776 = vmatmul.f32.gmra.mxu0 %v758
    %v777 = vpop.f32.mrf.mxu0
    %v778 = vadd.f32 0.0, %v777
    %779 = vdwg.mxu0
    %780 = vrot.lane.b32.xlu0 %v176, 40
    %v781 = vpop.permute.xlu0 %780
    %v784 = vsel %vm185, %v753, 0
    %786 = vmatpush.msra.mxu0 0.0
    %787 = vmatpush.msra.mxu0 0.0
    %788 = vmatpush.msra.mxu0 0.0
    %789 = vmatpush.msra.mxu0 0.0
    %790 = vmatpush.msra.mxu0 0.0
    %791 = vmatpush.msra.mxu0 0.0
    %792 = vmatpush.msra.mxu0 0.0
    %793 = vmatpush.msra.mxu0 0.0
    %794 = vmatpush.msra.mxu0 0.0
    %795 = vmatpush.msra.mxu0 0.0
    %796 = vmatpush.msra.mxu0 0.0
    %797 = vmatpush.msra.mxu0 0.0
    %798 = vmatpush.msra.mxu0 0.0
    %799 = vmatpush.msra.mxu0 0.0
    %800 = vmatpush.msra.mxu0 0.0
    %801 = vmatpush.msra.mxu0 %v781
    %802 = vmatmul.f32.gmra.mxu0 %v784
    %v803 = vpop.f32.mrf.mxu0
    %v804 = vadd.f32 0.0, %v803
    %805 = vdwg.mxu0
    %v807 = vsel %vm185, %v778, 0
    %v810 = vsel %vm185, %v804, 0
    %812 = vmatpush.msra.mxu0 0.0
    %813 = vmatpush.msra.mxu0 0.0
    %814 = vmatpush.msra.mxu0 0.0
    %815 = vmatpush.msra.mxu0 0.0
    %816 = vmatpush.msra.mxu0 0.0
    %817 = vmatpush.msra.mxu0 0.0
    %818 = vmatpush.msra.mxu0 0.0
    %819 = vmatpush.msra.mxu0 0.0
    %820 = vmatpush.msra.mxu0 0.0
    %821 = vmatpush.msra.mxu0 0.0
    %822 = vmatpush.msra.mxu0 0.0
    %823 = vmatpush.msra.mxu0 0.0
    %824 = vmatpush.msra.mxu0 0.0
    %825 = vmatpush.msra.mxu0 0.0
    %826 = vmatpush.msra.mxu0 0.0
    %827 = vmatpush.msra.mxu0 %v181
    %828 = vmatmul.f32.gmra.mxu0 %v807
    %v829 = vpop.f32.mrf.mxu0
    %v830 = vadd.f32 0.0, %v829
    %831 = vmatmul.f32.gmra.mxu0 %v810
    %v832 = vpop.f32.mrf.mxu0
    %v833 = vadd.f32 0.0, %v832
    %834 = vdwg.mxu0
    %v835 = vadd.f32 %v670, %v830
    %v836 = vadd.f32 %v671, %v833
    %v837 = vadd.f32 %v69, %v835
    %v838 = vadd.f32 %v70, %v836
    %v839 = vld [vmem:[%s8] sm:$0x1]
    %v841 = vperm.slane %v839, 0
    %v843 = vadd.f32 %v837, %v841
    %v844 = vadd.f32 %v838, %v841
    %v845 = vld [vmem:[%s9] sm:$0x1]
    %v846 = vld [vmem:[%s10] sm:$0x1]
    %v847 = vsel %vm79, %v843, 0.0
    %848 = vadd.xlane.f32.xlu0 %v847
    %v849 = vpop.xlane.xlu0 %848
    %v850 = vsel %vm79, %v844, 0.0
    %851 = vadd.xlane.f32.xlu0 %v850
    %v852 = vpop.xlane.xlu0 %851
    %v853 = vmul.f32 %v849, %v92
    %v854 = vmul.f32 %v852, %v92
    %v855 = vsub.f32 %v843, %v853
    %v856 = vsub.f32 %v844, %v854
    %v857 = vmul.f32 %v855, %v855
    %v858 = vmul.f32 %v856, %v856
    %v859 = vsel %vm79, %v857, 0.0
    %860 = vadd.xlane.f32.xlu0 %v859
    %v861 = vpop.xlane.xlu0 %860
    %v862 = vsel %vm79, %v858, 0.0
    %863 = vadd.xlane.f32.xlu0 %v862
    %v864 = vpop.xlane.xlu0 %863
    %v865 = vmul.f32 %v861, %v92
    %v866 = vmul.f32 %v864, %v92
    %v867 = vadd.f32 %v865, 1e-05
    %v868 = vadd.f32 %v866, 1e-05
    %v869 = vrsqrt.pop %v867
    %v870 = vmul.f32 %v869, %v867
    %v871 = vmul.f32 %v870, %v869
    %v872 = vmul.f32 0.5, %v871
    %v873 = vsub.f32 1.5, %v872
    %v874 = vmul.f32 %v869, %v873
    %vm875 = vweird.f32 %v867
    %vm876 = vweird.f32 %v869
    %vm877 = vmor %vm875, %vm876
    %v878 = vsel %vm877, %v869, %v874
    %v879 = vrsqrt.pop %v868
    %v880 = vmul.f32 %v879, %v868
    %v881 = vmul.f32 %v880, %v879
    %v882 = vmul.f32 0.5, %v881
    %v883 = vsub.f32 1.5, %v882
    %v884 = vmul.f32 %v879, %v883
    %vm885 = vweird.f32 %v868
    %vm886 = vweird.f32 %v879
    %vm887 = vmor %vm885, %vm886
    %v888 = vsel %vm887, %v879, %v884
    %v889 = vmul.f32 %v855, %v878
    %v890 = vmul.f32 %v856, %v888
    %v892 = vperm.slane %v845, 0
    %v894 = vmul.f32 %v889, %v892
    %v895 = vmul.f32 %v890, %v892
    %v897 = vperm.slane %v846, 0
    %v899 = vadd.f32 %v894, %v897
    %v900 = vadd.f32 %v895, %v897
    %v901 = vld [vmem:[%s11] sm:$0xff]
    %v902 = vld [vmem:[%s11 + $0x8] sm:$0xff]
    %v903 = vld [vmem:[%s11 + $0x10] sm:$0xff]
    %v904 = vld [vmem:[%s11 + $0x18] sm:$0xff]
    %v905 = vld [vmem:[%s12] sm:$0x1]
    %v907 = vperm.slane %v905, 0
    %v910 = vsel %vm79, %v899, 0
    %v913 = vsel %vm79, %v900, 0
    %915 = vmatpush.msra.mxu0 0.0
    %916 = vmatpush.msra.mxu0 0.0
    %917 = vmatpush.msra.mxu0 0.0
    %918 = vmatpush.msra.mxu0 0.0
    %919 = vmatpush.msra.mxu0 0.0
    %920 = vmatpush.msra.mxu0 0.0
    %921 = vmatpush.msra.mxu0 0.0
    %922 = vmatpush.msra.mxu0 0.0
    %923 = vmatpush.msra.mxu0 0.0
    %924 = vmatpush.msra.mxu0 0.0
    %925 = vmatpush.msra.mxu0 0.0
    %926 = vmatpush.msra.mxu0 0.0
    %927 = vmatpush.msra.mxu0 %v904
    %928 = vmatpush.msra.mxu0 %v903
    %929 = vmatpush.msra.mxu0 %v902
    %930 = vmatpush.msra.mxu0 %v901
    %931 = vmatmul.f32.gmra.mxu0 %v910
    %v932 = vpop.f32.mrf.mxu0
    %v933 = vadd.f32 %v907, %v932
    %934 = vmatmul.f32.gmra.mxu0 %v913
    %v935 = vpop.f32.mrf.mxu0
    %v936 = vadd.f32 %v907, %v935
    %937 = vdwg.mxu0
    %v938 = vmul.f32 %v933, 1.702
    %v939 = vmul.f32 %v936, 1.702
    %v940 = vxor.u32 %v938, 2147483648
    %v941 = vxor.u32 %v939, 2147483648
    %v942 = vmul.f32 %v940, 1.442695
    %v943 = vpow.pop %v942
    %v944 = vmul.f32 %v941, 1.442695
    %v945 = vpow.pop %v944
    %v946 = vadd.f32 %v943, 1.0
    %v947 = vadd.f32 %v945, 1.0
    %v948 = vrcp.pop %v946
    %v949 = vmul.f32 %v946, %v948
    %v950 = vsub.f32 1.0, %v949
    %v951 = vmul.f32 %v948, %v950
    %v952 = vadd.f32 %v948, %v951
    %vm953 = vweird.f32 %v946
    %vm954 = vweird.f32 %v948
    %vm955 = vmor %vm953, %vm954
    %v956 = vsel %vm955, %v948, %v952
    %v957 = vand.u32 2147483647, %v946
    %vm958 = vcmp.eq.f32.partialorder %v957, 8.507059e+37
    %v959 = vand.u32 %v946, 2147483648
    %v960 = vor.u32 1.1754944e-38, %v959
    %v961 = vsel %vm958, %v960, %v956
    %v962 = vmul.f32 1.0, %v961
    %v963 = vrcp.pop %v947
    %v964 = vmul.f32 %v947, %v963
    %v965 = vsub.f32 1.0, %v964
    %v966 = vmul.f32 %v963, %v965
    %v967 = vadd.f32 %v963, %v966
    %vm968 = vweird.f32 %v947
    %vm969 = vweird.f32 %v963
    %vm970 = vmor %vm968, %vm969
    %v971 = vsel %vm970, %v963, %v967
    %v972 = vand.u32 2147483647, %v947
    %vm973 = vcmp.eq.f32.partialorder %v972, 8.507059e+37
    %v974 = vand.u32 %v947, 2147483648
    %v975 = vor.u32 1.1754944e-38, %v974
    %v976 = vsel %vm973, %v975, %v971
    %v977 = vmul.f32 1.0, %v976
    %v978 = vmul.f32 %v933, %v962
    %v979 = vmul.f32 %v936, %v977
    %v980 = vld [vmem:[%s13] sm:$0xff]
    %v981 = vld [vmem:[%s13 + $0x8] sm:$0xff]
    %v982 = vld [vmem:[%s13 + $0x10] sm:$0xff]
    %v983 = vld [vmem:[%s13 + $0x18] sm:$0xff]
    %v984 = vld [vmem:[%s13 + $0x20] sm:$0xff]
    %v985 = vld [vmem:[%s13 + $0x28] sm:$0xff]
    %v986 = vld [vmem:[%s13 + $0x30] sm:$0xff]
    %v987 = vld [vmem:[%s13 + $0x38] sm:$0xff]
    %v988 = vld [vmem:[%s13 + $0x40] sm:$0xff]
    %v989 = vld [vmem:[%s13 + $0x48] sm:$0xff]
    %v990 = vld [vmem:[%s13 + $0x50] sm:$0xff]
    %v991 = vld [vmem:[%s13 + $0x58] sm:$0xff]
    %v992 = vld [vmem:[%s13 + $0x60] sm:$0xff]
    %v993 = vld [vmem:[%s13 + $0x68] sm:$0xff]
    %v994 = vld [vmem:[%s13 + $0x70] sm:$0xff]
    %v995 = vld [vmem:[%s13 + $0x78] sm:$0xff]
    %996 = vmatpush.msra.mxu0 %v995
    %997 = vmatpush.msra.mxu0 %v994
    %998 = vmatpush.msra.mxu0 %v993
    %999 = vmatpush.msra.mxu0 %v992
    %1000 = vmatpush.msra.mxu0 %v991
    %1001 = vmatpush.msra.mxu0 %v990
    %1002 = vmatpush.msra.mxu0 %v989
    %1003 = vmatpush.msra.mxu0 %v988
    %1004 = vmatpush.msra.mxu0 %v987
    %1005 = vmatpush.msra.mxu0 %v986
    %1006 = vmatpush.msra.mxu0 %v985
    %1007 = vmatpush.msra.mxu0 %v984
    %1008 = vmatpush.msra.mxu0 %v983
    %1009 = vmatpush.msra.mxu0 %v982
    %1010 = vmatpush.msra.mxu0 %v981
    %1011 = vmatpush.msra.mxu0 %v980
    %1012 = vmatmul.f32.gmra.mxu0 %v978
    %v1013 = vpop.f32.mrf.mxu0
    %v1014 = vadd.f32 0.0, %v1013
    %1015 = vmatmul.f32.gmra.mxu0 %v979
    %v1016 = vpop.f32.mrf.mxu0
    %v1017 = vadd.f32 0.0, %v1016
    %1018 = vdwg.mxu0
    %v1019 = vadd.f32 %v843, %v1014
    %v1020 = vadd.f32 %v844, %v1017
    %v1021 = vld [vmem:[%s14] sm:$0x1]
    %v1023 = vperm.slane %v1021, 0
    %v1025 = vadd.f32 %v1019, %v1023
    %v1026 = vadd.f32 %v1020, %v1023
    %s1027 = scalar_lea.vmem %s3, 1
    %v1028 = vld [vmem:[%s1027] sm:$0x1]
    %s1029 = scalar_lea.vmem %s4, 1
    %v1030 = vld [vmem:[%s1029] sm:$0x1]
    %v1031 = vsel %vm79, %v1025, 0.0
    %1032 = vadd.xlane.f32.xlu0 %v1031
    %v1033 = vpop.xlane.xlu0 %1032
    %v1034 = vsel %vm79, %v1026, 0.0
    %1035 = vadd.xlane.f32.xlu0 %v1034
    %v1036 = vpop.xlane.xlu0 %1035
    %v1037 = vmul.f32 %v1033, %v92
    %v1038 = vmul.f32 %v1036, %v92
    %v1039 = vsub.f32 %v1025, %v1037
    %v1040 = vsub.f32 %v1026, %v1038
    %v1041 = vmul.f32 %v1039, %v1039
    %v1042 = vmul.f32 %v1040, %v1040
    %v1043 = vsel %vm79, %v1041, 0.0
    %1044 = vadd.xlane.f32.xlu0 %v1043
    %v1045 = vpop.xlane.xlu0 %1044
    %v1046 = vsel %vm79, %v1042, 0.0
    %1047 = vadd.xlane.f32.xlu0 %v1046
    %v1048 = vpop.xlane.xlu0 %1047
    %v1049 = vmul.f32 %v1045, %v92
    %v1050 = vmul.f32 %v1048, %v92
    %v1051 = vadd.f32 %v1049, 1e-05
    %v1052 = vadd.f32 %v1050, 1e-05
    %v1053 = vrsqrt.pop %v1051
    %v1054 = vmul.f32 %v1053, %v1051
    %v1055 = vmul.f32 %v1054, %v1053
    %v1056 = vmul.f32 0.5, %v1055
    %v1057 = vsub.f32 1.5, %v1056
    %v1058 = vmul.f32 %v1053, %v1057
    %vm1059 = vweird.f32 %v1051
    %vm1060 = vweird.f32 %v1053
    %vm1061 = vmor %vm1059, %vm1060
    %v1062 = vsel %vm1061, %v1053, %v1058
    %v1063 = vrsqrt.pop %v1052
    %v1064 = vmul.f32 %v1063, %v1052
    %v1065 = vmul.f32 %v1064, %v1063
    %v1066 = vmul.f32 0.5, %v1065
    %v1067 = vsub.f32 1.5, %v1066
    %v1068 = vmul.f32 %v1063, %v1067
    %vm1069 = vweird.f32 %v1052
    %vm1070 = vweird.f32 %v1063
    %vm1071 = vmor %vm1069, %vm1070
    %v1072 = vsel %vm1071, %v1063, %v1068
    %v1073 = vmul.f32 %v1039, %v1062
    %v1074 = vmul.f32 %v1040, %v1072
    %v1076 = vperm.slane %v1028, 0
    %v1078 = vmul.f32 %v1073, %v1076
    %v1079 = vmul.f32 %v1074, %v1076
    %v1081 = vperm.slane %v1030, 0
    %v1083 = vadd.f32 %v1078, %v1081
    %v1084 = vadd.f32 %v1079, %v1081
    %s1085 = scalar_lea.vmem %s5, 32
    %v1086 = vld [vmem:[%s1085] sm:$0xff]
    %v1087 = vld [vmem:[%s1085 + $0x8] sm:$0xff]
    %v1088 = vld [vmem:[%s1085 + $0x10] sm:$0xff]
    %v1089 = vld [vmem:[%s1085 + $0x18] sm:$0xff]
    %s1090 = scalar_lea.vmem %s6, 1
    %v1091 = vld [vmem:[%s1090] sm:$0x1]
    %v1093 = vperm.slane %v1091, 0
    %v1096 = vsel %vm79, %v1083, 0
    %v1099 = vsel %vm79, %v1084, 0
    %1101 = vmatpush.msra.mxu0 0.0
    %1102 = vmatpush.msra.mxu0 0.0
    %1103 = vmatpush.msra.mxu0 0.0
    %1104 = vmatpush.msra.mxu0 0.0
    %1105 = vmatpush.msra.mxu0 0.0
    %1106 = vmatpush.msra.mxu0 0.0
    %1107 = vmatpush.msra.mxu0 0.0
    %1108 = vmatpush.msra.mxu0 0.0
    %1109 = vmatpush.msra.mxu0 0.0
    %1110 = vmatpush.msra.mxu0 0.0
    %1111 = vmatpush.msra.mxu0 0.0
    %1112 = vmatpush.msra.mxu0 0.0
    %1113 = vmatpush.msra.mxu0 %v1089
    %1114 = vmatpush.msra.mxu0 %v1088
    %1115 = vmatpush.msra.mxu0 %v1087
    %1116 = vmatpush.msra.mxu0 %v1086
    %1117 = vmatmul.f32.gmra.mxu0 %v1096
    %v1118 = vpop.f32.mrf.mxu0
    %v1119 = vadd.f32 %v1093, %v1118
    %1120 = vmatmul.f32.gmra.mxu0 %v1099
    %v1121 = vpop.f32.mrf.mxu0
    %v1122 = vadd.f32 %v1093, %v1121
    %1123 = vdwg.mxu0
    %s1124 = scalar_lea.vmem %s7, 32
    %v1125 = vld [vmem:[%s1124] sm:$0xff]
    %v1126 = vld [vmem:[%s1124 + $0x8] sm:$0xff]
    %v1127 = vld [vmem:[%s1124 + $0x10] sm:$0xff]
    %v1128 = vld [vmem:[%s1124 + $0x18] sm:$0xff]
    %1130 = vrot.lane.b32.xlu0 %v1119, 96
    %v1131 = vpop.permute.xlu0 %1130
    %v1132 = vsel %vm185, %v1119, 0
    %v1134 = vsel %vm185, %v1131, 0
    %1136 = vmatpush.xpose.msra.mxu0 0.0
    %1137 = vmatpush.xpose.msra.mxu0 0.0
    %1138 = vmatpush.xpose.msra.mxu0 0.0
    %1139 = vmatpush.xpose.msra.mxu0 0.0
    %1140 = vmatpush.xpose.msra.mxu0 0.0
    %1141 = vmatpush.xpose.msra.mxu0 0.0
    %1142 = vmatpush.xpose.msra.mxu0 0.0
    %1143 = vmatpush.xpose.msra.mxu0 0.0
    %1144 = vmatpush.xpose.msra.mxu0 0.0
    %1145 = vmatpush.xpose.msra.mxu0 0.0
    %1146 = vmatpush.xpose.msra.mxu0 0.0
    %1147 = vmatpush.xpose.msra.mxu0 0.0
    %1148 = vmatpush.xpose.msra.mxu0 0.0
    %1149 = vmatpush.xpose.msra.mxu0 0.0
    %1150 = vmatpush.xpose.msra.mxu0 0.0
    %1151 = vmatpush.xpose.msra.mxu0 %v1134
    %1152 = vmatmul.f32.gmra.mxu0 %v1132
    %v1153 = vpop.f32.mrf.mxu0
    %v1154 = vadd.f32 0.0, %v1153
    %1155 = vdwg.mxu0
    %1157 = vrot.lane.b32.xlu0 %v1122, 96
    %v1158 = vpop.permute.xlu0 %1157
    %v1159 = vsel %vm185, %v1122, 0
    %v1161 = vsel %vm185, %v1158, 0
    %1163 = vmatpush.xpose.msra.mxu0 0.0
    %1164 = vmatpush.xpose.msra.mxu0 0.0
    %1165 = vmatpush.xpose.msra.mxu0 0.0
    %1166 = vmatpush.xpose.msra.mxu0 0.0
    %1167 = vmatpush.xpose.msra.mxu0 0.0
    %1168 = vmatpush.xpose.msra.mxu0 0.0
    %1169 = vmatpush.xpose.msra.mxu0 0.0
    %1170 = vmatpush.xpose.msra.mxu0 0.0
    %1171 = vmatpush.xpose.msra.mxu0 0.0
    %1172 = vmatpush.xpose.msra.mxu0 0.0
    %1173 = vmatpush.xpose.msra.mxu0 0.0
    %1174 = vmatpush.xpose.msra.mxu0 0.0
    %1175 = vmatpush.xpose.msra.mxu0 0.0
    %1176 = vmatpush.xpose.msra.mxu0 0.0
    %1177 = vmatpush.xpose.msra.mxu0 0.0
    %1178 = vmatpush.xpose.msra.mxu0 %v1161
    %1179 = vmatmul.f32.gmra.mxu0 %v1159
    %v1180 = vpop.f32.mrf.mxu0
    %v1181 = vadd.f32 0.0, %v1180
    %1182 = vdwg.mxu0
    %v1183 = vmul.f32 %v1154, 0.35355338
    %v1184 = vmul.f32 %v1181, 0.35355338
    %v1185 = vadd.f32 %v1183, %v76
    %v1186 = vadd.f32 %v1184, %v76
    %v1187 = vsel %vm185, %v1185, -inf
    %1188 = vmax.xlane.f32.xlu0 %v1187
    %v1189 = vpop.xlane.xlu0 %1188
    %v1190 = vsel %vm185, %v1186, -inf
    %1191 = vmax.xlane.f32.xlu0 %v1190
    %v1192 = vpop.xlane.xlu0 %1191
    %v1193 = vsub.f32 %v1185, %v1189
    %v1194 = vsub.f32 %v1186, %v1192
    %v1195 = vmul.f32 %v1193, 1.442695
    %v1196 = vpow.pop %v1195
    %v1197 = vmul.f32 %v1194, 1.442695
    %v1198 = vpow.pop %v1197
    %v1199 = vsel %vm185, %v1196, 0.0
    %1200 = vadd.xlane.f32.xlu0 %v1199
    %v1201 = vpop.xlane.xlu0 %1200
    %v1202 = vsel %vm185, %v1198, 0.0
    %1203 = vadd.xlane.f32.xlu0 %v1202
    %v1204 = vpop.xlane.xlu0 %1203
    %v1205 = vrcp.pop %v1201
    %v1206 = vrcp.pop %v1204
    %v1207 = vmul.f32 %v1196, %v1205
    %v1208 = vmul.f32 %v1198, %v1206
    %1209 = vrot.lane.b32.xlu0 %v1119, 64
    %v1210 = vpop.permute.xlu0 %1209
    %v1213 = vsel %vm185, %v1207, 0
    %1215 = vmatpush.msra.mxu0 0.0
    %1216 = vmatpush.msra.mxu0 0.0
    %1217 = vmatpush.msra.mxu0 0.0
    %1218 = vmatpush.msra.mxu0 0.0
    %1219 = vmatpush.msra.mxu0 0.0
    %1220 = vmatpush.msra.mxu0 0.0
    %1221 = vmatpush.msra.mxu0 0.0
    %1222 = vmatpush.msra.mxu0 0.0
    %1223 = vmatpush.msra.mxu0 0.0
    %1224 = vmatpush.msra.mxu0 0.0
    %1225 = vmatpush.msra.mxu0 0.0
    %1226 = vmatpush.msra.mxu0 0.0
    %1227 = vmatpush.msra.mxu0 0.0
    %1228 = vmatpush.msra.mxu0 0.0
    %1229 = vmatpush.msra.mxu0 0.0
    %1230 = vmatpush.msra.mxu0 %v1210
    %1231 = vmatmul.f32.gmra.mxu0 %v1213
    %v1232 = vpop.f32.mrf.mxu0
    %v1233 = vadd.f32 0.0, %v1232
    %1234 = vdwg.mxu0
    %1235 = vrot.lane.b32.xlu0 %v1122, 64
    %v1236 = vpop.permute.xlu0 %1235
    %v1239 = vsel %vm185, %v1208, 0
    %1241 = vmatpush.msra.mxu0 0.0
    %1242 = vmatpush.msra.mxu0 0.0
    %1243 = vmatpush.msra.mxu0 0.0
    %1244 = vmatpush.msra.mxu0 0.0
    %1245 = vmatpush.msra.mxu0 0.0
    %1246 = vmatpush.msra.mxu0 0.0
    %1247 = vmatpush.msra.mxu0 0.0
    %1248 = vmatpush.msra.mxu0 0.0
    %1249 = vmatpush.msra.mxu0 0.0
    %1250 = vmatpush.msra.mxu0 0.0
    %1251 = vmatpush.msra.mxu0 0.0
    %1252 = vmatpush.msra.mxu0 0.0
    %1253 = vmatpush.msra.mxu0 0.0
    %1254 = vmatpush.msra.mxu0 0.0
    %1255 = vmatpush.msra.mxu0 0.0
    %1256 = vmatpush.msra.mxu0 %v1236
    %1257 = vmatmul.f32.gmra.mxu0 %v1239
    %v1258 = vpop.f32.mrf.mxu0
    %v1259 = vadd.f32 0.0, %v1258
    %1260 = vdwg.mxu0
    %1261 = vrot.lane.b32.xlu0 %v1119, 120
    %v1262 = vpop.permute.xlu0 %1261
    %1263 = vrot.lane.b32.xlu0 %v1119, 88
    %v1264 = vpop.permute.xlu0 %1263
    %v1265 = vsel %vm185, %v1262, 0
    %v1267 = vsel %vm185, %v1264, 0
    %1269 = vmatpush.xpose.msra.mxu0 0.0
    %1270 = vmatpush.xpose.msra.mxu0 0.0
    %1271 = vmatpush.xpose.msra.mxu0 0.0
    %1272 = vmatpush.xpose.msra.mxu0 0.0
    %1273 = vmatpush.xpose.msra.mxu0 0.0
    %1274 = vmatpush.xpose.msra.mxu0 0.0
    %1275 = vmatpush.xpose.msra.mxu0 0.0
    %1276 = vmatpush.xpose.msra.mxu0 0.0
    %1277 = vmatpush.xpose.msra.mxu0 0.0
    %1278 = vmatpush.xpose.msra.mxu0 0.0
    %1279 = vmatpush.xpose.msra.mxu0 0.0
    %1280 = vmatpush.xpose.msra.mxu0 0.0
    %1281 = vmatpush.xpose.msra.mxu0 0.0
    %1282 = vmatpush.xpose.msra.mxu0 0.0
    %1283 = vmatpush.xpose.msra.mxu0 0.0
    %1284 = vmatpush.xpose.msra.mxu0 %v1267
    %1285 = vmatmul.f32.gmra.mxu0 %v1265
    %v1286 = vpop.f32.mrf.mxu0
    %v1287 = vadd.f32 0.0, %v1286
    %1288 = vdwg.mxu0
    %1289 = vrot.lane.b32.xlu0 %v1122, 120
    %v1290 = vpop.permute.xlu0 %1289
    %1291 = vrot.lane.b32.xlu0 %v1122, 88
    %v1292 = vpop.permute.xlu0 %1291
    %v1293 = vsel %vm185, %v1290, 0
    %v1295 = vsel %vm185, %v1292, 0
    %1297 = vmatpush.xpose.msra.mxu0 0.0
    %1298 = vmatpush.xpose.msra.mxu0 0.0
    %1299 = vmatpush.xpose.msra.mxu0 0.0
    %1300 = vmatpush.xpose.msra.mxu0 0.0
    %1301 = vmatpush.xpose.msra.mxu0 0.0
    %1302 = vmatpush.xpose.msra.mxu0 0.0
    %1303 = vmatpush.xpose.msra.mxu0 0.0
    %1304 = vmatpush.xpose.msra.mxu0 0.0
    %1305 = vmatpush.xpose.msra.mxu0 0.0
    %1306 = vmatpush.xpose.msra.mxu0 0.0
    %1307 = vmatpush.xpose.msra.mxu0 0.0
    %1308 = vmatpush.xpose.msra.mxu0 0.0
    %1309 = vmatpush.xpose.msra.mxu0 0.0
    %1310 = vmatpush.xpose.msra.mxu0 0.0
    %1311 = vmatpush.xpose.msra.mxu0 0.0
    %1312 = vmatpush.xpose.msra.mxu0 %v1295
    %1313 = vmatmul.f32.gmra.mxu0 %v1293
    %v1314 = vpop.f32.mrf.mxu0
    %v1315 = vadd.f32 0.0, %v1314
    %1316 = vdwg.mxu0
    %v1317 = vmul.f32 %v1287, 0.35355338
    %v1318 = vmul.f32 %v1315, 0.35355338
    %v1319 = vadd.f32 %v1317, %v76
    %v1320 = vadd.f32 %v1318, %v76
    %v1321 = vsel %vm185, %v1319, -inf
    %1322 = vmax.xlane.f32.xlu0 %v1321
    %v1323 = vpop.xlane.xlu0 %1322
    %v1324 = vsel %vm185, %v1320, -inf
    %1325 = vmax.xlane.f32.xlu0 %v1324
    %v1326 = vpop.xlane.xlu0 %1325
    %v1327 = vsub.f32 %v1319, %v1323
    %v1328 = vsub.f32 %v1320, %v1326
    %v1329 = vmul.f32 %v1327, 1.442695
    %v1330 = vpow.pop %v1329
    %v1331 = vmul.f32 %v1328, 1.442695
    %v1332 = vpow.pop %v1331
    %v1333 = vsel %vm185, %v1330, 0.0
    %1334 = vadd.xlane.f32.xlu0 %v1333
    %v1335 = vpop.xlane.xlu0 %1334
    %v1336 = vsel %vm185, %v1332, 0.0
    %1337 = vadd.xlane.f32.xlu0 %v1336
    %v1338 = vpop.xlane.xlu0 %1337
    %v1339 = vrcp.pop %v1335
    %v1340 = vrcp.pop %v1338
    %v1341 = vmul.f32 %v1330, %v1339
    %v1342 = vmul.f32 %v1332, %v1340
    %1343 = vrot.lane.b32.xlu0 %v1119, 56
    %v1344 = vpop.permute.xlu0 %1343
    %v1347 = vsel %vm185, %v1341, 0
    %1349 = vmatpush.msra.mxu0 0.0
    %1350 = vmatpush.msra.mxu0 0.0
    %1351 = vmatpush.msra.mxu0 0.0
    %1352 = vmatpush.msra.mxu0 0.0
    %1353 = vmatpush.msra.mxu0 0.0
    %1354 = vmatpush.msra.mxu0 0.0
    %1355 = vmatpush.msra.mxu0 0.0
    %1356 = vmatpush.msra.mxu0 0.0
    %1357 = vmatpush.msra.mxu0 0.0
    %1358 = vmatpush.msra.mxu0 0.0
    %1359 = vmatpush.msra.mxu0 0.0
    %1360 = vmatpush.msra.mxu0 0.0
    %1361 = vmatpush.msra.mxu0 0.0
    %1362 = vmatpush.msra.mxu0 0.0
    %1363 = vmatpush.msra.mxu0 0.0
    %1364 = vmatpush.msra.mxu0 %v1344
    %1365 = vmatmul.f32.gmra.mxu0 %v1347
    %v1366 = vpop.f32.mrf.mxu0
    %v1367 = vadd.f32 0.0, %v1366
    %1368 = vdwg.mxu0
    %1369 = vrot.lane.b32.xlu0 %v1122, 56
    %v1370 = vpop.permute.xlu0 %1369
    %v1373 = vsel %vm185, %v1342, 0
    %1375 = vmatpush.msra.mxu0 0.0
    %1376 = vmatpush.msra.mxu0 0.0
    %1377 = vmatpush.msra.mxu0 0.0
    %1378 = vmatpush.msra.mxu0 0.0
    %1379 = vmatpush.msra.mxu0 0.0
    %1380 = vmatpush.msra.mxu0 0.0
    %1381 = vmatpush.msra.mxu0 0.0
    %1382 = vmatpush.msra.mxu0 0.0
    %1383 = vmatpush.msra.mxu0 0.0
    %1384 = vmatpush.msra.mxu0 0.0
    %1385 = vmatpush.msra.mxu0 0.0
    %1386 = vmatpush.msra.mxu0 0.0
    %1387 = vmatpush.msra.mxu0 0.0
    %1388 = vmatpush.msra.mxu0 0.0
    %1389 = vmatpush.msra.mxu0 0.0
    %1390 = vmatpush.msra.mxu0 %v1370
    %1391 = vmatmul.f32.gmra.mxu0 %v1373
    %v1392 = vpop.f32.mrf.mxu0
    %v1393 = vadd.f32 0.0, %v1392
    %1394 = vdwg.mxu0
    %v1396 = vsel %vm185, %v1367, 0
    %v1399 = vsel %vm185, %v1393, 0
    %1401 = vmatpush.msra.mxu0 0.0
    %1402 = vmatpush.msra.mxu0 0.0
    %1403 = vmatpush.msra.mxu0 0.0
    %1404 = vmatpush.msra.mxu0 0.0
    %1405 = vmatpush.msra.mxu0 0.0
    %1406 = vmatpush.msra.mxu0 0.0
    %1407 = vmatpush.msra.mxu0 0.0
    %1408 = vmatpush.msra.mxu0 0.0
    %1409 = vmatpush.msra.mxu0 0.0
    %1410 = vmatpush.msra.mxu0 0.0
    %1411 = vmatpush.msra.mxu0 0.0
    %1412 = vmatpush.msra.mxu0 0.0
    %1413 = vmatpush.msra.mxu0 0.0
    %1414 = vmatpush.msra.mxu0 0.0
    %1415 = vmatpush.msra.mxu0 0.0
    %1416 = vmatpush.msra.mxu0 %v1126
    %1417 = vmatmul.f32.gmra.mxu0 %v1396
    %v1418 = vpop.f32.mrf.mxu0
    %v1419 = vadd.f32 0.0, %v1418
    %1420 = vmatmul.f32.gmra.mxu0 %v1399
    %v1421 = vpop.f32.mrf.mxu0
    %v1422 = vadd.f32 0.0, %v1421
    %1423 = vdwg.mxu0
    %v1425 = vsel %vm185, %v1233, 0
    %v1428 = vsel %vm185, %v1259, 0
    %1430 = vmatpush.msra.mxu0 0.0
    %1431 = vmatpush.msra.mxu0 0.0
    %1432 = vmatpush.msra.mxu0 0.0
    %1433 = vmatpush.msra.mxu0 0.0
    %1434 = vmatpush.msra.mxu0 0.0
    %1435 = vmatpush.msra.mxu0 0.0
    %1436 = vmatpush.msra.mxu0 0.0
    %1437 = vmatpush.msra.mxu0 0.0
    %1438 = vmatpush.msra.mxu0 0.0
    %1439 = vmatpush.msra.mxu0 0.0
    %1440 = vmatpush.msra.mxu0 0.0
    %1441 = vmatpush.msra.mxu0 0.0
    %1442 = vmatpush.msra.mxu0 0.0
    %1443 = vmatpush.msra.mxu0 0.0
    %1444 = vmatpush.msra.mxu0 0.0
    %1445 = vmatpush.msra.mxu0 %v1125
    %1446 = vmatmul.f32.gmra.mxu0 %v1425
    %v1447 = vpop.f32.mrf.mxu0
    %v1448 = vadd.f32 %v1419, %v1447
    %1449 = vmatmul.f32.gmra.mxu0 %v1428
    %v1450 = vpop.f32.mrf.mxu0
    %v1451 = vadd.f32 %v1422, %v1450
    %1452 = vdwg.mxu0
    %1453 = vrot.lane.b32.xlu0 %v1119, 112
    %v1454 = vpop.permute.xlu0 %1453
    %1455 = vrot.lane.b32.xlu0 %v1119, 80
    %v1456 = vpop.permute.xlu0 %1455
    %v1457 = vsel %vm185, %v1454, 0
    %v1459 = vsel %vm185, %v1456, 0
    %1461 = vmatpush.xpose.msra.mxu0 0.0
    %1462 = vmatpush.xpose.msra.mxu0 0.0
    %1463 = vmatpush.xpose.msra.mxu0 0.0
    %1464 = vmatpush.xpose.msra.mxu0 0.0
    %1465 = vmatpush.xpose.msra.mxu0 0.0
    %1466 = vmatpush.xpose.msra.mxu0 0.0
    %1467 = vmatpush.xpose.msra.mxu0 0.0
    %1468 = vmatpush.xpose.msra.mxu0 0.0
    %1469 = vmatpush.xpose.msra.mxu0 0.0
    %1470 = vmatpush.xpose.msra.mxu0 0.0
    %1471 = vmatpush.xpose.msra.mxu0 0.0
    %1472 = vmatpush.xpose.msra.mxu0 0.0
    %1473 = vmatpush.xpose.msra.mxu0 0.0
    %1474 = vmatpush.xpose.msra.mxu0 0.0
    %1475 = vmatpush.xpose.msra.mxu0 0.0
    %1476 = vmatpush.xpose.msra.mxu0 %v1459
    %1477 = vmatmul.f32.gmra.mxu0 %v1457
    %v1478 = vpop.f32.mrf.mxu0
    %v1479 = vadd.f32 0.0, %v1478
    %1480 = vdwg.mxu0
    %1481 = vrot.lane.b32.xlu0 %v1122, 112
    %v1482 = vpop.permute.xlu0 %1481
    %1483 = vrot.lane.b32.xlu0 %v1122, 80
    %v1484 = vpop.permute.xlu0 %1483
    %v1485 = vsel %vm185, %v1482, 0
    %v1487 = vsel %vm185, %v1484, 0
    %1489 = vmatpush.xpose.msra.mxu0 0.0
    %1490 = vmatpush.xpose.msra.mxu0 0.0
    %1491 = vmatpush.xpose.msra.mxu0 0.0
    %1492 = vmatpush.xpose.msra.mxu0 0.0
    %1493 = vmatpush.xpose.msra.mxu0 0.0
    %1494 = vmatpush.xpose.msra.mxu0 0.0
    %1495 = vmatpush.xpose.msra.mxu0 0.0
    %1496 = vmatpush.xpose.msra.mxu0 0.0
    %1497 = vmatpush.xpose.msra.mxu0 0.0
    %1498 = vmatpush.xpose.msra.mxu0 0.0
    %1499 = vmatpush.xpose.msra.mxu0 0.0
    %1500 = vmatpush.xpose.msra.mxu0 0.0
    %1501 = vmatpush.xpose.msra.mxu0 0.0
    %1502 = vmatpush.xpose.msra.mxu0 0.0
    %1503 = vmatpush.xpose.msra.mxu0 0.0
    %1504 = vmatpush.xpose.msra.mxu0 %v1487
    %1505 = vmatmul.f32.gmra.mxu0 %v1485
    %v1506 = vpop.f32.mrf.mxu0
    %v1507 = vadd.f32 0.0, %v1506
    %1508 = vdwg.mxu0
    %v1509 = vmul.f32 %v1479, 0.35355338
    %v1510 = vmul.f32 %v1507, 0.35355338
    %v1511 = vadd.f32 %v1509, %v76
    %v1512 = vadd.f32 %v1510, %v76
    %v1513 = vsel %vm185, %v1511, -inf
    %1514 = vmax.xlane.f32.xlu0 %v1513
    %v1515 = vpop.xlane.xlu0 %1514
    %v1516 = vsel %vm185, %v1512, -inf
    %1517 = vmax.xlane.f32.xlu0 %v1516
    %v1518 = vpop.xlane.xlu0 %1517
    %v1519 = vsub.f32 %v1511, %v1515
    %v1520 = vsub.f32 %v1512, %v1518
    %v1521 = vmul.f32 %v1519, 1.442695
    %v1522 = vpow.pop %v1521
    %v1523 = vmul.f32 %v1520, 1.442695
    %v1524 = vpow.pop %v1523
    %v1525 = vsel %vm185, %v1522, 0.0
    %1526 = vadd.xlane.f32.xlu0 %v1525
    %v1527 = vpop.xlane.xlu0 %1526
    %v1528 = vsel %vm185, %v1524, 0.0
    %1529 = vadd.xlane.f32.xlu0 %v1528
    %v1530 = vpop.xlane.xlu0 %1529
    %v1531 = vrcp.pop %v1527
    %v1532 = vrcp.pop %v1530
    %v1533 = vmul.f32 %v1522, %v1531
    %v1534 = vmul.f32 %v1524, %v1532
    %1535 = vrot.lane.b32.xlu0 %v1119, 48
    %v1536 = vpop.permute.xlu0 %1535
    %v1539 = vsel %vm185, %v1533, 0
    %1541 = vmatpush.msra.mxu0 0.0
    %1542 = vmatpush.msra.mxu0 0.0
    %1543 = vmatpush.msra.mxu0 0.0
    %1544 = vmatpush.msra.mxu0 0.0
    %1545 = vmatpush.msra.mxu0 0.0
    %1546 = vmatpush.msra.mxu0 0.0
    %1547 = vmatpush.msra.mxu0 0.0
    %1548 = vmatpush.msra.mxu0 0.0
    %1549 = vmatpush.msra.mxu0 0.0
    %1550 = vmatpush.msra.mxu0 0.0
    %1551 = vmatpush.msra.mxu0 0.0
    %1552 = vmatpush.msra.mxu0 0.0
    %1553 = vmatpush.msra.mxu0 0.0
    %1554 = vmatpush.msra.mxu0 0.0
    %1555 = vmatpush.msra.mxu0 0.0
    %1556 = vmatpush.msra.mxu0 %v1536
    %1557 = vmatmul.f32.gmra.mxu0 %v1539
    %v1558 = vpop.f32.mrf.mxu0
    %v1559 = vadd.f32 0.0, %v1558
    %1560 = vdwg.mxu0
    %1561 = vrot.lane.b32.xlu0 %v1122, 48
    %v1562 = vpop.permute.xlu0 %1561
    %v1565 = vsel %vm185, %v1534, 0
    %1567 = vmatpush.msra.mxu0 0.0
    %1568 = vmatpush.msra.mxu0 0.0
    %1569 = vmatpush.msra.mxu0 0.0
    %1570 = vmatpush.msra.mxu0 0.0
    %1571 = vmatpush.msra.mxu0 0.0
    %1572 = vmatpush.msra.mxu0 0.0
    %1573 = vmatpush.msra.mxu0 0.0
    %1574 = vmatpush.msra.mxu0 0.0
    %1575 = vmatpush.msra.mxu0 0.0
    %1576 = vmatpush.msra.mxu0 0.0
    %1577 = vmatpush.msra.mxu0 0.0
    %1578 = vmatpush.msra.mxu0 0.0
    %1579 = vmatpush.msra.mxu0 0.0
    %1580 = vmatpush.msra.mxu0 0.0
    %1581 = vmatpush.msra.mxu0 0.0
    %1582 = vmatpush.msra.mxu0 %v1562
    %1583 = vmatmul.f32.gmra.mxu0 %v1565
    %v1584 = vpop.f32.mrf.mxu0
    %v1585 = vadd.f32 0.0, %v1584
    %1586 = vdwg.mxu0
    %v1588 = vsel %vm185, %v1559, 0
    %v1591 = vsel %vm185, %v1585, 0
    %1593 = vmatpush.msra.mxu0 0.0
    %1594 = vmatpush.msra.mxu0 0.0
    %1595 = vmatpush.msra.mxu0 0.0
    %1596 = vmatpush.msra.mxu0 0.0
    %1597 = vmatpush.msra.mxu0 0.0
    %1598 = vmatpush.msra.mxu0 0.0
    %1599 = vmatpush.msra.mxu0 0.0
    %1600 = vmatpush.msra.mxu0 0.0
    %1601 = vmatpush.msra.mxu0 0.0
    %1602 = vmatpush.msra.mxu0 0.0
    %1603 = vmatpush.msra.mxu0 0.0
    %1604 = vmatpush.msra.mxu0 0.0
    %1605 = vmatpush.msra.mxu0 0.0
    %1606 = vmatpush.msra.mxu0 0.0
    %1607 = vmatpush.msra.mxu0 0.0
    %1608 = vmatpush.msra.mxu0 %v1127
    %1609 = vmatmul.f32.gmra.mxu0 %v1588
    %v1610 = vpop.f32.mrf.mxu0
    %v1611 = vadd.f32 0.0, %v1610
    %1612 = vmatmul.f32.gmra.mxu0 %v1591
    %v1613 = vpop.f32.mrf.mxu0
    %v1614 = vadd.f32 0.0, %v1613
    %1615 = vdwg.mxu0
    %v1616 = vadd.f32 %v1448, %v1611
    %v1617 = vadd.f32 %v1451, %v1614
    %1618 = vrot.lane.b32.xlu0 %v1119, 104
    %v1619 = vpop.permute.xlu0 %1618
    %1620 = vrot.lane.b32.xlu0 %v1119, 72
    %v1621 = vpop.permute.xlu0 %1620
    %v1622 = vsel %vm185, %v1619, 0
    %v1624 = vsel %vm185, %v1621, 0
    %1626 = vmatpush.xpose.msra.mxu0 0.0
    %1627 = vmatpush.xpose.msra.mxu0 0.0
    %1628 = vmatpush.xpose.msra.mxu0 0.0
    %1629 = vmatpush.xpose.msra.mxu0 0.0
    %1630 = vmatpush.xpose.msra.mxu0 0.0
    %1631 = vmatpush.xpose.msra.mxu0 0.0
    %1632 = vmatpush.xpose.msra.mxu0 0.0
    %1633 = vmatpush.xpose.msra.mxu0 0.0
    %1634 = vmatpush.xpose.msra.mxu0 0.0
    %1635 = vmatpush.xpose.msra.mxu0 0.0
    %1636 = vmatpush.xpose.msra.mxu0 0.0
    %1637 = vmatpush.xpose.msra.mxu0 0.0
    %1638 = vmatpush.xpose.msra.mxu0 0.0
    %1639 = vmatpush.xpose.msra.mxu0 0.0
    %1640 = vmatpush.xpose.msra.mxu0 0.0
    %1641 = vmatpush.xpose.msra.mxu0 %v1624
    %1642 = vmatmul.f32.gmra.mxu0 %v1622
    %v1643 = vpop.f32.mrf.mxu0
    %v1644 = vadd.f32 0.0, %v1643
    %1645 = vdwg.mxu0
    %1646 = vrot.lane.b32.xlu0 %v1122, 104
    %v1647 = vpop.permute.xlu0 %1646
    %1648 = vrot.lane.b32.xlu0 %v1122, 72
    %v1649 = vpop.permute.xlu0 %1648
    %v1650 = vsel %vm185, %v1647, 0
    %v1652 = vsel %vm185, %v1649, 0
    %1654 = vmatpush.xpose.msra.mxu0 0.0
    %1655 = vmatpush.xpose.msra.mxu0 0.0
    %1656 = vmatpush.xpose.msra.mxu0 0.0
    %1657 = vmatpush.xpose.msra.mxu0 0.0
    %1658 = vmatpush.xpose.msra.mxu0 0.0
    %1659 = vmatpush.xpose.msra.mxu0 0.0
    %1660 = vmatpush.xpose.msra.mxu0 0.0
    %1661 = vmatpush.xpose.msra.mxu0 0.0
    %1662 = vmatpush.xpose.msra.mxu0 0.0
    %1663 = vmatpush.xpose.msra.mxu0 0.0
    %1664 = vmatpush.xpose.msra.mxu0 0.0
    %1665 = vmatpush.xpose.msra.mxu0 0.0
    %1666 = vmatpush.xpose.msra.mxu0 0.0
    %1667 = vmatpush.xpose.msra.mxu0 0.0
    %1668 = vmatpush.xpose.msra.mxu0 0.0
    %1669 = vmatpush.xpose.msra.mxu0 %v1652
    %1670 = vmatmul.f32.gmra.mxu0 %v1650
    %v1671 = vpop.f32.mrf.mxu0
    %v1672 = vadd.f32 0.0, %v1671
    %1673 = vdwg.mxu0
    %v1674 = vmul.f32 %v1644, 0.35355338
    %v1675 = vmul.f32 %v1672, 0.35355338
    %v1676 = vadd.f32 %v1674, %v76
    %v1677 = vadd.f32 %v1675, %v76
    %v1678 = vsel %vm185, %v1676, -inf
    %1679 = vmax.xlane.f32.xlu0 %v1678
    %v1680 = vpop.xlane.xlu0 %1679
    %v1681 = vsel %vm185, %v1677, -inf
    %1682 = vmax.xlane.f32.xlu0 %v1681
    %v1683 = vpop.xlane.xlu0 %1682
    %v1684 = vsub.f32 %v1676, %v1680
    %v1685 = vsub.f32 %v1677, %v1683
    %v1686 = vmul.f32 %v1684, 1.442695
    %v1687 = vpow.pop %v1686
    %v1688 = vmul.f32 %v1685, 1.442695
    %v1689 = vpow.pop %v1688
    %v1690 = vsel %vm185, %v1687, 0.0
    %1691 = vadd.xlane.f32.xlu0 %v1690
    %v1692 = vpop.xlane.xlu0 %1691
    %v1693 = vsel %vm185, %v1689, 0.0
    %1694 = vadd.xlane.f32.xlu0 %v1693
    %v1695 = vpop.xlane.xlu0 %1694
    %v1696 = vrcp.pop %v1692
    %v1697 = vrcp.pop %v1695
    %v1698 = vmul.f32 %v1687, %v1696
    %v1699 = vmul.f32 %v1689, %v1697
    %1700 = vrot.lane.b32.xlu0 %v1119, 40
    %v1701 = vpop.permute.xlu0 %1700
    %v1704 = vsel %vm185, %v1698, 0
    %1706 = vmatpush.msra.mxu0 0.0
    %1707 = vmatpush.msra.mxu0 0.0
    %1708 = vmatpush.msra.mxu0 0.0
    %1709 = vmatpush.msra.mxu0 0.0
    %1710 = vmatpush.msra.mxu0 0.0
    %1711 = vmatpush.msra.mxu0 0.0
    %1712 = vmatpush.msra.mxu0 0.0
    %1713 = vmatpush.msra.mxu0 0.0
    %1714 = vmatpush.msra.mxu0 0.0
    %1715 = vmatpush.msra.mxu0 0.0
    %1716 = vmatpush.msra.mxu0 0.0
    %1717 = vmatpush.msra.mxu0 0.0
    %1718 = vmatpush.msra.mxu0 0.0
    %1719 = vmatpush.msra.mxu0 0.0
    %1720 = vmatpush.msra.mxu0 0.0
    %1721 = vmatpush.msra.mxu0 %v1701
    %1722 = vmatmul.f32.gmra.mxu0 %v1704
    %v1723 = vpop.f32.mrf.mxu0
    %v1724 = vadd.f32 0.0, %v1723
    %1725 = vdwg.mxu0
    %1726 = vrot.lane.b32.xlu0 %v1122, 40
    %v1727 = vpop.permute.xlu0 %1726
    %v1730 = vsel %vm185, %v1699, 0
    %1732 = vmatpush.msra.mxu0 0.0
    %1733 = vmatpush.msra.mxu0 0.0
    %1734 = vmatpush.msra.mxu0 0.0
    %1735 = vmatpush.msra.mxu0 0.0
    %1736 = vmatpush.msra.mxu0 0.0
    %1737 = vmatpush.msra.mxu0 0.0
    %1738 = vmatpush.msra.mxu0 0.0
    %1739 = vmatpush.msra.mxu0 0.0
    %1740 = vmatpush.msra.mxu0 0.0
    %1741 = vmatpush.msra.mxu0 0.0
    %1742 = vmatpush.msra.mxu0 0.0
    %1743 = vmatpush.msra.mxu0 0.0
    %1744 = vmatpush.msra.mxu0 0.0
    %1745 = vmatpush.msra.mxu0 0.0
    %1746 = vmatpush.msra.mxu0 0.0
    %1747 = vmatpush.msra.mxu0 %v1727
    %1748 = vmatmul.f32.gmra.mxu0 %v1730
    %v1749 = vpop.f32.mrf.mxu0
    %v1750 = vadd.f32 0.0, %v1749
    %1751 = vdwg.mxu0
    %v1753 = vsel %vm185, %v1724, 0
    %v1756 = vsel %vm185, %v1750, 0
    %1758 = vmatpush.msra.mxu0 0.0
    %1759 = vmatpush.msra.mxu0 0.0
    %1760 = vmatpush.msra.mxu0 0.0
    %1761 = vmatpush.msra.mxu0 0.0
    %1762 = vmatpush.msra.mxu0 0.0
    %1763 = vmatpush.msra.mxu0 0.0
    %1764 = vmatpush.msra.mxu0 0.0
    %1765 = vmatpush.msra.mxu0 0.0
    %1766 = vmatpush.msra.mxu0 0.0
    %1767 = vmatpush.msra.mxu0 0.0
    %1768 = vmatpush.msra.mxu0 0.0
    %1769 = vmatpush.msra.mxu0 0.0
    %1770 = vmatpush.msra.mxu0 0.0
    %1771 = vmatpush.msra.mxu0 0.0
    %1772 = vmatpush.msra.mxu0 0.0
    %1773 = vmatpush.msra.mxu0 %v1128
    %1774 = vmatmul.f32.gmra.mxu0 %v1753
    %v1775 = vpop.f32.mrf.mxu0
    %v1776 = vadd.f32 0.0, %v1775
    %1777 = vmatmul.f32.gmra.mxu0 %v1756
    %v1778 = vpop.f32.mrf.mxu0
    %v1779 = vadd.f32 0.0, %v1778
    %1780 = vdwg.mxu0
    %v1781 = vadd.f32 %v1616, %v1776
    %v1782 = vadd.f32 %v1617, %v1779
    %v1783 = vadd.f32 %v1025, %v1781
    %v1784 = vadd.f32 %v1026, %v1782
    %s1785 = scalar_lea.vmem %s8, 1
    %v1786 = vld [vmem:[%s1785] sm:$0x1]
    %v1788 = vperm.slane %v1786, 0
    %v1790 = vadd.f32 %v1783, %v1788
    %v1791 = vadd.f32 %v1784, %v1788
    %s1792 = scalar_lea.vmem %s9, 1
    %v1793 = vld [vmem:[%s1792] sm:$0x1]
    %s1794 = scalar_lea.vmem %s10, 1
    %v1795 = vld [vmem:[%s1794] sm:$0x1]
    %v1796 = vsel %vm79, %v1790, 0.0
    %1797 = vadd.xlane.f32.xlu0 %v1796
    %v1798 = vpop.xlane.xlu0 %1797
    %v1799 = vsel %vm79, %v1791, 0.0
    %1800 = vadd.xlane.f32.xlu0 %v1799
    %v1801 = vpop.xlane.xlu0 %1800
    %v1802 = vmul.f32 %v1798, %v92
    %v1803 = vmul.f32 %v1801, %v92
    %v1804 = vsub.f32 %v1790, %v1802
    %v1805 = vsub.f32 %v1791, %v1803
    %v1806 = vmul.f32 %v1804, %v1804
    %v1807 = vmul.f32 %v1805, %v1805
    %v1808 = vsel %vm79, %v1806, 0.0
    %1809 = vadd.xlane.f32.xlu0 %v1808
    %v1810 = vpop.xlane.xlu0 %1809
    %v1811 = vsel %vm79, %v1807, 0.0
    %1812 = vadd.xlane.f32.xlu0 %v1811
    %v1813 = vpop.xlane.xlu0 %1812
    %v1814 = vmul.f32 %v1810, %v92
    %v1815 = vmul.f32 %v1813, %v92
    %v1816 = vadd.f32 %v1814, 1e-05
    %v1817 = vadd.f32 %v1815, 1e-05
    %v1818 = vrsqrt.pop %v1816
    %v1819 = vmul.f32 %v1818, %v1816
    %v1820 = vmul.f32 %v1819, %v1818
    %v1821 = vmul.f32 0.5, %v1820
    %v1822 = vsub.f32 1.5, %v1821
    %v1823 = vmul.f32 %v1818, %v1822
    %vm1824 = vweird.f32 %v1816
    %vm1825 = vweird.f32 %v1818
    %vm1826 = vmor %vm1824, %vm1825
    %v1827 = vsel %vm1826, %v1818, %v1823
    %v1828 = vrsqrt.pop %v1817
    %v1829 = vmul.f32 %v1828, %v1817
    %v1830 = vmul.f32 %v1829, %v1828
    %v1831 = vmul.f32 0.5, %v1830
    %v1832 = vsub.f32 1.5, %v1831
    %v1833 = vmul.f32 %v1828, %v1832
    %vm1834 = vweird.f32 %v1817
    %vm1835 = vweird.f32 %v1828
    %vm1836 = vmor %vm1834, %vm1835
    %v1837 = vsel %vm1836, %v1828, %v1833
    %v1838 = vmul.f32 %v1804, %v1827
    %v1839 = vmul.f32 %v1805, %v1837
    %v1841 = vperm.slane %v1793, 0
    %v1843 = vmul.f32 %v1838, %v1841
    %v1844 = vmul.f32 %v1839, %v1841
    %v1846 = vperm.slane %v1795, 0
    %v1848 = vadd.f32 %v1843, %v1846
    %v1849 = vadd.f32 %v1844, %v1846
    %s1850 = scalar_lea.vmem %s11, 32
    %v1851 = vld [vmem:[%s1850] sm:$0xff]
    %v1852 = vld [vmem:[%s1850 + $0x8] sm:$0xff]
    %v1853 = vld [vmem:[%s1850 + $0x10] sm:$0xff]
    %v1854 = vld [vmem:[%s1850 + $0x18] sm:$0xff]
    %s1855 = scalar_lea.vmem %s12, 1
    %v1856 = vld [vmem:[%s1855] sm:$0x1]
    %v1858 = vperm.slane %v1856, 0
    %v1861 = vsel %vm79, %v1848, 0
    %v1864 = vsel %vm79, %v1849, 0
    %1866 = vmatpush.msra.mxu0 0.0
    %1867 = vmatpush.msra.mxu0 0.0
    %1868 = vmatpush.msra.mxu0 0.0
    %1869 = vmatpush.msra.mxu0 0.0
    %1870 = vmatpush.msra.mxu0 0.0
    %1871 = vmatpush.msra.mxu0 0.0
    %1872 = vmatpush.msra.mxu0 0.0
    %1873 = vmatpush.msra.mxu0 0.0
    %1874 = vmatpush.msra.mxu0 0.0
    %1875 = vmatpush.msra.mxu0 0.0
    %1876 = vmatpush.msra.mxu0 0.0
    %1877 = vmatpush.msra.mxu0 0.0
    %1878 = vmatpush.msra.mxu0 %v1854
    %1879 = vmatpush.msra.mxu0 %v1853
    %1880 = vmatpush.msra.mxu0 %v1852
    %1881 = vmatpush.msra.mxu0 %v1851
    %1882 = vmatmul.f32.gmra.mxu0 %v1861
    %v1883 = vpop.f32.mrf.mxu0
    %v1884 = vadd.f32 %v1858, %v1883
    %1885 = vmatmul.f32.gmra.mxu0 %v1864
    %v1886 = vpop.f32.mrf.mxu0
    %v1887 = vadd.f32 %v1858, %v1886
    %1888 = vdwg.mxu0
    %v1889 = vmul.f32 %v1884, 1.702
    %v1890 = vmul.f32 %v1887, 1.702
    %v1891 = vxor.u32 %v1889, 2147483648
    %v1892 = vxor.u32 %v1890, 2147483648
    %v1893 = vmul.f32 %v1891, 1.442695
    %v1894 = vpow.pop %v1893
    %v1895 = vmul.f32 %v1892, 1.442695
    %v1896 = vpow.pop %v1895
    %v1897 = vadd.f32 %v1894, 1.0
    %v1898 = vadd.f32 %v1896, 1.0
    %v1899 = vrcp.pop %v1897
    %v1900 = vmul.f32 %v1897, %v1899
    %v1901 = vsub.f32 1.0, %v1900
    %v1902 = vmul.f32 %v1899, %v1901
    %v1903 = vadd.f32 %v1899, %v1902
    %vm1904 = vweird.f32 %v1897
    %vm1905 = vweird.f32 %v1899
    %vm1906 = vmor %vm1904, %vm1905
    %v1907 = vsel %vm1906, %v1899, %v1903
    %v1908 = vand.u32 2147483647, %v1897
    %vm1909 = vcmp.eq.f32.partialorder %v1908, 8.507059e+37
    %v1910 = vand.u32 %v1897, 2147483648
    %v1911 = vor.u32 1.1754944e-38, %v1910
    %v1912 = vsel %vm1909, %v1911, %v1907
    %v1913 = vmul.f32 1.0, %v1912
    %v1914 = vrcp.pop %v1898
    %v1915 = vmul.f32 %v1898, %v1914
    %v1916 = vsub.f32 1.0, %v1915
    %v1917 = vmul.f32 %v1914, %v1916
    %v1918 = vadd.f32 %v1914, %v1917
    %vm1919 = vweird.f32 %v1898
    %vm1920 = vweird.f32 %v1914
    %vm1921 = vmor %vm1919, %vm1920
    %v1922 = vsel %vm1921, %v1914, %v1918
    %v1923 = vand.u32 2147483647, %v1898
    %vm1924 = vcmp.eq.f32.partialorder %v1923, 8.507059e+37
    %v1925 = vand.u32 %v1898, 2147483648
    %v1926 = vor.u32 1.1754944e-38, %v1925
    %v1927 = vsel %vm1924, %v1926, %v1922
    %v1928 = vmul.f32 1.0, %v1927
    %v1929 = vmul.f32 %v1884, %v1913
    %v1930 = vmul.f32 %v1887, %v1928
    %s1931 = scalar_lea.vmem %s13, 128
    %v1932 = vld [vmem:[%s1931] sm:$0xff]
    %v1933 = vld [vmem:[%s1931 + $0x8] sm:$0xff]
    %v1934 = vld [vmem:[%s1931 + $0x10] sm:$0xff]
    %v1935 = vld [vmem:[%s1931 + $0x18] sm:$0xff]
    %v1936 = vld [vmem:[%s1931 + $0x20] sm:$0xff]
    %v1937 = vld [vmem:[%s1931 + $0x28] sm:$0xff]
    %v1938 = vld [vmem:[%s1931 + $0x30] sm:$0xff]
    %v1939 = vld [vmem:[%s1931 + $0x38] sm:$0xff]
    %v1940 = vld [vmem:[%s1931 + $0x40] sm:$0xff]
    %v1941 = vld [vmem:[%s1931 + $0x48] sm:$0xff]
    %v1942 = vld [vmem:[%s1931 + $0x50] sm:$0xff]
    %v1943 = vld [vmem:[%s1931 + $0x58] sm:$0xff]
    %v1944 = vld [vmem:[%s1931 + $0x60] sm:$0xff]
    %v1945 = vld [vmem:[%s1931 + $0x68] sm:$0xff]
    %v1946 = vld [vmem:[%s1931 + $0x70] sm:$0xff]
    %v1947 = vld [vmem:[%s1931 + $0x78] sm:$0xff]
    %1948 = vmatpush.msra.mxu0 %v1947
    %1949 = vmatpush.msra.mxu0 %v1946
    %1950 = vmatpush.msra.mxu0 %v1945
    %1951 = vmatpush.msra.mxu0 %v1944
    %1952 = vmatpush.msra.mxu0 %v1943
    %1953 = vmatpush.msra.mxu0 %v1942
    %1954 = vmatpush.msra.mxu0 %v1941
    %1955 = vmatpush.msra.mxu0 %v1940
    %1956 = vmatpush.msra.mxu0 %v1939
    %1957 = vmatpush.msra.mxu0 %v1938
    %1958 = vmatpush.msra.mxu0 %v1937
    %1959 = vmatpush.msra.mxu0 %v1936
    %1960 = vmatpush.msra.mxu0 %v1935
    %1961 = vmatpush.msra.mxu0 %v1934
    %1962 = vmatpush.msra.mxu0 %v1933
    %1963 = vmatpush.msra.mxu0 %v1932
    %1964 = vmatmul.f32.gmra.mxu0 %v1929
    %v1965 = vpop.f32.mrf.mxu0
    %v1966 = vadd.f32 0.0, %v1965
    %1967 = vmatmul.f32.gmra.mxu0 %v1930
    %v1968 = vpop.f32.mrf.mxu0
    %v1969 = vadd.f32 0.0, %v1968
    %1970 = vdwg.mxu0
    %v1971 = vadd.f32 %v1790, %v1966
    %v1972 = vadd.f32 %v1791, %v1969
    %s1973 = scalar_lea.vmem %s14, 1
    %v1974 = vld [vmem:[%s1973] sm:$0x1]
    %v1976 = vperm.slane %v1974, 0
    %v1978 = vadd.f32 %v1971, %v1976
    %v1979 = vadd.f32 %v1972, %v1976
    %1980 = vst.msk [vmem:[#allocation2] sm:$0xff] %vm79, %v1978
    %1981 = vst.msk [vmem:[#allocation2 + $0x8] sm:$0xff] %vm79, %v1979
    %s1982 = sld [smem:[#allocation4]]
    %s1983 = scalar_lea.vmem [#allocation2], %s1982
    %v1984 = vld [vmem:[%s1983] sm:$0x1]
    %s1985 = sld [smem:[#allocation4 + $0x1]]
    %s1986 = sadd.s32 %s1985, 8
    %s1987 = scalar_lea.vmem [#allocation2], %s1986
    %v1988 = vld [vmem:[%s1987] sm:$0x1]
    %v1990 = vrot.slane %v1988, 7
    %vm1992 = vcmask 1040384
    %v1993 = vsel %vm1992, %v1984, %v1990
    %v1994 = vld [vmem:[%s15] sm:$0x1]
    %v1995 = vld [vmem:[%s16] sm:$0x1]
    %vm1996 = vcmask 254976
    %v1997 = vsel %vm1996, %v1993, 0.0
    %1998 = vadd.xlane.f32.xlu0 %v1997
    %v1999 = vpop.xlane.xlu0 %1998
    %v2000 = vmul.f32 %v1999, %v92
    %v2001 = vsub.f32 %v1993, %v2000
    %v2002 = vmul.f32 %v2001, %v2001
    %v2003 = vsel %vm1996, %v2002, 0.0
    %2004 = vadd.xlane.f32.xlu0 %v2003
    %v2005 = vpop.xlane.xlu0 %2004
    %v2006 = vmul.f32 %v2005, %v92
    %v2007 = vadd.f32 %v2006, 1e-05
    %v2008 = vrsqrt.pop %v2007
    %v2009 = vmul.f32 %v2008, %v2007
    %v2010 = vmul.f32 %v2009, %v2008
    %v2011 = vmul.f32 0.5, %v2010
    %v2012 = vsub.f32 1.5, %v2011
    %v2013 = vmul.f32 %v2008, %v2012
    %vm2014 = vweird.f32 %v2007
    %vm2015 = vweird.f32 %v2008
    %vm2016 = vmor %vm2014, %vm2015
    %v2017 = vsel %vm2016, %v2008, %v2013
    %v2018 = vmul.f32 %v2001, %v2017
    %v2020 = vperm.slane %v1994, 0
    %v2022 = vmul.f32 %v2018, %v2020
    %v2024 = vperm.slane %v1995, 0
    %v2026 = vadd.f32 %v2022, %v2024
    %v2027 = vld [vmem:[%s17] sm:$0xff]
    %v2028 = vld [vmem:[%s17 + $0x8] sm:$0xff]
    %v2029 = vld [vmem:[%s17 + $0x10] sm:$0xff]
    %v2030 = vld [vmem:[%s17 + $0x18] sm:$0xff]
    %v2032 = vsel %vm79, %v2026, 0
    %2034 = vmatpush.msra.mxu0 0.0
    %2035 = vmatpush.msra.mxu0 0.0
    %2036 = vmatpush.msra.mxu0 0.0
    %2037 = vmatpush.msra.mxu0 0.0
    %2038 = vmatpush.msra.mxu0 0.0
    %2039 = vmatpush.msra.mxu0 0.0
    %2040 = vmatpush.msra.mxu0 0.0
    %2041 = vmatpush.msra.mxu0 0.0
    %2042 = vmatpush.msra.mxu0 0.0
    %2043 = vmatpush.msra.mxu0 0.0
    %2044 = vmatpush.msra.mxu0 0.0
    %2045 = vmatpush.msra.mxu0 0.0
    %2046 = vmatpush.msra.mxu0 %v2030
    %2047 = vmatpush.msra.mxu0 %v2029
    %2048 = vmatpush.msra.mxu0 %v2028
    %2049 = vmatpush.msra.mxu0 %v2027
    %2050 = vmatmul.f32.gmra.mxu0 %v2032
    %v2051 = vpop.f32.mrf.mxu0
    %v2052 = vadd.f32 0.0, %v2051
    %2053 = vdwg.mxu0
    %vm2054 = vcmask 123904
    %2055 = vst.msk [vmem:[#allocation5] sm:$0x3] %vm2054, %v2052
    // Predicated region
    $region70: #{tpu_custom_call.1} parent=1 // pred_check
      _
    $region71: #{tpu_custom_call.1} parent=1 // pred_check_branch
      %2057 = sbr.rel (0) target = $region73
    $region72: #{tpu_custom_call.1} parent=1 // pred_region
      %2059 = vsyncadd [#allocation6], 0
      %s2061 = sshll.u32 [#allocation5], 4
      %s2062 = int_to_ptr.vmem [resolvable:$true] %s2061
      %s2063 = sshll.u32 %s18, 4
      %s2064 = int_to_ptr.hbm [resolvable:$true] %s2063
      %2066 = dma.vmem_to_hbm [thread:$0]  %s2062, 32, %s2064, [#allocation6]
    $region73: #{tpu_custom_call.1} parent=1 // pred_fallthru
      _
    // Predicated region
    $region74: #{tpu_custom_call.1} parent=1 // pred_check
      _
    $region75: #{tpu_custom_call.1} parent=1 // pred_check_branch
      %2068 = sbr.rel (0) target = $region77
    $region76: #{tpu_custom_call.1} parent=1 // pred_region
      %2070 = dma.done [#allocation6], 32
    $region77: #{tpu_custom_call.1} parent=1 // pred_fallthru
      _
    %2071 = vsyncpa [#allocation6], 1

</llo_original>
